<compile_context>
chip_gen: v7x
topology: tpu7x:2x2x1
jax: 0.10.0
libtpu: 0.0.40
codegen_flags: <defaults>
</compile_context>

<pallas_src>
import functools

import jax
import jax.numpy as jnp
from jax.experimental import pallas as pl
from jax.experimental.pallas import tpu as pltpu


# --------------------------------------------------------------------------- helpers

def _pick_tk(k_dim):
    """Largest K tile out of (512, 256, 128) that divides k_dim, else full K."""
    for cand in (512, 256, 128):
        if k_dim % cand == 0:
            return cand
    return k_dim


def _round_up(x, m):
    return ((x + m - 1) // m) * m


# --------------------------------------------------------------------------- Pallas kernels

def _conv3x3_bn_relu_kernel(x_ref, w_ref, b_ref, o_ref, acc_ref, *, rout, wp):
    """One (image, K-tile) grid step of the fused 3x3 conv + folded-BN bias + ReLU.

    x_ref  : (1, Rx, tk)    bf16  flattened, spatially padded rows (+ small zero tail)
    w_ref  : (9, tk, mid)   bf16  conv taps (BN scale folded in)
    b_ref  : (1, mid)       f32   folded BN bias
    o_ref  : (1, Rout, mid) f32
    acc_ref: VMEM scratch (Rout, mid) f32, persists across the K axis.
    """
    k = pl.program_id(1)

    @pl.when(k == 0)
    def _():
        acc_ref[...] = jnp.zeros_like(acc_ref)

    # 9 shifted matmuls: output row q reads padded input row q + dh*Wp + dw.
    part = None
    for dh in range(3):
        for dw in range(3):
            off = dh * wp + dw                        # static Python offset
            xa = x_ref[0, off:off + rout, :]          # (Rout, tk), no im2col copy
            contrib = jnp.dot(xa, w_ref[dh * 3 + dw],
                              preferred_element_type=jnp.float32)
            part = contrib if part is None else part + contrib
    acc_ref[...] += part

    @pl.when(k == pl.num_programs(1) - 1)
    def _():
        y = jnp.maximum(acc_ref[...] + b_ref[...], 0.0)
        o_ref[...] = y[None].astype(o_ref.dtype)


def _branch_matmul_kernel(x_ref, w_ref, b_ref, o_ref):
    """One pyramid branch: (Rb, C) @ (C, C/4) + bias, ReLU.  Grid axis = branch id."""
    acc = jnp.dot(x_ref[0], w_ref[0], preferred_element_type=jnp.float32)
    y = jnp.maximum(acc + b_ref[0], 0.0)
    o_ref[...] = y[None].astype(o_ref.dtype)


# --------------------------------------------------------------------------- Pallas wrappers

def conv3x3_bn_relu(cat_nhwc, w9, bias):
    """Fused 3x3 conv (pad=1, stride=1) + folded BN + ReLU.

    cat_nhwc : (N, H, W, Cin) bf16
    w9       : (9, Cin, mid)  bf16  (HWIO taps, BN scale folded)
    bias     : (mid,)         f32
    returns  : (N, H, W, mid) f32
    """
    N, H, W, Cin = cat_nhwc.shape
    mid = w9.shape[-1]
    Hp, Wp = H + 2, W + 2
    Rp = Hp * Wp                                   # rows of the padded spatial grid
    # Valid output pixel (h, w) lives at padded-grid row h*Wp + w, so only the first
    # H*Wp rows can hold valid outputs.  Round up to a sublane multiple.
    Rout = _round_up(H * Wp, 8)
    # Max shifted read = (Rout - 1) + 2*Wp + 2; add zero tail rows past the padded grid.
    Rx = Rout + 2 * Wp + 2
    tail = Rx - Rp                                 # small (<= 9 rows)

    # One cheap spatial zero-pad (this *is* the conv padding), flatten, add tail zeros.
    xp = jnp.pad(cat_nhwc, ((0, 0), (1, 1), (1, 1), (0, 0)))
    xf = jnp.pad(xp.reshape(N, Rp, Cin), ((0, 0), (0, tail), (0, 0)))

    tk = _pick_tk(Cin)
    kt = Cin // tk

    out = pl.pallas_call(
        functools.partial(_conv3x3_bn_relu_kernel, rout=Rout, wp=Wp),
        out_shape=jax.ShapeDtypeStruct((N, Rout, mid), jnp.float32),
        grid=(N, kt),
        in_specs=[
            pl.BlockSpec((1, Rx, tk), lambda n, k: (n, 0, k)),   # activation K-tile
            pl.BlockSpec((9, tk, mid), lambda n, k: (0, k, 0)),  # weight K-tile
            pl.BlockSpec((1, mid), lambda n, k: (0, 0)),         # folded BN bias
        ],
        out_specs=pl.BlockSpec((1, Rout, mid), lambda n, k: (n, 0, 0)),
        scratch_shapes=[pltpu.VMEM((Rout, mid), jnp.float32)],
        compiler_params=pltpu.CompilerParams(
            dimension_semantics=("parallel", "arbitrary"),
            vmem_limit_bytes=64 * 1024 * 1024),
    )(xf, w9, bias.reshape(1, mid))

    # Valid output pixel (h, w) lives at row h*Wp + w.
    return out[:, :H * Wp].reshape(N, H, Wp, mid)[:, :, :W, :]


def branch_matmul_bias_relu(pooled_stack, w_stack, b_stack):
    """All four pyramid 1x1 convs (+folded BN+ReLU) in a single Pallas call.

    pooled_stack : (4, Rb, C)  bf16   (rows zero-padded per branch)
    w_stack      : (4, C, Cb)  bf16   (BN scale folded)
    b_stack      : (4, 1, Cb)  f32
    returns      : (4, Rb, Cb) f32
    """
    nb, Rb, C = pooled_stack.shape
    Cb = w_stack.shape[-1]
    return pl.pallas_call(
        _branch_matmul_kernel,
        out_shape=jax.ShapeDtypeStruct((nb, Rb, Cb), jnp.float32),
        grid=(nb,),
        in_specs=[
            pl.BlockSpec((1, Rb, C), lambda i: (i, 0, 0)),
            pl.BlockSpec((1, C, Cb), lambda i: (i, 0, 0)),
            pl.BlockSpec((1, 1, Cb), lambda i: (i, 0, 0)),
        ],
        out_specs=pl.BlockSpec((1, Rb, Cb), lambda i: (i, 0, 0)),
        compiler_params=pltpu.CompilerParams(dimension_semantics=("parallel",)),
    )(pooled_stack, w_stack, b_stack)


# --------------------------------------------------------------------------- JAX glue ops

def adaptive_avg_pool(x, out_size):
    """PyTorch AdaptiveAvgPool2d semantics; x is NHWC, out is (N, out, out, C)."""
    N, H, W, C = x.shape
    rows = []
    for i in range(out_size):
        h0 = (i * H) // out_size
        h1 = -((-(i + 1) * H) // out_size)
        cols = []
        for j in range(out_size):
            w0 = (j * W) // out_size
            w1 = -((-(j + 1) * W) // out_size)
            cols.append(jnp.mean(x[:, h0:h1, w0:w1, :], axis=(1, 2)))
        rows.append(jnp.stack(cols, axis=1))
    return jnp.stack(rows, axis=1)


def _lin_coords(in_size, out_size):
    if out_size == 1:
        src = jnp.zeros((1,), jnp.float32)
    else:
        src = jnp.arange(out_size, dtype=jnp.float32) * (in_size - 1) / (out_size - 1)
    i0 = jnp.clip(jnp.floor(src).astype(jnp.int32), 0, in_size - 1)
    i1 = jnp.minimum(i0 + 1, in_size - 1)
    t = src - i0.astype(jnp.float32)
    return i0, i1, t


def upsample_bilinear_ac(x, out_hw):
    """Bilinear upsample with align_corners=True (PyTorch F.interpolate). x is NHWC."""
    N, h, w, C = x.shape
    OH, OW = out_hw
    i0, i1, th = _lin_coords(h, OH)
    j0, j1, tw = _lin_coords(w, OW)
    xh = x[:, i0] * (1.0 - th)[None, :, None, None] + x[:, i1] * th[None, :, None, None]
    return xh[:, :, j0] * (1.0 - tw)[None, None, :, None] + xh[:, :, j1] * tw[None, None, :, None]


# --------------------------------------------------------------------------- PSPBlock

def psp_block(x_nchw, params, upscale_out_size):
    x = jnp.transpose(x_nchw, (0, 2, 3, 1))                  # NCHW -> NHWC
    N, H, W, C = x.shape
    Cb = C // 4
    scales = (1, 2, 3, 6)

    # Pyramid branches: pooled 1x1 convs batched into a single Pallas call (grid=(4,)).
    Rb = _round_up(N * 36, 8)                                # pad rows to sublane multiple
    pooled_list = []
    for s in scales:
        p = adaptive_avg_pool(x, s).reshape(N * s * s, C)
        pooled_list.append(jnp.pad(p, ((0, Rb - N * s * s), (0, 0))))
    pooled_stack = jnp.stack(pooled_list, 0).astype(jnp.bfloat16)       # (4, Rb, C)
    w_stack = jnp.stack([b["w"] for b in params["branches"]], 0).astype(jnp.bfloat16)
    b_stack = jnp.stack([b["bias"].reshape(1, -1) for b in params["branches"]], 0)
    br_out = branch_matmul_bias_relu(pooled_stack, w_stack, b_stack)    # (4, Rb, Cb) f32

    branches = [x.astype(jnp.bfloat16)]                       # identity branch
    for bi, s in enumerate(scales):
        y = br_out[bi, :N * s * s].reshape(N, s, s, Cb)
        y = upsample_bilinear_ac(y, upscale_out_size)
        branches.append(y.astype(jnp.bfloat16))
    cat = jnp.concatenate(branches, axis=-1)                  # (N, H, W, 2C) bf16

    # 3x3 conv + folded BN + ReLU, streamed (no im2col), K-tiled, bf16 in / f32 acc.
    p3 = params["conv3"]
    y = conv3x3_bn_relu(cat, p3["w9"].astype(jnp.bfloat16), p3["bias"])

    # Dropout(p=0.1): identity at inference.
    # TODO(synk): training-mode stochastic dropout not implemented (inference semantics).
    return jnp.transpose(y, (0, 3, 1, 2))                     # back to NCHW


def psp_block_reference(x_nchw, params, upscale_out_size):
    """Pure-JAX reference (XLA conv), matched bf16 input precision for validation."""
    x = jnp.transpose(x_nchw, (0, 2, 3, 1))
    branches = [x.astype(jnp.bfloat16)]
    for s, p in zip((1, 2, 3, 6), params["branches"]):
        pooled = adaptive_avg_pool(x, s).astype(jnp.bfloat16)
        y = jnp.einsum("nhwc,co->nhwo", pooled, p["w"].astype(jnp.bfloat16),
                       preferred_element_type=jnp.float32)
        y = jnp.maximum(y + p["bias"], 0.0)
        y = upsample_bilinear_ac(y, upscale_out_size)
        branches.append(y.astype(jnp.bfloat16))
    cat = jnp.concatenate(branches, axis=-1)
    p3 = params["conv3"]
    y = jax.lax.conv_general_dilated(
        cat, p3["w_hwio"].astype(jnp.bfloat16), (1, 1), "SAME",
        dimension_numbers=("NHWC", "HWIO", "NHWC"),
        preferred_element_type=jnp.float32)
    y = jnp.maximum(y + p3["bias"], 0.0)
    return jnp.transpose(y, (0, 3, 1, 2))


# --------------------------------------------------------------------------- params

def init_params(key, in_channels, bottleneck_factor):
    assert in_channels % 4 == 0 and in_channels % bottleneck_factor == 0
    pool_mid = in_channels // 4
    conv3_in = 2 * in_channels     # == 4096 (hard-coded in the module) when in_channels == 2048
    mid = in_channels // bottleneck_factor
    eps = 1e-5
    keys = iter(jax.random.split(key, 64))

    def folded_bn(c):
        g = 1.0 + 0.1 * jax.random.normal(next(keys), (c,), jnp.float32)
        b = 0.1 * jax.random.normal(next(keys), (c,), jnp.float32)
        m = 0.1 * jax.random.normal(next(keys), (c,), jnp.float32)
        v = 1.0 + 0.1 * jnp.abs(jax.random.normal(next(keys), (c,), jnp.float32))
        scale = g / jnp.sqrt(v + eps)
        return scale, b - m * scale

    branches = []
    for _ in (1, 2, 3, 6):
        w_pt = 0.05 * jax.random.normal(next(keys), (pool_mid, in_channels, 1, 1), jnp.float32)
        scale, bias = folded_bn(pool_mid)
        # BN scale pre-folded into the 1x1 conv weight (epilogue = bias + ReLU only).
        branches.append({"w": w_pt[:, :, 0, 0].T * scale[None, :], "bias": bias})

    w_pt = 0.05 * jax.random.normal(next(keys), (mid, conv3_in, 3, 3), jnp.float32)
    scale, bias = folded_bn(mid)
    w_hwio = jnp.transpose(w_pt, (2, 3, 1, 0)) * scale[None, None, None, :]   # (3,3,Cin,mid)
    conv3 = {"w9": w_hwio.reshape(9, conv3_in, mid), "w_hwio": w_hwio, "bias": bias}
    return {"branches": branches, "conv3": conv3}


# --------------------------------------------------------------------------- main

if __name__ == "__main__":
    key = jax.random.PRNGKey(0)
    k_x, k_p = jax.random.split(key)

    # Small but representative config: exercises the K grid axis (2*C = 1024 -> 2 K-tiles)
    # and keeps output channels lane-dense (mid = 128).
    N, C, H, W = 2, 512, 8, 8
    bottleneck_factor = 4
    upscale_out_size = (H, W)

    x = jax.random.normal(k_x, (N, C, H, W), jnp.float32)
    params = init_params(k_p, C, bottleneck_factor)

    fwd = jax.jit(lambda xx: psp_block(xx, params, upscale_out_size))
    out = jax.block_until_ready(fwd(x))

    ref = psp_block_reference(x, params, upscale_out_size)
    assert out.shape == (N, C // bottleneck_factor, H, W), out.shape
    assert bool(jnp.all(jnp.isfinite(out)))
    assert bool(jnp.allclose(out, ref, rtol=2e-2, atol=2e-2))
    print("KERNEL_OK")
</pallas_src>

<mosaic_0001>
module attributes {stable_mosaic.version = 11 : i64} {
  func.func @_branch_matmul_kernel(%arg0: i32, %arg1: memref<1x72x512xbf16, #tpu.memory_space<vmem>>, %arg2: memref<1x512x128xbf16, #tpu.memory_space<vmem>>, %arg3: memref<1x1x128xf32, #tpu.memory_space<vmem>>, %arg4: memref<1x72x128xf32, #tpu.memory_space<vmem>>) attributes {dimension_semantics = [#tpu.dimension_semantics<parallel>], iteration_bounds = array<i64: 4>, scalar_prefetch = 0 : i64, scratch_operands = 0 : i64, tpu.core_type = #tpu.core_type<tc>, window_params = [{transform_indices = @transform_0, window_bounds = array<i64: 1, 72, 512>}, {transform_indices = @transform_1, window_bounds = array<i64: 1, 512, 128>}, {transform_indices = @transform_2, window_bounds = array<i64: 1, 1, 128>}, {transform_indices = @transform_3, window_bounds = array<i64: 1, 72, 128>}]} {
    %c0 = arith.constant 0 : index
    %c0_0 = arith.constant 0 : index
    %c0_1 = arith.constant 0 : index
    %0 = vector.load %arg1[%c0, %c0_0, %c0_1] : memref<1x72x512xbf16, #tpu.memory_space<vmem>>, vector<1x72x512xbf16>
    %1 = vector.shape_cast %0 : vector<1x72x512xbf16> to vector<72x512xbf16>
    %c0_2 = arith.constant 0 : index
    %c0_3 = arith.constant 0 : index
    %c0_4 = arith.constant 0 : index
    %2 = vector.load %arg2[%c0_2, %c0_3, %c0_4] : memref<1x512x128xbf16, #tpu.memory_space<vmem>>, vector<1x512x128xbf16>
    %3 = vector.shape_cast %2 : vector<1x512x128xbf16> to vector<512x128xbf16>
    %cst = arith.constant dense<0.000000e+00> : vector<72x128xf32>
    %4 = tpu.matmul %1, %3, %cst {dimension_numbers = #tpu.dot_dimension_numbers<[1], [0], [0], [1], [0, 0, 1, 1], [], []>} : vector<72x512xbf16>, vector<512x128xbf16>, vector<72x128xf32> -> vector<72x128xf32>
    %c0_5 = arith.constant 0 : index
    %c0_6 = arith.constant 0 : index
    %c0_7 = arith.constant 0 : index
    %5 = vector.load %arg3[%c0_5, %c0_6, %c0_7] : memref<1x1x128xf32, #tpu.memory_space<vmem>>, vector<1x1x128xf32>
    %6 = vector.shape_cast %5 : vector<1x1x128xf32> to vector<1x128xf32>
    %7 = vector.broadcast %6 : vector<1x128xf32> to vector<72x128xf32>
    %8 = arith.addf %4, %7 : vector<72x128xf32>
    %cst_8 = arith.constant 0.000000e+00 : f32
    %9 = vector.broadcast %cst_8 : f32 to vector<72x128xf32>
    %10 = arith.maximumf %8, %9 : vector<72x128xf32>
    %11 = vector.shape_cast %10 : vector<72x128xf32> to vector<1x72x128xf32>
    %c0_9 = arith.constant 0 : index
    %c0_10 = arith.constant 0 : index
    %c0_11 = arith.constant 0 : index
    %12 = vector.load %arg4[%c0_9, %c0_10, %c0_11] : memref<1x72x128xf32, #tpu.memory_space<vmem>>, vector<1x72x128xf32>
    tpu.vector_store %arg4[%c0_9, %c0_10, %c0_11], %11 {strides = array<i32>} : memref<1x72x128xf32, #tpu.memory_space<vmem>>, vector<1x72x128xf32>,
    return
  }
  func.func @transform_0(%arg0: i32) -> (i32, i32, i32) {
    %c0_i32 = arith.constant 0 : i32
    %c0_i32_0 = arith.constant 0 : i32
    %c0_i32_1 = arith.constant 0 : i32
    return %arg0, %c0_i32, %c0_i32_0 : i32, i32, i32
  }
  func.func @transform_1(%arg0: i32) -> (i32, i32, i32) {
    %c0_i32 = arith.constant 0 : i32
    %c0_i32_0 = arith.constant 0 : i32
    %c0_i32_1 = arith.constant 0 : i32
    return %arg0, %c0_i32, %c0_i32_0 : i32, i32, i32
  }
  func.func @transform_2(%arg0: i32) -> (i32, i32, i32) {
    %c0_i32 = arith.constant 0 : i32
    %c0_i32_0 = arith.constant 0 : i32
    %c0_i32_1 = arith.constant 0 : i32
    return %arg0, %c0_i32, %c0_i32_0 : i32, i32, i32
  }
  func.func @transform_3(%arg0: i32) -> (i32, i32, i32) {
    %c0_i32 = arith.constant 0 : i32
    %c0_i32_0 = arith.constant 0 : i32
    %c0_i32_1 = arith.constant 0 : i32
    return %arg0, %c0_i32, %c0_i32_0 : i32, i32, i32
  }
}

module attributes {stable_mosaic.version = 11 : i64} {
  func.func @_conv3x3_bn_relu_kernel(%arg0: i32, %arg1: i32, %arg2: memref<1x102x512xbf16, #tpu.memory_space<vmem>>, %arg3: memref<9x512x128xbf16, #tpu.memory_space<vmem>>, %arg4: memref<1x128xf32, #tpu.memory_space<vmem>>, %arg5: memref<1x80x128xf32, #tpu.memory_space<vmem>>, %arg6: memref<80x128xf32, #tpu.memory_space<vmem>>) attributes {dimension_semantics = [#tpu.dimension_semantics<parallel>, #tpu.dimension_semantics<arbitrary>], iteration_bounds = array<i64: 2, 2>, scalar_prefetch = 0 : i64, scratch_operands = 1 : i64, tpu.core_type = #tpu.core_type<tc>, window_params = [{transform_indices = @transform_0, window_bounds = array<i64: 1, 102, 512>}, {transform_indices = @transform_1, window_bounds = array<i64: 9, 512, 128>}, {pipeline_mode = #tpu.pipeline_mode<synchronous>, transform_indices = @transform_2, window_bounds = array<i64: 1, 128>}, {transform_indices = @transform_3, window_bounds = array<i64: 1, 80, 128>}]} {
    %c0_i32 = arith.constant 0 : i32
    %0 = arith.cmpi eq, %arg1, %c0_i32 : i32
    %1 = arith.extui %0 : i1 to i32
    %c0_i32_0 = arith.constant 0 : i32
    %2 = arith.cmpi ne, %1, %c0_i32_0 : i32
    scf.if %2 {
      %cst_53 = arith.constant 0.000000e+00 : f32
      %62 = vector.broadcast %cst_53 : f32 to vector<80x128xf32>
      %c0_54 = arith.constant 0 : index
      %c0_55 = arith.constant 0 : index
      %63 = vector.load %arg6[%c0_54, %c0_55] : memref<80x128xf32, #tpu.memory_space<vmem>>, vector<80x128xf32>
      tpu.vector_store %arg6[%c0_54, %c0_55], %62 {strides = array<i32>} : memref<80x128xf32, #tpu.memory_space<vmem>>, vector<80x128xf32>,
    } else {
    }
    %c0 = arith.constant 0 : index
    %c0_1 = arith.constant 0 : index
    %c0_2 = arith.constant 0 : index
    %3 = vector.load %arg2[%c0, %c0_1, %c0_2] : memref<1x102x512xbf16, #tpu.memory_space<vmem>>, vector<1x80x512xbf16>
    %4 = vector.shape_cast %3 : vector<1x80x512xbf16> to vector<80x512xbf16>
    %c0_3 = arith.constant 0 : index
    %c0_4 = arith.constant 0 : index
    %c0_5 = arith.constant 0 : index
    %5 = vector.load %arg3[%c0_3, %c0_4, %c0_5] : memref<9x512x128xbf16, #tpu.memory_space<vmem>>, vector<1x512x128xbf16>
    %6 = vector.shape_cast %5 : vector<1x512x128xbf16> to vector<512x128xbf16>
    %cst = arith.constant dense<0.000000e+00> : vector<80x128xf32>
    %7 = tpu.matmul %4, %6, %cst {dimension_numbers = #tpu.dot_dimension_numbers<[1], [0], [0], [1], [0, 0, 1, 1], [], []>} : vector<80x512xbf16>, vector<512x128xbf16>, vector<80x128xf32> -> vector<80x128xf32>
    %c0_6 = arith.constant 0 : index
    %c1 = arith.constant 1 : index
    %c0_7 = arith.constant 0 : index
    %8 = vector.load %arg2[%c0_6, %c1, %c0_7] : memref<1x102x512xbf16, #tpu.memory_space<vmem>>, vector<1x80x512xbf16>
    %9 = vector.shape_cast %8 : vector<1x80x512xbf16> to vector<80x512xbf16>
    %c1_8 = arith.constant 1 : index
    %c0_9 = arith.constant 0 : index
    %c0_10 = arith.constant 0 : index
    %10 = vector.load %arg3[%c1_8, %c0_9, %c0_10] : memref<9x512x128xbf16, #tpu.memory_space<vmem>>, vector<1x512x128xbf16>
    %11 = vector.shape_cast %10 : vector<1x512x128xbf16> to vector<512x128xbf16>
    %cst_11 = arith.constant dense<0.000000e+00> : vector<80x128xf32>
    %12 = tpu.matmul %9, %11, %cst_11 {dimension_numbers = #tpu.dot_dimension_numbers<[1], [0], [0], [1], [0, 0, 1, 1], [], []>} : vector<80x512xbf16>, vector<512x128xbf16>, vector<80x128xf32> -> vector<80x128xf32>
    %13 = arith.addf %7, %12 : vector<80x128xf32>
    %c0_12 = arith.constant 0 : index
    %c2 = arith.constant 2 : index
    %c0_13 = arith.constant 0 : index
    %14 = vector.load %arg2[%c0_12, %c2, %c0_13] : memref<1x102x512xbf16, #tpu.memory_space<vmem>>, vector<1x80x512xbf16>
    %15 = vector.shape_cast %14 : vector<1x80x512xbf16> to vector<80x512xbf16>
    %c2_14 = arith.constant 2 : index
    %c0_15 = arith.constant 0 : index
    %c0_16 = arith.constant 0 : index
    %16 = vector.load %arg3[%c2_14, %c0_15, %c0_16] : memref<9x512x128xbf16, #tpu.memory_space<vmem>>, vector<1x512x128xbf16>
    %17 = vector.shape_cast %16 : vector<1x512x128xbf16> to vector<512x128xbf16>
    %cst_17 = arith.constant dense<0.000000e+00> : vector<80x128xf32>
    %18 = tpu.matmul %15, %17, %cst_17 {dimension_numbers = #tpu.dot_dimension_numbers<[1], [0], [0], [1], [0, 0, 1, 1], [], []>} : vector<80x512xbf16>, vector<512x128xbf16>, vector<80x128xf32> -> vector<80x128xf32>
    %19 = arith.addf %13, %18 : vector<80x128xf32>
    %c0_18 = arith.constant 0 : index
    %c10 = arith.constant 10 : index
    %c0_19 = arith.constant 0 : index
    %20 = vector.load %arg2[%c0_18, %c10, %c0_19] : memref<1x102x512xbf16, #tpu.memory_space<vmem>>, vector<1x80x512xbf16>
    %21 = vector.shape_cast %20 : vector<1x80x512xbf16> to vector<80x512xbf16>
    %c3 = arith.constant 3 : index
    %c0_20 = arith.constant 0 : index
    %c0_21 = arith.constant 0 : index
    %22 = vector.load %arg3[%c3, %c0_20, %c0_21] : memref<9x512x128xbf16, #tpu.memory_space<vmem>>, vector<1x512x128xbf16>
    %23 = vector.shape_cast %22 : vector<1x512x128xbf16> to vector<512x128xbf16>
    %cst_22 = arith.constant dense<0.000000e+00> : vector<80x128xf32>
    %24 = tpu.matmul %21, %23, %cst_22 {dimension_numbers = #tpu.dot_dimension_numbers<[1], [0], [0], [1], [0, 0, 1, 1], [], []>} : vector<80x512xbf16>, vector<512x128xbf16>, vector<80x128xf32> -> vector<80x128xf32>
    %25 = arith.addf %19, %24 : vector<80x128xf32>
    %c0_23 = arith.constant 0 : index
    %c11 = arith.constant 11 : index
    %c0_24 = arith.constant 0 : index
    %26 = vector.load %arg2[%c0_23, %c11, %c0_24] : memref<1x102x512xbf16, #tpu.memory_space<vmem>>, vector<1x80x512xbf16>
    %27 = vector.shape_cast %26 : vector<1x80x512xbf16> to vector<80x512xbf16>
    %c4 = arith.constant 4 : index
    %c0_25 = arith.constant 0 : index
    %c0_26 = arith.constant 0 : index
    %28 = vector.load %arg3[%c4, %c0_25, %c0_26] : memref<9x512x128xbf16, #tpu.memory_space<vmem>>, vector<1x512x128xbf16>
    %29 = vector.shape_cast %28 : vector<1x512x128xbf16> to vector<512x128xbf16>
    %cst_27 = arith.constant dense<0.000000e+00> : vector<80x128xf32>
    %30 = tpu.matmul %27, %29, %cst_27 {dimension_numbers = #tpu.dot_dimension_numbers<[1], [0], [0], [1], [0, 0, 1, 1], [], []>} : vector<80x512xbf16>, vector<512x128xbf16>, vector<80x128xf32> -> vector<80x128xf32>
    %31 = arith.addf %25, %30 : vector<80x128xf32>
    %c0_28 = arith.constant 0 : index
    %c12 = arith.constant 12 : index
    %c0_29 = arith.constant 0 : index
    %32 = vector.load %arg2[%c0_28, %c12, %c0_29] : memref<1x102x512xbf16, #tpu.memory_space<vmem>>, vector<1x80x512xbf16>
    %33 = vector.shape_cast %32 : vector<1x80x512xbf16> to vector<80x512xbf16>
    %c5 = arith.constant 5 : index
    %c0_30 = arith.constant 0 : index
    %c0_31 = arith.constant 0 : index
    %34 = vector.load %arg3[%c5, %c0_30, %c0_31] : memref<9x512x128xbf16, #tpu.memory_space<vmem>>, vector<1x512x128xbf16>
    %35 = vector.shape_cast %34 : vector<1x512x128xbf16> to vector<512x128xbf16>
    %cst_32 = arith.constant dense<0.000000e+00> : vector<80x128xf32>
    %36 = tpu.matmul %33, %35, %cst_32 {dimension_numbers = #tpu.dot_dimension_numbers<[1], [0], [0], [1], [0, 0, 1, 1], [], []>} : vector<80x512xbf16>, vector<512x128xbf16>, vector<80x128xf32> -> vector<80x128xf32>
    %37 = arith.addf %31, %36 : vector<80x128xf32>
    %c0_33 = arith.constant 0 : index
    %c20 = arith.constant 20 : index
    %c0_34 = arith.constant 0 : index
    %38 = vector.load %arg2[%c0_33, %c20, %c0_34] : memref<1x102x512xbf16, #tpu.memory_space<vmem>>, vector<1x80x512xbf16>
    %39 = vector.shape_cast %38 : vector<1x80x512xbf16> to vector<80x512xbf16>
    %c6 = arith.constant 6 : index
    %c0_35 = arith.constant 0 : index
    %c0_36 = arith.constant 0 : index
    %40 = vector.load %arg3[%c6, %c0_35, %c0_36] : memref<9x512x128xbf16, #tpu.memory_space<vmem>>, vector<1x512x128xbf16>
    %41 = vector.shape_cast %40 : vector<1x512x128xbf16> to vector<512x128xbf16>
    %cst_37 = arith.constant dense<0.000000e+00> : vector<80x128xf32>
    %42 = tpu.matmul %39, %41, %cst_37 {dimension_numbers = #tpu.dot_dimension_numbers<[1], [0], [0], [1], [0, 0, 1, 1], [], []>} : vector<80x512xbf16>, vector<512x128xbf16>, vector<80x128xf32> -> vector<80x128xf32>
    %43 = arith.addf %37, %42 : vector<80x128xf32>
    %c0_38 = arith.constant 0 : index
    %c21 = arith.constant 21 : index
    %c0_39 = arith.constant 0 : index
    %44 = vector.load %arg2[%c0_38, %c21, %c0_39] : memref<1x102x512xbf16, #tpu.memory_space<vmem>>, vector<1x80x512xbf16>
    %45 = vector.shape_cast %44 : vector<1x80x512xbf16> to vector<80x512xbf16>
    %c7 = arith.constant 7 : index
    %c0_40 = arith.constant 0 : index
    %c0_41 = arith.constant 0 : index
    %46 = vector.load %arg3[%c7, %c0_40, %c0_41] : memref<9x512x128xbf16, #tpu.memory_space<vmem>>, vector<1x512x128xbf16>
    %47 = vector.shape_cast %46 : vector<1x512x128xbf16> to vector<512x128xbf16>
    %cst_42 = arith.constant dense<0.000000e+00> : vector<80x128xf32>
    %48 = tpu.matmul %45, %47, %cst_42 {dimension_numbers = #tpu.dot_dimension_numbers<[1], [0], [0], [1], [0, 0, 1, 1], [], []>} : vector<80x512xbf16>, vector<512x128xbf16>, vector<80x128xf32> -> vector<80x128xf32>
    %49 = arith.addf %43, %48 : vector<80x128xf32>
    %c0_43 = arith.constant 0 : index
    %c22 = arith.constant 22 : index
    %c0_44 = arith.constant 0 : index
    %50 = vector.load %arg2[%c0_43, %c22, %c0_44] : memref<1x102x512xbf16, #tpu.memory_space<vmem>>, vector<1x80x512xbf16>
    %51 = vector.shape_cast %50 : vector<1x80x512xbf16> to vector<80x512xbf16>
    %c8 = arith.constant 8 : index
    %c0_45 = arith.constant 0 : index
    %c0_46 = arith.constant 0 : index
    %52 = vector.load %arg3[%c8, %c0_45, %c0_46] : memref<9x512x128xbf16, #tpu.memory_space<vmem>>, vector<1x512x128xbf16>
    %53 = vector.shape_cast %52 : vector<1x512x128xbf16> to vector<512x128xbf16>
    %cst_47 = arith.constant dense<0.000000e+00> : vector<80x128xf32>
    %54 = tpu.matmul %51, %53, %cst_47 {dimension_numbers = #tpu.dot_dimension_numbers<[1], [0], [0], [1], [0, 0, 1, 1], [], []>} : vector<80x512xbf16>, vector<512x128xbf16>, vector<80x128xf32> -> vector<80x128xf32>
    %55 = arith.addf %49, %54 : vector<80x128xf32>
    %c0_48 = arith.constant 0 : index
    %c0_49 = arith.constant 0 : index
    %56 = vector.load %arg6[%c0_48, %c0_49] : memref<80x128xf32, #tpu.memory_space<vmem>>, vector<80x128xf32>
    %57 = arith.addf %56, %55 : vector<80x128xf32>
    %c0_50 = arith.constant 0 : index
    %c0_51 = arith.constant 0 : index
    %58 = vector.load %arg6[%c0_50, %c0_51] : memref<80x128xf32, #tpu.memory_space<vmem>>, vector<80x128xf32>
    tpu.vector_store %arg6[%c0_50, %c0_51], %57 {strides = array<i32>} : memref<80x128xf32, #tpu.memory_space<vmem>>, vector<80x128xf32>,
    %c1_i32 = arith.constant 1 : i32
    %59 = arith.cmpi eq, %arg1, %c1_i32 : i32
    %60 = arith.extui %59 : i1 to i32
    %c0_i32_52 = arith.constant 0 : i32
    %61 = arith.cmpi ne, %60, %c0_i32_52 : i32
    scf.if %61 {
      %c0_53 = arith.constant 0 : index
      %c0_54 = arith.constant 0 : index
      %62 = vector.load %arg6[%c0_53, %c0_54] : memref<80x128xf32, #tpu.memory_space<vmem>>, vector<80x128xf32>
      %c0_55 = arith.constant 0 : index
      %c0_56 = arith.constant 0 : index
      %63 = vector.load %arg4[%c0_55, %c0_56] : memref<1x128xf32, #tpu.memory_space<vmem>>, vector<1x128xf32>
      %64 = vector.broadcast %63 : vector<1x128xf32> to vector<80x128xf32>
      %65 = arith.addf %62, %64 : vector<80x128xf32>
      %cst_57 = arith.constant 0.000000e+00 : f32
      %66 = vector.broadcast %cst_57 : f32 to vector<80x128xf32>
      %67 = arith.maximumf %65, %66 : vector<80x128xf32>
      %68 = vector.shape_cast %67 : vector<80x128xf32> to vector<1x80x128xf32>
      %c0_58 = arith.constant 0 : index
      %c0_59 = arith.constant 0 : index
      %c0_60 = arith.constant 0 : index
      %69 = vector.load %arg5[%c0_58, %c0_59, %c0_60] : memref<1x80x128xf32, #tpu.memory_space<vmem>>, vector<1x80x128xf32>
      tpu.vector_store %arg5[%c0_58, %c0_59, %c0_60], %68 {strides = array<i32>} : memref<1x80x128xf32, #tpu.memory_space<vmem>>, vector<1x80x128xf32>,
    } else {
    }
    return
  }
  func.func @transform_0(%arg0: i32, %arg1: i32) -> (i32, i32, i32) {
    %c0_i32 = arith.constant 0 : i32
    %c0_i32_0 = arith.constant 0 : i32
    return %arg0, %c0_i32, %arg1 : i32, i32, i32
  }
  func.func @transform_1(%arg0: i32, %arg1: i32) -> (i32, i32, i32) {
    %c0_i32 = arith.constant 0 : i32
    %c0_i32_0 = arith.constant 0 : i32
    %c0_i32_1 = arith.constant 0 : i32
    return %c0_i32, %arg1, %c0_i32_0 : i32, i32, i32
  }
  func.func @transform_2(%arg0: i32, %arg1: i32) -> (i32, i32) {
    %c0_i32 = arith.constant 0 : i32
    %c0_i32_0 = arith.constant 0 : i32
    %c0_i32_1 = arith.constant 0 : i32
    return %c0_i32, %c0_i32_0 : i32, i32
  }
  func.func @transform_3(%arg0: i32, %arg1: i32) -> (i32, i32, i32) {
    %c0_i32 = arith.constant 0 : i32
    %c0_i32_0 = arith.constant 0 : i32
    %c0_i32_1 = arith.constant 0 : i32
    return %arg0, %c0_i32, %c0_i32_0 : i32, i32, i32
  }
}

</mosaic_0001>

<llo_original>
// kernel: squeeze.6
$region0: #{squeeze.6}
  %s0 = inlined_call_operand.vmem [shape: f32[1,18,128], index: 0, kind: input, shape index: {}]
  %s1 = inlined_call_operand.vmem [shape: f32[2,3,3,128], index: 1, kind: output, shape index: {}]
  $region1: #{squeeze.6} parent=0
    #allocation0 [shape = 'u8[24576]{0}', space=vmem, size = 0x6000, scoped, tag = 'scoped mem for output reshape']
    %v2 = vld [vmem:[%s0] sm:$0xff]
    %3 = vst [vmem:[#allocation0] sm:$0x7] %v2
    %s4 = scalar_lea.vmem [#allocation0], 5
    %5 = vst [vmem:[%s4] sm:$0x38] %v2
    %s6 = scalar_lea.vmem [#allocation0], 10
    %7 = vst [vmem:[%s6] sm:$0xc0] %v2
    %s8 = scalar_lea.vmem %s0, 8
    %v9 = vld [vmem:[%s8] sm:$0xff]
    %s10 = scalar_lea.vmem [#allocation0], 18
    %11 = vst [vmem:[%s10] ss:$6 sm:$0x3] %v9
    %s12 = scalar_lea.vmem [#allocation0], 23
    %13 = vst [vmem:[%s12] sm:$0xc] %v9
    %s14 = scalar_lea.vmem [#allocation0], 28
    %15 = vst [vmem:[%s14] sm:$0x70] %v9
    %s16 = scalar_lea.vmem [#allocation0], 33
    %17 = vst [vmem:[%s16] sm:$0x80] %v9
    %s18 = scalar_lea.vmem %s0, 16
    %v19 = vld [vmem:[%s18] sm:$0x3]
    %s20 = scalar_lea.vmem [#allocation0], 41
    %21 = vst [vmem:[%s20] sm:$0x3] %v19
    %s23 = sshllo.u32 0, 4
    %v25 = vld [vmem:[#allocation0] sm:%s23]
    %s26 = sshllo.u32 0, 4
    %27 = vst [vmem:[%s1] sm:%s26] %v25
    %s28 = scalar_lea.vmem [#allocation0], 8
    %v29 = vld [vmem:[%s28] sm:%s23]
    %s30 = sshllo.u32 0, 4
    %s31 = scalar_lea.vmem %s1, 4
    %32 = vst [vmem:[%s31] sm:%s30] %v29
    %s33 = scalar_lea.vmem [#allocation0], 16
    %v34 = vld [vmem:[%s33] sm:%s23]
    %s35 = sshllo.u32 0, 4
    %s36 = smul.addr 4, 2
    %s37 = scalar_lea.vmem %s1, %s36
    %38 = vst [vmem:[%s37] sm:%s35] %v34
    %s39 = scalar_lea.vmem [#allocation0], 24
    %v40 = vld [vmem:[%s39] sm:%s23]
    %s41 = sshllo.u32 0, 4
    %s42 = smul.addr 4, 3
    %s43 = scalar_lea.vmem %s1, %s42
    %44 = vst [vmem:[%s43] sm:%s41] %v40
    %s45 = scalar_lea.vmem [#allocation0], 32
    %v46 = vld [vmem:[%s45] sm:%s23]
    %s47 = sshllo.u32 0, 4
    %s48 = smul.addr 4, 4
    %s49 = scalar_lea.vmem %s1, %s48
    %50 = vst [vmem:[%s49] sm:%s47] %v46
    %s51 = scalar_lea.vmem [#allocation0], 40
    %v52 = vld [vmem:[%s51] sm:%s23]
    %s53 = sshllo.u32 0, 4
    %s54 = smul.addr 4, 5
    %s55 = scalar_lea.vmem %s1, %s54
    %56 = vst [vmem:[%s55] sm:%s53] %v52

// kernel: squeeze.7
$region0: #{squeeze.7}
  %s0 = inlined_call_operand.vmem [shape: f32[1,72,128], index: 0, kind: input, shape index: {}]
  %s1 = inlined_call_operand.vmem [shape: f32[2,6,6,128], index: 1, kind: output, shape index: {}]
  %v2 = vld [vmem:[%s0] sm:$0xff]
  %3 = vst [vmem:[%s1] sm:$0x3f] %v2
  %s4 = scalar_lea.vmem %s1, 2
  %5 = vst [vmem:[%s4] sm:$0xc0] %v2
  %s6 = scalar_lea.vmem %s0, 8
  %v7 = vld [vmem:[%s6] sm:$0xff]
  %s8 = scalar_lea.vmem %s1, 10
  %9 = vst [vmem:[%s8] sm:$0xf] %v7
  %s10 = scalar_lea.vmem %s1, 12
  %11 = vst [vmem:[%s10] sm:$0xf0] %v7
  %s12 = scalar_lea.vmem %s0, 16
  %v13 = vld [vmem:[%s12] sm:$0xff]
  %s14 = scalar_lea.vmem %s1, 20
  %15 = vst [vmem:[%s14] sm:$0x3] %v13
  %s16 = scalar_lea.vmem %s1, 22
  %17 = vst [vmem:[%s16] sm:$0xfc] %v13
  %s18 = scalar_lea.vmem %s0, 24
  %v19 = vld [vmem:[%s18] sm:$0xff]
  %s20 = scalar_lea.vmem %s1, 32
  %21 = vst [vmem:[%s20] sm:$0x3f] %v19
  %s22 = scalar_lea.vmem %s1, 34
  %23 = vst [vmem:[%s22] sm:$0xc0] %v19
  %s24 = scalar_lea.vmem %s0, 32
  %v25 = vld [vmem:[%s24] sm:$0xff]
  %s26 = scalar_lea.vmem %s1, 42
  %27 = vst [vmem:[%s26] sm:$0xf] %v25
  %s28 = scalar_lea.vmem %s1, 44
  %29 = vst [vmem:[%s28] sm:$0xf0] %v25
  %s30 = scalar_lea.vmem %s0, 40
  %v31 = vld [vmem:[%s30] sm:$0xff]
  %s32 = scalar_lea.vmem %s1, 52
  %33 = vst [vmem:[%s32] sm:$0x3] %v31
  %s34 = scalar_lea.vmem %s1, 54
  %35 = vst [vmem:[%s34] sm:$0xfc] %v31
  %s36 = scalar_lea.vmem %s0, 48
  %v37 = vld [vmem:[%s36] sm:$0xff]
  %s38 = scalar_lea.vmem %s1, 64
  %39 = vst [vmem:[%s38] sm:$0x3f] %v37
  %s40 = scalar_lea.vmem %s1, 66
  %41 = vst [vmem:[%s40] sm:$0xc0] %v37
  %s42 = scalar_lea.vmem %s0, 56
  %v43 = vld [vmem:[%s42] sm:$0xff]
  %s44 = scalar_lea.vmem %s1, 74
  %45 = vst [vmem:[%s44] sm:$0xf] %v43
  %s46 = scalar_lea.vmem %s1, 76
  %47 = vst [vmem:[%s46] sm:$0xf0] %v43
  %s48 = scalar_lea.vmem %s0, 64
  %v49 = vld [vmem:[%s48] sm:$0xff]
  %s50 = scalar_lea.vmem %s1, 84
  %51 = vst [vmem:[%s50] sm:$0x3] %v49
  %s52 = scalar_lea.vmem %s1, 86
  %53 = vst [vmem:[%s52] sm:$0xfc] %v49

// kernel: _lambda_.2
$region0: #{_lambda_.2}
  #allocation0 [shape = 'u32[]', space=smem, size = 0x4, offset = 0x4, fixed_abs, tag = 'smem constant byte address 0x4 - core index']
  #allocation1 [shape = 'u32[144,128]{1,0:T(1,128)}', space=vmem, size = 0x12000, scoped, tag = 'internal scratch']
  %s0 = inlined_call_operand.vmem [shape: bf16[4,72,512], index: 0, kind: input, shape index: {}]
  %s1 = inlined_call_operand.vmem [shape: bf16[4,512,128], index: 1, kind: input, shape index: {}]
  %s2 = inlined_call_operand.vmem [shape: f32[4,1,128], index: 2, kind: input, shape index: {}]
  %s3 = inlined_call_operand.vmem [shape: f32[4,72,128], index: 3, kind: output, shape index: {}]
  %s4 = sld [smem:[#allocation0]]
  $region45: #{_lambda_.2} parent=0
    _
  %s6 = ssub.s32 1, %s4
  %s7 = scalar_select 0, %s6, %s4
  loop: start=0, step=1, limit=6
  $region2: #{_lambda_.2} parent=0 // loop_pre_header
    _
  $region3: #{_lambda_.2} parent=0 // loop_header
    %s9 = sphi 0, %s13
    %p10 = scmp.ge.s32.totalorder %s9, 6
    %s19 = sphi 0, %s21
    %s22 = sphi 0, %s19
    %s23 = sphi 0, %s22
    %s39 = sphi 0, %s23
    %s45 = sphi 0, %s47
    %s48 = sphi 0, %s45
    %s49 = sphi 0, %s48
    %s65 = sphi 0, %s49
    %s71 = sphi 0, %s73
    %s74 = sphi 0, %s71
    %s75 = sphi 0, %s74
    %s91 = sphi 0, %s75
    %s97 = sphi 0, %s99
    %s100 = sphi 0, %s97
    %s101 = sphi 0, %s100
    %s117 = sphi 0, %s101
  $region4: #{_lambda_.2} parent=0 // loop_header_branch
    %12 = sbr.rel (%p10) target = $region8
  $region5: #{_lambda_.2} parent=0 // loop_body
    %s14 = ssub.s32 %s9, 1
    %s15 = ssub.s32 %s9, 2
    %s16 = sadd.s32 %s9, 1
    %s17 = ssub.s32 %s9, %s16
    %p18 = scmp.eq.s32.totalorder %s17, 0
    %s20 = sadd.s32 %s19, 1
    %s21 = scalar_select %p18, %s19, %s20
    %p24 = pneg %p18
    %p25 = scmp.eq.s32.totalorder %s9, 3
    %p26 = por %p24, %p25
    %p27 = scmp.ne.s32.totalorder %s19, %s22
    %p28 = scmp.eq.s32.totalorder %s9, 0
    %p29 = por %p27, %p28
    %p30 = scmp.ne.s32.totalorder %s19, %s22
    %p31 = scmp.eq.s32.totalorder %s14, 3
    %p32 = por %p30, %p31
    %p33 = scmp.ne.s32.totalorder %s22, %s23
    %p34 = scmp.eq.s32.totalorder %s14, 0
    %p35 = por %p33, %p34
    %p36 = scmp.ne.s32.totalorder %s22, %s23
    %p37 = scmp.eq.s32.totalorder %s15, 3
    %p38 = por %p36, %p37
    %p40 = scmp.ne.s32.totalorder %s23, %s39
    %p41 = scmp.eq.s32.totalorder %s15, 0
    %p42 = por %p40, %p41
    %s43 = ssub.s32 %s9, %s16
    %p44 = scmp.eq.s32.totalorder %s43, 0
    %s46 = sadd.s32 %s45, 1
    %s47 = scalar_select %p44, %s45, %s46
    %p50 = pneg %p44
    %p51 = scmp.eq.s32.totalorder %s9, 3
    %p52 = por %p50, %p51
    %p53 = scmp.ne.s32.totalorder %s45, %s48
    %p54 = scmp.eq.s32.totalorder %s9, 0
    %p55 = por %p53, %p54
    %p56 = scmp.ne.s32.totalorder %s45, %s48
    %p57 = scmp.eq.s32.totalorder %s14, 3
    %p58 = por %p56, %p57
    %p59 = scmp.ne.s32.totalorder %s48, %s49
    %p60 = scmp.eq.s32.totalorder %s14, 0
    %p61 = por %p59, %p60
    %p62 = scmp.ne.s32.totalorder %s48, %s49
    %p63 = scmp.eq.s32.totalorder %s15, 3
    %p64 = por %p62, %p63
    %p66 = scmp.ne.s32.totalorder %s49, %s65
    %p67 = scmp.eq.s32.totalorder %s15, 0
    %p68 = por %p66, %p67
    %s69 = ssub.s32 %s9, %s16
    %p70 = scmp.eq.s32.totalorder %s69, 0
    %s72 = sadd.s32 %s71, 1
    %s73 = scalar_select %p70, %s71, %s72
    %p76 = pneg %p70
    %p77 = scmp.eq.s32.totalorder %s9, 3
    %p78 = por %p76, %p77
    %p79 = scmp.ne.s32.totalorder %s71, %s74
    %p80 = scmp.eq.s32.totalorder %s9, 0
    %p81 = por %p79, %p80
    %p82 = scmp.ne.s32.totalorder %s71, %s74
    %p83 = scmp.eq.s32.totalorder %s14, 3
    %p84 = por %p82, %p83
    %p85 = scmp.ne.s32.totalorder %s74, %s75
    %p86 = scmp.eq.s32.totalorder %s14, 0
    %p87 = por %p85, %p86
    %p88 = scmp.ne.s32.totalorder %s74, %s75
    %p89 = scmp.eq.s32.totalorder %s15, 3
    %p90 = por %p88, %p89
    %p92 = scmp.ne.s32.totalorder %s75, %s91
    %p93 = scmp.eq.s32.totalorder %s15, 0
    %p94 = por %p92, %p93
    %s95 = ssub.s32 %s9, %s16
    %p96 = scmp.eq.s32.totalorder %s95, 0
    %s98 = sadd.s32 %s97, 1
    %s99 = scalar_select %p96, %s97, %s98
    %p102 = pneg %p96
    %p103 = scmp.eq.s32.totalorder %s9, 3
    %p104 = por %p102, %p103
    %p105 = scmp.ne.s32.totalorder %s97, %s100
    %p106 = scmp.eq.s32.totalorder %s9, 0
    %p107 = por %p105, %p106
    %p108 = scmp.ne.s32.totalorder %s97, %s100
    %p109 = scmp.eq.s32.totalorder %s14, 3
    %p110 = por %p108, %p109
    %p111 = scmp.ne.s32.totalorder %s100, %s101
    %p112 = scmp.eq.s32.totalorder %s14, 0
    %p113 = por %p111, %p112
    %p114 = scmp.ne.s32.totalorder %s100, %s101
    %p115 = scmp.eq.s32.totalorder %s15, 3
    %p116 = por %p114, %p115
    %p118 = scmp.ne.s32.totalorder %s101, %s117
    %p119 = scmp.eq.s32.totalorder %s15, 0
    %p120 = por %p118, %p119
    %p121 = scmp.le.s32.totalorder 1, %s9
    %p122 = scmp.lt.s32.totalorder %s9, 5
    %p123 = pnand %p121, %p122
    %p124 = pneg %p123
    // Predicated region
    $region9: #{_lambda_.2} parent=5 // pred_check
      _
    $region10: #{_lambda_.2} parent=5 // pred_check_branch
      %126 = sbr.rel (%p123) target = $region12
    $region11: #{_lambda_.2} parent=5 // pred_region
      %s127 = ssub.s32 %s9, 1
    $region12: #{_lambda_.2} parent=5 // pred_fallthru
      _
    %p128 = scmp.lt.s32.totalorder %s9, 4
    // Predicated region
    $region13: #{_lambda_.2} parent=5 // pred_check
      %p129 = pneg %p128
    $region14: #{_lambda_.2} parent=5 // pred_check_branch
      %131 = sbr.rel (%p129) target = $region16
    $region15: #{_lambda_.2} parent=5 // pred_region
      // Predicated region
      $region17: #{_lambda_.2} parent=15 // pred_check
        %p132 = pneg %p29
      $region18: #{_lambda_.2} parent=15 // pred_check_branch
        %134 = sbr.rel (%p132) target = $region20
      $region19: #{_lambda_.2} parent=15 // pred_region
        %p135 = scmp.lt.s32.totalorder %s9, 3
        %s136 = scalar_select %p135, %s9, 3
        %s137 = smul.addr %s136, 36
        %s138 = smul.addr %s137, 4
        %s139 = scalar_lea.vmem %s0, %s138
      $region20: #{_lambda_.2} parent=15 // pred_fallthru
        _
      // Predicated region
      $region21: #{_lambda_.2} parent=15 // pred_check
        %p140 = pneg %p55
      $region22: #{_lambda_.2} parent=15 // pred_check_branch
        %142 = sbr.rel (%p140) target = $region24
      $region23: #{_lambda_.2} parent=15 // pred_region
        %p143 = scmp.lt.s32.totalorder %s9, 3
        %s144 = scalar_select %p143, %s9, 3
        %s145 = smul.addr %s144, 64
        %s146 = smul.addr %s145, 4
        %s147 = scalar_lea.vmem %s1, %s146
      $region24: #{_lambda_.2} parent=15 // pred_fallthru
        _
      // Predicated region
      $region25: #{_lambda_.2} parent=15 // pred_check
        %p148 = pneg %p81
      $region26: #{_lambda_.2} parent=15 // pred_check_branch
        %150 = sbr.rel (%p148) target = $region28
      $region27: #{_lambda_.2} parent=15 // pred_region
        %p151 = scmp.lt.s32.totalorder %s9, 3
        %s152 = scalar_select %p151, %s9, 3
        %s153 = scalar_lea.vmem %s2, %s152
      $region28: #{_lambda_.2} parent=15 // pred_fallthru
        _
    $region16: #{_lambda_.2} parent=5 // pred_fallthru
      _
    %p154 = scmp.le.s32.totalorder 1, %s9
    %p155 = scmp.lt.s32.totalorder %s9, 5
    %p156 = pnand %p154, %p155
    %p157 = pneg %p156
    // Predicated region
    $region29: #{_lambda_.2} parent=5 // pred_check
      _
    $region30: #{_lambda_.2} parent=5 // pred_check_branch
      %159 = sbr.rel (%p156) target = $region32
    $region31: #{_lambda_.2} parent=5 // pred_region
      %s160 = ssub.s32 %s9, 1
      %p161 = scmp.lt.s32.totalorder %s14, 3
      %s162 = scalar_select %p161, %s14, 3
      %s163 = smul.addr %s162, 36
      %s164 = smul.addr %s163, 4
      %s165 = scalar_lea.vmem %s0, %s164
      %p166 = pneg %p35
      %p167 = pneg %p32
      %p168 = scmp.lt.s32.totalorder %s14, 3
      %s169 = scalar_select %p168, %s14, 3
      %s170 = smul.addr %s169, 64
      %s171 = smul.addr %s170, 4
      %s172 = scalar_lea.vmem %s1, %s171
      %p173 = pneg %p61
      %p174 = pneg %p58
      %p175 = scmp.lt.s32.totalorder %s14, 3
      %s176 = scalar_select %p175, %s14, 3
      %s177 = scalar_lea.vmem %s2, %s176
      %p178 = pneg %p87
      %p179 = pneg %p84
      %p180 = pneg %p113
      %p181 = pneg %p110
      %p182 = scmp.lt.s32.totalorder %s14, 3
      %s183 = scalar_select %p182, %s14, 3
      %s184 = smul.addr %s183, 9
      %s185 = smul.addr %s184, 8
      %s186 = scalar_lea.vmem %s3, %s185
      %p187 = scmp.lt.s32.totalorder %s14, 3
      %s188 = scalar_select %p187, %s14, 3
      %s189 = smul.addr %s188, 36
      %s190 = smul.addr %s189, 4
      %s191 = scalar_lea.vmem %s0, %s190
      %p192 = scmp.lt.s32.totalorder %s14, 3
      %s193 = scalar_select %p192, %s14, 3
      %s194 = smul.addr %s193, 64
      %s195 = smul.addr %s194, 4
      %s196 = scalar_lea.vmem %s1, %s195
      %p197 = scmp.lt.s32.totalorder %s14, 3
      %s198 = scalar_select %p197, %s14, 3
      %s199 = scalar_lea.vmem %s2, %s198
      %p200 = scmp.lt.s32.totalorder %s14, 3
      %s201 = scalar_select %p200, %s14, 3
      %s202 = smul.addr %s201, 9
      %s203 = smul.addr %s202, 8
      %s204 = scalar_lea.vmem %s3, %s203
      %v206 = vld [vmem:[%s191] sm:$0xff]
      %v207 = vld [vmem:[%s191 + $0x8] sm:$0xff]
      %v208 = vld [vmem:[%s191 + $0x10] sm:$0xff]
      %v209 = vld [vmem:[%s191 + $0x18] sm:$0xff]
      %v210 = vld [vmem:[%s191 + $0x20] sm:$0xff]
      %v211 = vld [vmem:[%s191 + $0x28] sm:$0xff]
      %v212 = vld [vmem:[%s191 + $0x30] sm:$0xff]
      %v213 = vld [vmem:[%s191 + $0x38] sm:$0xff]
      %v214 = vld [vmem:[%s191 + $0x40] sm:$0xff]
      %v215 = vld [vmem:[%s191 + $0x48] sm:$0xff]
      %v216 = vld [vmem:[%s191 + $0x50] sm:$0xff]
      %v217 = vld [vmem:[%s191 + $0x58] sm:$0xff]
      %v218 = vld [vmem:[%s191 + $0x60] sm:$0xff]
      %v219 = vld [vmem:[%s191 + $0x68] sm:$0xff]
      %v220 = vld [vmem:[%s191 + $0x70] sm:$0xff]
      %v221 = vld [vmem:[%s191 + $0x78] sm:$0xff]
      %v222 = vld [vmem:[%s191 + $0x80] sm:$0xff]
      %v223 = vld [vmem:[%s191 + $0x88] sm:$0xff]
      %v224 = vld [vmem:[%s196] sm:$0xf]
      %v225 = vld [vmem:[%s196 + $0x4] sm:$0xf]
      %v226 = vld [vmem:[%s196 + $0x8] sm:$0xf]
      %v227 = vld [vmem:[%s196 + $0xc] sm:$0xf]
      %v228 = vld [vmem:[%s196 + $0x10] sm:$0xf]
      %v229 = vld [vmem:[%s196 + $0x14] sm:$0xf]
      %v230 = vld [vmem:[%s196 + $0x18] sm:$0xf]
      %v231 = vld [vmem:[%s196 + $0x1c] sm:$0xf]
      %v232 = vld [vmem:[%s196 + $0x20] sm:$0xf]
      %v233 = vld [vmem:[%s196 + $0x24] sm:$0xf]
      %v234 = vld [vmem:[%s196 + $0x28] sm:$0xf]
      %v235 = vld [vmem:[%s196 + $0x2c] sm:$0xf]
      %v236 = vld [vmem:[%s196 + $0x30] sm:$0xf]
      %v237 = vld [vmem:[%s196 + $0x34] sm:$0xf]
      %v238 = vld [vmem:[%s196 + $0x38] sm:$0xf]
      %v239 = vld [vmem:[%s196 + $0x3c] sm:$0xf]
      %v240 = vld [vmem:[%s196 + $0x40] sm:$0xf]
      %v241 = vld [vmem:[%s196 + $0x44] sm:$0xf]
      %v242 = vld [vmem:[%s196 + $0x48] sm:$0xf]
      %v243 = vld [vmem:[%s196 + $0x4c] sm:$0xf]
      %v244 = vld [vmem:[%s196 + $0x50] sm:$0xf]
      %v245 = vld [vmem:[%s196 + $0x54] sm:$0xf]
      %v246 = vld [vmem:[%s196 + $0x58] sm:$0xf]
      %v247 = vld [vmem:[%s196 + $0x5c] sm:$0xf]
      %v248 = vld [vmem:[%s196 + $0x60] sm:$0xf]
      %v249 = vld [vmem:[%s196 + $0x64] sm:$0xf]
      %v250 = vld [vmem:[%s196 + $0x68] sm:$0xf]
      %v251 = vld [vmem:[%s196 + $0x6c] sm:$0xf]
      %v252 = vld [vmem:[%s196 + $0x70] sm:$0xf]
      %v253 = vld [vmem:[%s196 + $0x74] sm:$0xf]
      %v254 = vld [vmem:[%s196 + $0x78] sm:$0xf]
      %v255 = vld [vmem:[%s196 + $0x7c] sm:$0xf]
      %v256 = vld [vmem:[%s196 + $0x80] sm:$0xf]
      %v257 = vld [vmem:[%s196 + $0x84] sm:$0xf]
      %v258 = vld [vmem:[%s196 + $0x88] sm:$0xf]
      %v259 = vld [vmem:[%s196 + $0x8c] sm:$0xf]
      %v260 = vld [vmem:[%s196 + $0x90] sm:$0xf]
      %v261 = vld [vmem:[%s196 + $0x94] sm:$0xf]
      %v262 = vld [vmem:[%s196 + $0x98] sm:$0xf]
      %v263 = vld [vmem:[%s196 + $0x9c] sm:$0xf]
      %v264 = vld [vmem:[%s196 + $0xa0] sm:$0xf]
      %v265 = vld [vmem:[%s196 + $0xa4] sm:$0xf]
      %v266 = vld [vmem:[%s196 + $0xa8] sm:$0xf]
      %v267 = vld [vmem:[%s196 + $0xac] sm:$0xf]
      %v268 = vld [vmem:[%s196 + $0xb0] sm:$0xf]
      %v269 = vld [vmem:[%s196 + $0xb4] sm:$0xf]
      %v270 = vld [vmem:[%s196 + $0xb8] sm:$0xf]
      %v271 = vld [vmem:[%s196 + $0xbc] sm:$0xf]
      %v272 = vld [vmem:[%s196 + $0xc0] sm:$0xf]
      %v273 = vld [vmem:[%s196 + $0xc4] sm:$0xf]
      %v274 = vld [vmem:[%s196 + $0xc8] sm:$0xf]
      %v275 = vld [vmem:[%s196 + $0xcc] sm:$0xf]
      %v276 = vld [vmem:[%s196 + $0xd0] sm:$0xf]
      %v277 = vld [vmem:[%s196 + $0xd4] sm:$0xf]
      %v278 = vld [vmem:[%s196 + $0xd8] sm:$0xf]
      %v279 = vld [vmem:[%s196 + $0xdc] sm:$0xf]
      %v280 = vld [vmem:[%s196 + $0xe0] sm:$0xf]
      %v281 = vld [vmem:[%s196 + $0xe4] sm:$0xf]
      %v282 = vld [vmem:[%s196 + $0xe8] sm:$0xf]
      %v283 = vld [vmem:[%s196 + $0xec] sm:$0xf]
      %v284 = vld [vmem:[%s196 + $0xf0] sm:$0xf]
      %v285 = vld [vmem:[%s196 + $0xf4] sm:$0xf]
      %v286 = vld [vmem:[%s196 + $0xf8] sm:$0xf]
      %v287 = vld [vmem:[%s196 + $0xfc] sm:$0xf]
      %v288 = vld [vmem:[%s199] sm:$0x1]
      %v290 = vlaneseq
      %v291 = vshrl.u32 %v290, 7
      %v292 = vsub.s32 0, %v291
      %v293 = vrot.slane %v288, %v292
      %v313 = vunpack.c.l.b16 %v206
      %v314 = vunpack.c.h.b16 %v206
      %v315 = vunpack.c.l.b16 %v207
      %v316 = vunpack.c.h.b16 %v207
      %v317 = vunpack.c.l.b16 %v208
      %v318 = vunpack.c.h.b16 %v208
      %v319 = vunpack.c.l.b16 %v209
      %v320 = vunpack.c.h.b16 %v209
      %v321 = vunpack.c.l.b16 %v210
      %v322 = vunpack.c.h.b16 %v210
      %v323 = vunpack.c.l.b16 %v211
      %v324 = vunpack.c.h.b16 %v211
      %v325 = vunpack.c.l.b16 %v212
      %v326 = vunpack.c.h.b16 %v212
      %v327 = vunpack.c.l.b16 %v213
      %v328 = vunpack.c.h.b16 %v213
      %v329 = vunpack.c.l.b16 %v214
      %v330 = vunpack.c.h.b16 %v214
      %v331 = vunpack.c.l.b16 %v215
      %v332 = vunpack.c.h.b16 %v215
      %v333 = vunpack.c.l.b16 %v216
      %v334 = vunpack.c.h.b16 %v216
      %v335 = vunpack.c.l.b16 %v217
      %v336 = vunpack.c.h.b16 %v217
      %v337 = vunpack.c.l.b16 %v218
      %v338 = vunpack.c.h.b16 %v218
      %v339 = vunpack.c.l.b16 %v219
      %v340 = vunpack.c.h.b16 %v219
      %v341 = vunpack.c.l.b16 %v220
      %v342 = vunpack.c.h.b16 %v220
      %v343 = vunpack.c.l.b16 %v221
      %v344 = vunpack.c.h.b16 %v221
      %v345 = vunpack.c.l.b16 %v222
      %v346 = vunpack.c.h.b16 %v222
      %v347 = vunpack.c.l.b16 %v223
      %v348 = vunpack.c.h.b16 %v223
      %v349 = vpack.c.b16 %v317, %v313
      %v350 = vpack.c.b16 %v318, %v314
      %v351 = vpack.c.b16 %v319, %v315
      %v352 = vpack.c.b16 %v320, %v316
      %v353 = vpack.c.b16 %v325, %v321
      %v354 = vpack.c.b16 %v326, %v322
      %v355 = vpack.c.b16 %v327, %v323
      %v356 = vpack.c.b16 %v328, %v324
      %v357 = vpack.c.b16 %v333, %v329
      %v358 = vpack.c.b16 %v334, %v330
      %v359 = vpack.c.b16 %v335, %v331
      %v360 = vpack.c.b16 %v336, %v332
      %v361 = vpack.c.b16 %v341, %v337
      %v362 = vpack.c.b16 %v342, %v338
      %v363 = vpack.c.b16 %v343, %v339
      %v364 = vpack.c.b16 %v344, %v340
      %v365 = vpack.c.b16 %v345, %v345
      %v366 = vpack.c.b16 %v346, %v346
      %v367 = vpack.c.b16 %v347, %v347
      %v368 = vpack.c.b16 %v348, %v348
      %v453 = vunpack.c.l.b16 %v224
      %v454 = vunpack.c.l.b16 %v225
      %v455 = vunpack.c.l.b16 %v226
      %v456 = vunpack.c.l.b16 %v227
      %v457 = vunpack.c.l.b16 %v228
      %v458 = vunpack.c.l.b16 %v229
      %v459 = vunpack.c.l.b16 %v230
      %v460 = vunpack.c.l.b16 %v231
      %v461 = vunpack.c.l.b16 %v232
      %v462 = vunpack.c.l.b16 %v233
      %v463 = vunpack.c.l.b16 %v234
      %v464 = vunpack.c.l.b16 %v235
      %v465 = vunpack.c.l.b16 %v236
      %v466 = vunpack.c.l.b16 %v237
      %v467 = vunpack.c.l.b16 %v238
      %v468 = vunpack.c.l.b16 %v239
      %v469 = vunpack.c.l.b16 %v240
      %v470 = vunpack.c.l.b16 %v241
      %v471 = vunpack.c.l.b16 %v242
      %v472 = vunpack.c.l.b16 %v243
      %v473 = vunpack.c.l.b16 %v244
      %v474 = vunpack.c.l.b16 %v245
      %v475 = vunpack.c.l.b16 %v246
      %v476 = vunpack.c.l.b16 %v247
      %v477 = vunpack.c.l.b16 %v248
      %v478 = vunpack.c.l.b16 %v249
      %v479 = vunpack.c.l.b16 %v250
      %v480 = vunpack.c.l.b16 %v251
      %v481 = vunpack.c.l.b16 %v252
      %v482 = vunpack.c.l.b16 %v253
      %v483 = vunpack.c.l.b16 %v254
      %v484 = vunpack.c.l.b16 %v255
      %v485 = vunpack.c.l.b16 %v256
      %v486 = vunpack.c.l.b16 %v257
      %v487 = vunpack.c.l.b16 %v258
      %v488 = vunpack.c.l.b16 %v259
      %v489 = vunpack.c.l.b16 %v260
      %v490 = vunpack.c.l.b16 %v261
      %v491 = vunpack.c.l.b16 %v262
      %v492 = vunpack.c.l.b16 %v263
      %v493 = vunpack.c.l.b16 %v264
      %v494 = vunpack.c.l.b16 %v265
      %v495 = vunpack.c.l.b16 %v266
      %v496 = vunpack.c.l.b16 %v267
      %v497 = vunpack.c.l.b16 %v268
      %v498 = vunpack.c.l.b16 %v269
      %v499 = vunpack.c.l.b16 %v270
      %v500 = vunpack.c.l.b16 %v271
      %v501 = vunpack.c.l.b16 %v272
      %v502 = vunpack.c.l.b16 %v273
      %v503 = vunpack.c.l.b16 %v274
      %v504 = vunpack.c.l.b16 %v275
      %v505 = vunpack.c.l.b16 %v276
      %v506 = vunpack.c.l.b16 %v277
      %v507 = vunpack.c.l.b16 %v278
      %v508 = vunpack.c.l.b16 %v279
      %v509 = vunpack.c.l.b16 %v280
      %v510 = vunpack.c.l.b16 %v281
      %v511 = vunpack.c.l.b16 %v282
      %v512 = vunpack.c.l.b16 %v283
      %v513 = vunpack.c.l.b16 %v284
      %v514 = vunpack.c.l.b16 %v285
      %v515 = vunpack.c.l.b16 %v286
      %v516 = vunpack.c.l.b16 %v287
      %v517 = vpack.c.b16 %v454, %v453
      %v518 = vpack.c.b16 %v456, %v455
      %v519 = vpack.c.b16 %v458, %v457
      %v520 = vpack.c.b16 %v460, %v459
      %v521 = vpack.c.b16 %v462, %v461
      %v522 = vpack.c.b16 %v464, %v463
      %v523 = vpack.c.b16 %v466, %v465
      %v524 = vpack.c.b16 %v468, %v467
      %v525 = vpack.c.b16 %v470, %v469
      %v526 = vpack.c.b16 %v472, %v471
      %v527 = vpack.c.b16 %v474, %v473
      %v528 = vpack.c.b16 %v476, %v475
      %v529 = vpack.c.b16 %v478, %v477
      %v530 = vpack.c.b16 %v480, %v479
      %v531 = vpack.c.b16 %v482, %v481
      %v532 = vpack.c.b16 %v484, %v483
      %v533 = vpack.c.b16 %v486, %v485
      %v534 = vpack.c.b16 %v488, %v487
      %v535 = vpack.c.b16 %v490, %v489
      %v536 = vpack.c.b16 %v492, %v491
      %v537 = vpack.c.b16 %v494, %v493
      %v538 = vpack.c.b16 %v496, %v495
      %v539 = vpack.c.b16 %v498, %v497
      %v540 = vpack.c.b16 %v500, %v499
      %v541 = vpack.c.b16 %v502, %v501
      %v542 = vpack.c.b16 %v504, %v503
      %v543 = vpack.c.b16 %v506, %v505
      %v544 = vpack.c.b16 %v508, %v507
      %v545 = vpack.c.b16 %v510, %v509
      %v546 = vpack.c.b16 %v512, %v511
      %v547 = vpack.c.b16 %v514, %v513
      %v548 = vpack.c.b16 %v516, %v515
      %581 = vmatprep.subr.bf16.mxu0 0
      %582 = vmatpush1.bf16.msra.mxu0 %v517
      %583 = vmatprep.subr.bf16.mxu0 0
      %584 = vmatpush1.bf16.msra.mxu0 %v518
      %585 = vmatprep.subr.bf16.mxu0 0
      %586 = vmatpush1.bf16.msra.mxu0 %v519
      %587 = vmatprep.subr.bf16.mxu0 0
      %588 = vmatpush1.bf16.msra.mxu0 %v520
      %589 = vmatprep.subr.bf16.mxu0 0
      %590 = vmatpush1.bf16.msra.mxu0 %v521
      %591 = vmatprep.subr.bf16.mxu0 0
      %592 = vmatpush1.bf16.msra.mxu0 %v522
      %593 = vmatprep.subr.bf16.mxu0 0
      %594 = vmatpush1.bf16.msra.mxu0 %v523
      %595 = vmatprep.subr.bf16.mxu0 0
      %596 = vmatpush1.bf16.msra.mxu0 %v524
      %597 = vmatprep.subr.bf16.mxu0 0
      %598 = vmatpush1.bf16.msra.mxu0 %v525
      %599 = vmatprep.subr.bf16.mxu0 0
      %600 = vmatpush1.bf16.msra.mxu0 %v526
      %601 = vmatprep.subr.bf16.mxu0 0
      %602 = vmatpush1.bf16.msra.mxu0 %v527
      %603 = vmatprep.subr.bf16.mxu0 0
      %604 = vmatpush1.bf16.msra.mxu0 %v528
      %605 = vmatprep.subr.bf16.mxu0 0
      %606 = vmatpush1.bf16.msra.mxu0 %v529
      %607 = vmatprep.subr.bf16.mxu0 0
      %608 = vmatpush1.bf16.msra.mxu0 %v530
      %609 = vmatprep.subr.bf16.mxu0 0
      %610 = vmatpush1.bf16.msra.mxu0 %v531
      %611 = vmatprep.subr.bf16.mxu0 0
      %612 = vmatpush1.bf16.msra.mxu0 %v532
      %613 = vmatprep.mubr.bf16.mxu0 %v350
      %614 = vmatmul.mubr.bf16.gmra.mrb[0].mxu0 %v349
      %v615 = vpop.f32.mrb[0].mxu0
      %v616 = vadd.f32 %v293, %v615
      %v617 = vpop.f32.mrb[0].mxu0
      %v618 = vpop.f32.mrb[0].mxu0
      %v619 = vadd.f32 %v293, %v618
      %v620 = vpop.f32.mrb[0].mxu0
      %621 = vmatprep.mubr.bf16.mxu0 %v354
      %622 = vmatmul.mubr.bf16.gmra.mrb[0].mxu0 %v353
      %v623 = vpop.f32.mrb[0].mxu0
      %v624 = vadd.f32 %v293, %v623
      %v625 = vpop.f32.mrb[0].mxu0
      %v626 = vpop.f32.mrb[0].mxu0
      %v627 = vadd.f32 %v293, %v626
      %v628 = vpop.f32.mrb[0].mxu0
      %629 = vmatprep.mubr.bf16.mxu0 %v358
      %630 = vmatmul.mubr.bf16.gmra.mrb[0].mxu0 %v357
      %v631 = vpop.f32.mrb[0].mxu0
      %v632 = vadd.f32 %v293, %v631
      %v633 = vpop.f32.mrb[0].mxu0
      %v634 = vpop.f32.mrb[0].mxu0
      %v635 = vadd.f32 %v293, %v634
      %v636 = vpop.f32.mrb[0].mxu0
      %637 = vmatprep.mubr.bf16.mxu0 %v362
      %638 = vmatmul.mubr.bf16.gmra.mrb[0].mxu0 %v361
      %v639 = vpop.f32.mrb[0].mxu0
      %v640 = vadd.f32 %v293, %v639
      %v641 = vpop.f32.mrb[0].mxu0
      %v642 = vpop.f32.mrb[0].mxu0
      %v643 = vadd.f32 %v293, %v642
      %v644 = vpop.f32.mrb[0].mxu0
      %645 = vmatprep.mubr.bf16.mxu0 %v366
      %646 = vmatmul.mubr.bf16.gmra.mrb[0].mxu0 %v365
      %v647 = vpop.f32.mrb[0].mxu0
      %v648 = vadd.f32 %v293, %v647
      %v649 = vpop.f32.mrb[0].mxu0
      %v650 = vpop.f32.mrb[0].mxu0
      %v651 = vpop.f32.mrb[0].mxu0
      %652 = vdwg.mxu0
      %653 = vmatprep.subr.bf16.mxu0 0
      %654 = vmatpush1.bf16.msra.mxu0 %v533
      %655 = vmatprep.subr.bf16.mxu0 0
      %656 = vmatpush1.bf16.msra.mxu0 %v534
      %657 = vmatprep.subr.bf16.mxu0 0
      %658 = vmatpush1.bf16.msra.mxu0 %v535
      %659 = vmatprep.subr.bf16.mxu0 0
      %660 = vmatpush1.bf16.msra.mxu0 %v536
      %661 = vmatprep.subr.bf16.mxu0 0
      %662 = vmatpush1.bf16.msra.mxu0 %v537
      %663 = vmatprep.subr.bf16.mxu0 0
      %664 = vmatpush1.bf16.msra.mxu0 %v538
      %665 = vmatprep.subr.bf16.mxu0 0
      %666 = vmatpush1.bf16.msra.mxu0 %v539
      %667 = vmatprep.subr.bf16.mxu0 0
      %668 = vmatpush1.bf16.msra.mxu0 %v540
      %669 = vmatprep.subr.bf16.mxu0 0
      %670 = vmatpush1.bf16.msra.mxu0 %v541
      %671 = vmatprep.subr.bf16.mxu0 0
      %672 = vmatpush1.bf16.msra.mxu0 %v542
      %673 = vmatprep.subr.bf16.mxu0 0
      %674 = vmatpush1.bf16.msra.mxu0 %v543
      %675 = vmatprep.subr.bf16.mxu0 0
      %676 = vmatpush1.bf16.msra.mxu0 %v544
      %677 = vmatprep.subr.bf16.mxu0 0
      %678 = vmatpush1.bf16.msra.mxu0 %v545
      %679 = vmatprep.subr.bf16.mxu0 0
      %680 = vmatpush1.bf16.msra.mxu0 %v546
      %681 = vmatprep.subr.bf16.mxu0 0
      %682 = vmatpush1.bf16.msra.mxu0 %v547
      %683 = vmatprep.subr.bf16.mxu0 0
      %684 = vmatpush1.bf16.msra.mxu0 %v548
      %685 = vmatprep.mubr.bf16.mxu0 %v352
      %686 = vmatmul.mubr.bf16.gmra.mrb[0].mxu0 %v351
      %v687 = vpop.f32.mrb[0].mxu0
      %v688 = vadd.f32 %v616, %v687
      %v689 = vpop.f32.mrb[0].mxu0
      %v690 = vpop.f32.mrb[0].mxu0
      %v691 = vadd.f32 %v619, %v690
      %v692 = vpop.f32.mrb[0].mxu0
      %693 = vmatprep.mubr.bf16.mxu0 %v356
      %694 = vmatmul.mubr.bf16.gmra.mrb[0].mxu0 %v355
      %v695 = vpop.f32.mrb[0].mxu0
      %v696 = vadd.f32 %v624, %v695
      %v697 = vpop.f32.mrb[0].mxu0
      %v698 = vpop.f32.mrb[0].mxu0
      %v699 = vadd.f32 %v627, %v698
      %v700 = vpop.f32.mrb[0].mxu0
      %701 = vmatprep.mubr.bf16.mxu0 %v360
      %702 = vmatmul.mubr.bf16.gmra.mrb[0].mxu0 %v359
      %v703 = vpop.f32.mrb[0].mxu0
      %v704 = vadd.f32 %v632, %v703
      %v705 = vpop.f32.mrb[0].mxu0
      %v706 = vpop.f32.mrb[0].mxu0
      %v707 = vadd.f32 %v635, %v706
      %v708 = vpop.f32.mrb[0].mxu0
      %709 = vmatprep.mubr.bf16.mxu0 %v364
      %710 = vmatmul.mubr.bf16.gmra.mrb[0].mxu0 %v363
      %v711 = vpop.f32.mrb[0].mxu0
      %v712 = vadd.f32 %v640, %v711
      %v713 = vpop.f32.mrb[0].mxu0
      %v714 = vpop.f32.mrb[0].mxu0
      %v715 = vadd.f32 %v643, %v714
      %v716 = vpop.f32.mrb[0].mxu0
      %717 = vmatprep.mubr.bf16.mxu0 %v368
      %718 = vmatmul.mubr.bf16.gmra.mrb[0].mxu0 %v367
      %v719 = vpop.f32.mrb[0].mxu0
      %v720 = vadd.f32 %v648, %v719
      %v721 = vpop.f32.mrb[0].mxu0
      %v722 = vpop.f32.mrb[0].mxu0
      %v723 = vpop.f32.mrb[0].mxu0
      %724 = vdwg.mxu0
      %v725 = vmax.f32 %v688, 0.0
      %v726 = vmax.f32 %v691, 0.0
      %v727 = vmax.f32 %v696, 0.0
      %v728 = vmax.f32 %v699, 0.0
      %v729 = vmax.f32 %v704, 0.0
      %v730 = vmax.f32 %v707, 0.0
      %v731 = vmax.f32 %v712, 0.0
      %v732 = vmax.f32 %v715, 0.0
      %v733 = vmax.f32 %v720, 0.0
      %734 = vst [vmem:[%s204] sm:$0xff] %v725
      %735 = vst [vmem:[%s204 + $0x8] sm:$0xff] %v726
      %736 = vst [vmem:[%s204 + $0x10] sm:$0xff] %v727
      %737 = vst [vmem:[%s204 + $0x18] sm:$0xff] %v728
      %738 = vst [vmem:[%s204 + $0x20] sm:$0xff] %v729
      %739 = vst [vmem:[%s204 + $0x28] sm:$0xff] %v730
      %740 = vst [vmem:[%s204 + $0x30] sm:$0xff] %v731
      %741 = vst [vmem:[%s204 + $0x38] sm:$0xff] %v732
      %742 = vst [vmem:[%s204 + $0x40] sm:$0xff] %v733
      %p743 = scmp.lt.s32.totalorder %s14, 3
      %s744 = scalar_select %p743, %s14, 3
      %s745 = smul.addr %s744, 9
      %s746 = smul.addr %s745, 8
      %s747 = scalar_lea.vmem %s3, %s746
      // Predicated region
      $region33: #{_lambda_.2} parent=31 // pred_check
        %p748 = pneg %p110
      $region34: #{_lambda_.2} parent=31 // pred_check_branch
        %750 = sbr.rel (%p748) target = $region36
      $region35: #{_lambda_.2} parent=31 // pred_region
        _
      $region36: #{_lambda_.2} parent=31 // pred_fallthru
        _
    $region32: #{_lambda_.2} parent=5 // pred_fallthru
      _
    %p751 = scmp.le.s32.totalorder 2, %s9
    // Predicated region
    $region37: #{_lambda_.2} parent=5 // pred_check
      %p752 = pneg %p751
    $region38: #{_lambda_.2} parent=5 // pred_check_branch
      %754 = sbr.rel (%p752) target = $region40
    $region39: #{_lambda_.2} parent=5 // pred_region
      %s755 = ssub.s32 %s9, 2
      // Predicated region
      $region41: #{_lambda_.2} parent=39 // pred_check
        %p756 = pneg %p116
      $region42: #{_lambda_.2} parent=39 // pred_check_branch
        %758 = sbr.rel (%p756) target = $region44
      $region43: #{_lambda_.2} parent=39 // pred_region
        %p759 = scmp.lt.s32.totalorder %s15, 3
        %s760 = scalar_select %p759, %s15, 3
        %s761 = smul.addr %s760, 9
        %s762 = smul.addr %s761, 8
        %s763 = scalar_lea.vmem %s3, %s762
      $region44: #{_lambda_.2} parent=39 // pred_fallthru
        _
    $region40: #{_lambda_.2} parent=5 // pred_fallthru
      _
  $region6: #{_lambda_.2} parent=0 // loop_footer
    %s13 = sadd.s32 1, %s9
  $region7: #{_lambda_.2} parent=0 // loop_footer_branch
    %8 = sbr.rel target = $region3
  $region8: #{_lambda_.2} parent=0 // loop_exit
    _

// kernel: _lambda_.3
$region0: #{_lambda_.3}
  #allocation0 [shape = 'u32[]', space=smem, size = 0x4, offset = 0x4, fixed_abs, tag = 'smem constant byte address 0x4 - core index']
  #allocation1 [shape = 'u32[144,128]{1,0:T(1,128)}', space=vmem, size = 0x12000, scoped, tag = 'internal scratch']
  #allocation2 [shape = 'f32[80,128]{1,0:T(8,128)}', space=vmem, size = 0xa000, scoped, tag = 'scratch operand']
  #allocation10 [shape = 's32[]', space=sflag, size = 0x4, offset = 0, fixed_abs, tag = 'sflag constant byte address 0x0 - dummy sync flag']
  %s0 = inlined_call_operand.hbm [shape: bf16[2,102,1024], index: 0, kind: input, shape index: {}]
  %s1 = inlined_call_operand.hbm [shape: bf16[9,1024,128], index: 1, kind: input, shape index: {}]
  %s2 = inlined_call_operand.hbm [shape: f32[1,128], index: 2, kind: input, shape index: {}]
  %s3 = inlined_call_operand.hbm [shape: f32[2,80,128], index: 3, kind: output, shape index: {}]
  %s4 = sld [smem:[#allocation0]]
  $region65: #{_lambda_.3} parent=0
    _
  %s6 = ssub.s32 1, %s4
  %s7 = scalar_select 0, %s6, %s4
  $region1: #{_lambda_.3} parent=0
    #allocation3 [shape = 'u8[212992]{0}', space=vmem, size = 0x34000, scoped, tag = 'input window, operand 0']
    #allocation4 [shape = 's32[2]{0}', space=sflag, size = 0x8, scoped, tag = 'scoped memory for _lambda_.3']
    #allocation5 [shape = 's32[2]{0}', space=sflag, size = 0x8, scoped, tag = 'scoped memory for _lambda_.3']
    #allocation6 [shape = 'u8[2359296]{0}', space=vmem, size = 0x240000, scoped, tag = 'input window, operand 1']
    #allocation7 [shape = 's32[2]{0}', space=sflag, size = 0x8, scoped, tag = 'scoped memory for _lambda_.3']
    #allocation8 [shape = 'u8[512]{0}', space=vmem, size = 0x400, scoped, tag = 'input window, operand 2, single buffered']
    #allocation9 [shape = 'u8[81920]{0}', space=vmem, size = 0x14000, scoped, tag = 'output window, operand 0']
    %8 = vsyncpa [#allocation4], 0
    %s9 = scalar_lea.sflag [#allocation4], 1
    %10 = vsyncpa %s9, 0
    %11 = vsyncpa [#allocation7], 0
    %s12 = scalar_lea.sflag [#allocation7], 1
    %13 = vsyncpa %s12, 0
    %14 = vsyncpa [#allocation5], 0
    %s15 = scalar_lea.sflag [#allocation5], 1
    %16 = vsyncpa %s15, 0
    loop: start=0, step=1, limit=6
    $region2: #{_lambda_.3} parent=1 // loop_pre_header
      _
    $region3: #{_lambda_.3} parent=1 // loop_header
      %s18 = sphi 0, %s22
      %p19 = scmp.ge.s32.totalorder %s18, 6
      %s25 = sphi 0, %s37
      %s26 = sphi 0, %s33
      %s27 = sphi 0, %s25
      %s28 = sphi 0, %s26
      %s29 = sphi 0, %s27
      %s30 = sphi 0, %s28
      %s42 = sphi 0, %s44
      %s45 = sphi 0, %s42
      %s46 = sphi 0, %s45
      %s62 = sphi 0, %s46
      %s68 = sphi 0, %s70
      %s71 = sphi 0, %s68
      %s72 = sphi 0, %s71
      %s88 = sphi 0, %s72
      %s92 = sphi 0, %s92
      %s94 = sphi 0, %s92
      %s95 = sphi 0, %s94
      %s109 = sphi 0, %s95
      %s115 = sphi 0, %s117
      %s118 = sphi 0, %s115
      %s119 = sphi 0, %s118
      %s135 = sphi 0, %s119
    $region4: #{_lambda_.3} parent=1 // loop_header_branch
      %21 = sbr.rel (%p19) target = $region8
    $region5: #{_lambda_.3} parent=1 // loop_body
      %s23 = ssub.s32 %s18, 1
      %s24 = ssub.s32 %s18, 2
      %s31 = sadd.s32 1, %s26
      %p32 = scmp.ge.s32.totalorder %s31, 2
      %s33 = scalar_select %p32, 0, %s31
      %s34 = sadd.s32 1, %s25
      %s35 = scalar_select %p32, %s34, %s25
      %p36 = scmp.ge.s32.totalorder %s35, 2
      %s37 = scalar_select %p36, 0, %s35
      %s38 = ssub.s32 %s25, %s37
      %s39 = ssub.s32 %s26, %s33
      %s40 = sor.u32 %s38, %s39
      %p41 = scmp.eq.s32.totalorder %s40, 0
      %s43 = sadd.s32 %s42, 1
      %s44 = scalar_select %p41, %s42, %s43
      %p47 = pneg %p41
      %p48 = scmp.eq.s32.totalorder %s18, 3
      %p49 = por %p47, %p48
      %p50 = scmp.ne.s32.totalorder %s42, %s45
      %p51 = scmp.eq.s32.totalorder %s18, 0
      %p52 = por %p50, %p51
      %p53 = scmp.ne.s32.totalorder %s42, %s45
      %p54 = scmp.eq.s32.totalorder %s23, 3
      %p55 = por %p53, %p54
      %p56 = scmp.ne.s32.totalorder %s45, %s46
      %p57 = scmp.eq.s32.totalorder %s23, 0
      %p58 = por %p56, %p57
      %p59 = scmp.ne.s32.totalorder %s45, %s46
      %p60 = scmp.eq.s32.totalorder %s24, 3
      %p61 = por %p59, %p60
      %p63 = scmp.ne.s32.totalorder %s46, %s62
      %p64 = scmp.eq.s32.totalorder %s24, 0
      %p65 = por %p63, %p64
      %s66 = ssub.s32 %s26, %s33
      %p67 = scmp.eq.s32.totalorder %s66, 0
      %s69 = sadd.s32 %s68, 1
      %s70 = scalar_select %p67, %s68, %s69
      %p73 = pneg %p67
      %p74 = scmp.eq.s32.totalorder %s18, 3
      %p75 = por %p73, %p74
      %p76 = scmp.ne.s32.totalorder %s68, %s71
      %p77 = scmp.eq.s32.totalorder %s18, 0
      %p78 = por %p76, %p77
      %p79 = scmp.ne.s32.totalorder %s68, %s71
      %p80 = scmp.eq.s32.totalorder %s23, 3
      %p81 = por %p79, %p80
      %p82 = scmp.ne.s32.totalorder %s71, %s72
      %p83 = scmp.eq.s32.totalorder %s23, 0
      %p84 = por %p82, %p83
      %p85 = scmp.ne.s32.totalorder %s71, %s72
      %p86 = scmp.eq.s32.totalorder %s24, 3
      %p87 = por %p85, %p86
      %p89 = scmp.ne.s32.totalorder %s72, %s88
      %p90 = scmp.eq.s32.totalorder %s24, 0
      %p91 = por %p89, %p90
      %s93 = sadd.s32 %s92, 1
      %p96 = scmp.eq.s32.totalorder %s18, 3
      %p97 = scmp.ne.s32.totalorder %s92, %s94
      %p98 = scmp.eq.s32.totalorder %s18, 0
      %p99 = por %p97, %p98
      %p100 = scmp.ne.s32.totalorder %s92, %s94
      %p101 = scmp.eq.s32.totalorder %s23, 3
      %p102 = por %p100, %p101
      %p103 = scmp.ne.s32.totalorder %s94, %s95
      %p104 = scmp.eq.s32.totalorder %s23, 0
      %p105 = por %p103, %p104
      %p106 = scmp.ne.s32.totalorder %s94, %s95
      %p107 = scmp.eq.s32.totalorder %s24, 3
      %p108 = por %p106, %p107
      %p110 = scmp.ne.s32.totalorder %s95, %s109
      %p111 = scmp.eq.s32.totalorder %s24, 0
      %p112 = por %p110, %p111
      %s113 = ssub.s32 %s25, %s37
      %p114 = scmp.eq.s32.totalorder %s113, 0
      %s116 = sadd.s32 %s115, 1
      %s117 = scalar_select %p114, %s115, %s116
      %p120 = pneg %p114
      %p121 = scmp.eq.s32.totalorder %s18, 3
      %p122 = por %p120, %p121
      %p123 = scmp.ne.s32.totalorder %s115, %s118
      %p124 = scmp.eq.s32.totalorder %s18, 0
      %p125 = por %p123, %p124
      %p126 = scmp.ne.s32.totalorder %s115, %s118
      %p127 = scmp.eq.s32.totalorder %s23, 3
      %p128 = por %p126, %p127
      %p129 = scmp.ne.s32.totalorder %s118, %s119
      %p130 = scmp.eq.s32.totalorder %s23, 0
      %p131 = por %p129, %p130
      %p132 = scmp.ne.s32.totalorder %s118, %s119
      %p133 = scmp.eq.s32.totalorder %s24, 3
      %p134 = por %p132, %p133
      %p136 = scmp.ne.s32.totalorder %s119, %s135
      %p137 = scmp.eq.s32.totalorder %s24, 0
      %p138 = por %p136, %p137
      %p139 = scmp.le.s32.totalorder 1, %s18
      %p140 = scmp.lt.s32.totalorder %s18, 5
      %p141 = pnand %p139, %p140
      %p142 = pneg %p141
      // Predicated region
      $region9: #{_lambda_.3} parent=5 // pred_check
        _
      $region10: #{_lambda_.3} parent=5 // pred_check_branch
        %144 = sbr.rel (%p141) target = $region12
      $region11: #{_lambda_.3} parent=5 // pred_region
        %s145 = ssub.s32 %s18, 1
        // Predicated region
        $region13: #{_lambda_.3} parent=11 // pred_check
          %p146 = pneg %p105
        $region14: #{_lambda_.3} parent=11 // pred_check_branch
          %148 = sbr.rel (%p146) target = $region16
        $region15: #{_lambda_.3} parent=11 // pred_region
          %s150 = ssub.s32 16, 16
          %151 = vsyncadd [#allocation7], %s150
          %s153 = sshll.u32 [#allocation8], 4
          %s154 = int_to_ptr.vmem [resolvable:$true] %s153
          %156 = dma.hbm_to_vmem [thread:$0]  %s2, 16, %s154, [#allocation7]
        $region16: #{_lambda_.3} parent=11 // pred_fallthru
          _
      $region12: #{_lambda_.3} parent=5 // pred_fallthru
        _
      %p157 = scmp.lt.s32.totalorder %s18, 4
      // Predicated region
      $region17: #{_lambda_.3} parent=5 // pred_check
        %p158 = pneg %p157
      $region18: #{_lambda_.3} parent=5 // pred_check_branch
        %160 = sbr.rel (%p158) target = $region20
      $region19: #{_lambda_.3} parent=5 // pred_region
        // Predicated region
        $region21: #{_lambda_.3} parent=19 // pred_check
          %p161 = pneg %p52
        $region22: #{_lambda_.3} parent=19 // pred_check_branch
          %163 = sbr.rel (%p161) target = $region24
        $region23: #{_lambda_.3} parent=19 // pred_region
          %s164 = sand.u32 %s42, 1
          %s165 = scalar_lea.sflag [#allocation4], %s164
          %s166 = sand.u32 %s42, 1
          %s167 = smul.addr %s166, 208
          %s168 = scalar_lea.vmem [#allocation3], %s167
          %s169 = smul.u32 4, %s26
          %s171 = ssub.s32 3328, 3328
          %172 = vsyncadd %s165, %s171
          %s173 = smul.addr %s25, 104
          %s174 = sadd.s32 %s169, %s173
          %s175 = smul.addr %s174, 64
          %s176 = scalar_lea.hbm %s0, %s175
          %s177 = sshll.u32 %s168, 4
          %s178 = int_to_ptr.vmem [resolvable:$true] %s177
          %183 = dma.hbm_to_vmem [thread:$0]  %s176, 3328, %s178, %s165, 512, 256, 16
        $region24: #{_lambda_.3} parent=19 // pred_fallthru
          _
        // Predicated region
        $region25: #{_lambda_.3} parent=19 // pred_check
          %p184 = pneg %p78
        $region26: #{_lambda_.3} parent=19 // pred_check_branch
          %186 = sbr.rel (%p184) target = $region28
        $region27: #{_lambda_.3} parent=19 // pred_region
          #allocation11 [shape = 'u32[6]{0}', space=smem, size = 0x18, scoped, tag = 'DMA stride descriptor']
          %s187 = sand.u32 %s18, 1
          %s188 = scalar_lea.sflag [#allocation7], %s187
          %s189 = sand.u32 %s68, 1
          %s190 = smul.addr %s189, 2304
          %s191 = scalar_lea.vmem [#allocation6], %s190
          %s192 = smul.u32 64, %s26
          %s194 = ssub.s32 36864, 36864
          %195 = vsyncadd %s188, %s194
          %s196 = smul.addr %s192, 64
          %s197 = scalar_lea.hbm %s1, %s196
          %s199 = sshll.u32 1, 14
          %s200 = sxor.u32 4294967295, %s199
          %s202 = sld [smem:[#allocation0]]
          %s203 = sadd.s32 2, %s202
          %s205 = sshll.u32 7, 26
          %s206 = sxor.u32 4294967295, %s205
          %s207 = sand.u32 0, %s206
          %s208 = sshll.u32 %s203, 26
          %s209 = sor.u32 %s207, %s208
          %s210 = sshll.u32 %s191, 4
          %s211 = int_to_ptr.vmem [resolvable:$true] %s210
          %217 = sst [smem:[#allocation11]] 8192
          %s218 = scalar_lea.smem [#allocation11], 1
          %219 = sst [smem:[%s218]] 4096
          %s220 = scalar_lea.smem [#allocation11], 2
          %221 = sst [smem:[%s220]] 64
          %s222 = scalar_lea.smem [#allocation11], 3
          %223 = sst [smem:[%s222]] 64
          %s224 = scalar_lea.smem [#allocation11], 4
          %225 = sst [smem:[%s224]] 64
          %s226 = scalar_lea.smem [#allocation11], 5
          %227 = sst [smem:[%s226]] 4
          %229 = dma.general %s197, 36864, %s211, %s188, [#allocation10], [#allocation11], %s209, 0
        $region28: #{_lambda_.3} parent=19 // pred_fallthru
          _
      $region20: #{_lambda_.3} parent=5 // pred_fallthru
        _
      %p230 = scmp.le.s32.totalorder 1, %s18
      %p231 = scmp.lt.s32.totalorder %s18, 5
      %p232 = pnand %p230, %p231
      %p233 = pneg %p232
      // Predicated region
      $region29: #{_lambda_.3} parent=5 // pred_check
        _
      $region30: #{_lambda_.3} parent=5 // pred_check_branch
        %235 = sbr.rel (%p232) target = $region32
      $region31: #{_lambda_.3} parent=5 // pred_region
        %s236 = ssub.s32 %s18, 1
        %s237 = sand.u32 %s45, 1
        %s238 = scalar_lea.sflag [#allocation4], %s237
        %s239 = sand.u32 %s45, 1
        %s240 = smul.addr %s239, 208
        %s241 = scalar_lea.vmem [#allocation3], %s240
        // Predicated region
        $region33: #{_lambda_.3} parent=31 // pred_check
          %p242 = pneg %p58
        $region34: #{_lambda_.3} parent=31 // pred_check_branch
          %244 = sbr.rel (%p242) target = $region36
        $region35: #{_lambda_.3} parent=31 // pred_region
          %245 = dma.done %s238, 3328
        $region36: #{_lambda_.3} parent=31 // pred_fallthru
          _
        %s246 = sand.u32 %s23, 1
        %s247 = scalar_lea.sflag [#allocation7], %s246
        %s248 = sand.u32 %s71, 1
        %s249 = smul.addr %s248, 2304
        %s250 = scalar_lea.vmem [#allocation6], %s249
        // Predicated region
        $region37: #{_lambda_.3} parent=31 // pred_check
          %p251 = pneg %p84
        $region38: #{_lambda_.3} parent=31 // pred_check_branch
          %253 = sbr.rel (%p251) target = $region40
        $region39: #{_lambda_.3} parent=31 // pred_region
          %254 = dma.done %s247, 36864
        $region40: #{_lambda_.3} parent=31 // pred_fallthru
          _
        // Predicated region
        $region41: #{_lambda_.3} parent=31 // pred_check
          %p255 = pneg %p105
        $region42: #{_lambda_.3} parent=31 // pred_check_branch
          %257 = sbr.rel (%p255) target = $region44
        $region43: #{_lambda_.3} parent=31 // pred_region
          %258 = dma.done [#allocation7], 16
        $region44: #{_lambda_.3} parent=31 // pred_fallthru
          _
        %s259 = sand.u32 %s45, 1
        %s260 = scalar_lea.sflag [#allocation4], %s259
        %s261 = sand.u32 %s45, 1
        %s262 = smul.addr %s261, 208
        %s263 = scalar_lea.vmem [#allocation3], %s262
        %p264 = pneg %p58
        %p265 = pneg %p55
        %s266 = sand.u32 %s23, 1
        %s267 = scalar_lea.sflag [#allocation7], %s266
        %s268 = sand.u32 %s71, 1
        %s269 = smul.addr %s268, 2304
        %s270 = scalar_lea.vmem [#allocation6], %s269
        %p271 = pneg %p84
        %p272 = pneg %p81
        %p273 = pneg %p105
        %p274 = pneg %p102
        %p275 = pneg %p131
        %p276 = pneg %p128
        %s277 = sand.u32 %s118, 1
        %s278 = scalar_lea.sflag [#allocation5], %s277
        %s279 = sand.u32 %s118, 1
        %s280 = smul.addr %s279, 80
        %s281 = scalar_lea.vmem [#allocation9], %s280
        %s282 = smul.u32 4, %s28
        %s283 = smul.u32 64, %s28
        %p285 = scmp.eq.s32.totalorder %s28, 0
        // Predicated region
        $region45: #{_lambda_.3} parent=31 // pred_check
          %p286 = pneg %p285
        $region46: #{_lambda_.3} parent=31 // pred_check_branch
          %288 = sbr.rel (%p286) target = $region48
        $region47: #{_lambda_.3} parent=31 // pred_region
          %289 = vst [vmem:[#allocation2] sm:$0xff] 0.0
          %290 = vst [vmem:[#allocation2 + $0x8] sm:$0xff] 0.0
          %291 = vst [vmem:[#allocation2 + $0x10] sm:$0xff] 0.0
          %292 = vst [vmem:[#allocation2 + $0x18] sm:$0xff] 0.0
          %293 = vst [vmem:[#allocation2 + $0x20] sm:$0xff] 0.0
          %294 = vst [vmem:[#allocation2 + $0x28] sm:$0xff] 0.0
          %295 = vst [vmem:[#allocation2 + $0x30] sm:$0xff] 0.0
          %296 = vst [vmem:[#allocation2 + $0x38] sm:$0xff] 0.0
          %297 = vst [vmem:[#allocation2 + $0x40] sm:$0xff] 0.0
          %298 = vst [vmem:[#allocation2 + $0x48] sm:$0xff] 0.0
        $region48: #{_lambda_.3} parent=31 // pred_fallthru
          _
        %v299 = vld [vmem:[%s241] sm:$0xff]
        %v300 = vld [vmem:[%s241 + $0x8] sm:$0xff]
        %v301 = vld [vmem:[%s241 + $0x10] sm:$0xff]
        %v302 = vld [vmem:[%s241 + $0x18] sm:$0xff]
        %v303 = vld [vmem:[%s241 + $0x20] sm:$0xff]
        %v304 = vld [vmem:[%s241 + $0x28] sm:$0xff]
        %v305 = vld [vmem:[%s241 + $0x30] sm:$0xff]
        %v306 = vld [vmem:[%s241 + $0x38] sm:$0xff]
        %v307 = vld [vmem:[%s241 + $0x40] sm:$0xff]
        %v308 = vld [vmem:[%s241 + $0x48] sm:$0xff]
        %v309 = vld [vmem:[%s241 + $0x50] sm:$0xff]
        %v310 = vld [vmem:[%s241 + $0x58] sm:$0xff]
        %v311 = vld [vmem:[%s241 + $0x60] sm:$0xff]
        %v312 = vld [vmem:[%s241 + $0x68] sm:$0xff]
        %v313 = vld [vmem:[%s241 + $0x70] sm:$0xff]
        %v314 = vld [vmem:[%s241 + $0x78] sm:$0xff]
        %v315 = vld [vmem:[%s241 + $0x80] sm:$0xff]
        %v316 = vld [vmem:[%s241 + $0x88] sm:$0xff]
        %v317 = vld [vmem:[%s241 + $0x90] sm:$0xff]
        %v318 = vld [vmem:[%s241 + $0x98] sm:$0xff]
        %v319 = vld [vmem:[%s250] sm:$0xf]
        %v320 = vld [vmem:[%s250 + $0x4] sm:$0xf]
        %v321 = vld [vmem:[%s250 + $0x8] sm:$0xf]
        %v322 = vld [vmem:[%s250 + $0xc] sm:$0xf]
        %v323 = vld [vmem:[%s250 + $0x10] sm:$0xf]
        %v324 = vld [vmem:[%s250 + $0x14] sm:$0xf]
        %v325 = vld [vmem:[%s250 + $0x18] sm:$0xf]
        %v326 = vld [vmem:[%s250 + $0x1c] sm:$0xf]
        %v327 = vld [vmem:[%s250 + $0x20] sm:$0xf]
        %v328 = vld [vmem:[%s250 + $0x24] sm:$0xf]
        %v329 = vld [vmem:[%s250 + $0x28] sm:$0xf]
        %v330 = vld [vmem:[%s250 + $0x2c] sm:$0xf]
        %v331 = vld [vmem:[%s250 + $0x30] sm:$0xf]
        %v332 = vld [vmem:[%s250 + $0x34] sm:$0xf]
        %v333 = vld [vmem:[%s250 + $0x38] sm:$0xf]
        %v334 = vld [vmem:[%s250 + $0x3c] sm:$0xf]
        %v335 = vld [vmem:[%s250 + $0x40] sm:$0xf]
        %v336 = vld [vmem:[%s250 + $0x44] sm:$0xf]
        %v337 = vld [vmem:[%s250 + $0x48] sm:$0xf]
        %v338 = vld [vmem:[%s250 + $0x4c] sm:$0xf]
        %v339 = vld [vmem:[%s250 + $0x50] sm:$0xf]
        %v340 = vld [vmem:[%s250 + $0x54] sm:$0xf]
        %v341 = vld [vmem:[%s250 + $0x58] sm:$0xf]
        %v342 = vld [vmem:[%s250 + $0x5c] sm:$0xf]
        %v343 = vld [vmem:[%s250 + $0x60] sm:$0xf]
        %v344 = vld [vmem:[%s250 + $0x64] sm:$0xf]
        %v345 = vld [vmem:[%s250 + $0x68] sm:$0xf]
        %v346 = vld [vmem:[%s250 + $0x6c] sm:$0xf]
        %v347 = vld [vmem:[%s250 + $0x70] sm:$0xf]
        %v348 = vld [vmem:[%s250 + $0x74] sm:$0xf]
        %v349 = vld [vmem:[%s250 + $0x78] sm:$0xf]
        %v350 = vld [vmem:[%s250 + $0x7c] sm:$0xf]
        %v351 = vld [vmem:[%s250 + $0x80] sm:$0xf]
        %v352 = vld [vmem:[%s250 + $0x84] sm:$0xf]
        %v353 = vld [vmem:[%s250 + $0x88] sm:$0xf]
        %v354 = vld [vmem:[%s250 + $0x8c] sm:$0xf]
        %v355 = vld [vmem:[%s250 + $0x90] sm:$0xf]
        %v356 = vld [vmem:[%s250 + $0x94] sm:$0xf]
        %v357 = vld [vmem:[%s250 + $0x98] sm:$0xf]
        %v358 = vld [vmem:[%s250 + $0x9c] sm:$0xf]
        %v359 = vld [vmem:[%s250 + $0xa0] sm:$0xf]
        %v360 = vld [vmem:[%s250 + $0xa4] sm:$0xf]
        %v361 = vld [vmem:[%s250 + $0xa8] sm:$0xf]
        %v362 = vld [vmem:[%s250 + $0xac] sm:$0xf]
        %v363 = vld [vmem:[%s250 + $0xb0] sm:$0xf]
        %v364 = vld [vmem:[%s250 + $0xb4] sm:$0xf]
        %v365 = vld [vmem:[%s250 + $0xb8] sm:$0xf]
        %v366 = vld [vmem:[%s250 + $0xbc] sm:$0xf]
        %v367 = vld [vmem:[%s250 + $0xc0] sm:$0xf]
        %v368 = vld [vmem:[%s250 + $0xc4] sm:$0xf]
        %v369 = vld [vmem:[%s250 + $0xc8] sm:$0xf]
        %v370 = vld [vmem:[%s250 + $0xcc] sm:$0xf]
        %v371 = vld [vmem:[%s250 + $0xd0] sm:$0xf]
        %v372 = vld [vmem:[%s250 + $0xd4] sm:$0xf]
        %v373 = vld [vmem:[%s250 + $0xd8] sm:$0xf]
        %v374 = vld [vmem:[%s250 + $0xdc] sm:$0xf]
        %v375 = vld [vmem:[%s250 + $0xe0] sm:$0xf]
        %v376 = vld [vmem:[%s250 + $0xe4] sm:$0xf]
        %v377 = vld [vmem:[%s250 + $0xe8] sm:$0xf]
        %v378 = vld [vmem:[%s250 + $0xec] sm:$0xf]
        %v379 = vld [vmem:[%s250 + $0xf0] sm:$0xf]
        %v380 = vld [vmem:[%s250 + $0xf4] sm:$0xf]
        %v381 = vld [vmem:[%s250 + $0xf8] sm:$0xf]
        %v382 = vld [vmem:[%s250 + $0xfc] sm:$0xf]
        %v383 = vld [vmem:[%s241 + $0xa0] sm:$0x11]
        %v384 = vld [vmem:[%s241 + $0xa8] sm:$0x11]
        %s385 = scalar_lea.vmem %s250, 256 [#allocation6]
        %v386 = vld [vmem:[%s385] sm:$0xf]
        %v387 = vld [vmem:[%s385 + $0x4] sm:$0xf]
        %v388 = vld [vmem:[%s385 + $0x8] sm:$0xf]
        %v389 = vld [vmem:[%s385 + $0xc] sm:$0xf]
        %v390 = vld [vmem:[%s385 + $0x10] sm:$0xf]
        %v391 = vld [vmem:[%s385 + $0x14] sm:$0xf]
        %v392 = vld [vmem:[%s385 + $0x18] sm:$0xf]
        %v393 = vld [vmem:[%s385 + $0x1c] sm:$0xf]
        %v394 = vld [vmem:[%s385 + $0x20] sm:$0xf]
        %v395 = vld [vmem:[%s385 + $0x24] sm:$0xf]
        %v396 = vld [vmem:[%s385 + $0x28] sm:$0xf]
        %v397 = vld [vmem:[%s385 + $0x2c] sm:$0xf]
        %v398 = vld [vmem:[%s385 + $0x30] sm:$0xf]
        %v399 = vld [vmem:[%s385 + $0x34] sm:$0xf]
        %v400 = vld [vmem:[%s385 + $0x38] sm:$0xf]
        %v401 = vld [vmem:[%s385 + $0x3c] sm:$0xf]
        %v402 = vld [vmem:[%s385 + $0x40] sm:$0xf]
        %v403 = vld [vmem:[%s385 + $0x44] sm:$0xf]
        %v404 = vld [vmem:[%s385 + $0x48] sm:$0xf]
        %v405 = vld [vmem:[%s385 + $0x4c] sm:$0xf]
        %v406 = vld [vmem:[%s385 + $0x50] sm:$0xf]
        %v407 = vld [vmem:[%s385 + $0x54] sm:$0xf]
        %v408 = vld [vmem:[%s385 + $0x58] sm:$0xf]
        %v409 = vld [vmem:[%s385 + $0x5c] sm:$0xf]
        %v410 = vld [vmem:[%s385 + $0x60] sm:$0xf]
        %v411 = vld [vmem:[%s385 + $0x64] sm:$0xf]
        %v412 = vld [vmem:[%s385 + $0x68] sm:$0xf]
        %v413 = vld [vmem:[%s385 + $0x6c] sm:$0xf]
        %v414 = vld [vmem:[%s385 + $0x70] sm:$0xf]
        %v415 = vld [vmem:[%s385 + $0x74] sm:$0xf]
        %v416 = vld [vmem:[%s385 + $0x78] sm:$0xf]
        %v417 = vld [vmem:[%s385 + $0x7c] sm:$0xf]
        %v418 = vld [vmem:[%s385 + $0x80] sm:$0xf]
        %v419 = vld [vmem:[%s385 + $0x84] sm:$0xf]
        %v420 = vld [vmem:[%s385 + $0x88] sm:$0xf]
        %v421 = vld [vmem:[%s385 + $0x8c] sm:$0xf]
        %v422 = vld [vmem:[%s385 + $0x90] sm:$0xf]
        %v423 = vld [vmem:[%s385 + $0x94] sm:$0xf]
        %v424 = vld [vmem:[%s385 + $0x98] sm:$0xf]
        %v425 = vld [vmem:[%s385 + $0x9c] sm:$0xf]
        %v426 = vld [vmem:[%s385 + $0xa0] sm:$0xf]
        %v427 = vld [vmem:[%s385 + $0xa4] sm:$0xf]
        %v428 = vld [vmem:[%s385 + $0xa8] sm:$0xf]
        %v429 = vld [vmem:[%s385 + $0xac] sm:$0xf]
        %v430 = vld [vmem:[%s385 + $0xb0] sm:$0xf]
        %v431 = vld [vmem:[%s385 + $0xb4] sm:$0xf]
        %v432 = vld [vmem:[%s385 + $0xb8] sm:$0xf]
        %v433 = vld [vmem:[%s385 + $0xbc] sm:$0xf]
        %v434 = vld [vmem:[%s385 + $0xc0] sm:$0xf]
        %v435 = vld [vmem:[%s385 + $0xc4] sm:$0xf]
        %v436 = vld [vmem:[%s385 + $0xc8] sm:$0xf]
        %v437 = vld [vmem:[%s385 + $0xcc] sm:$0xf]
        %v438 = vld [vmem:[%s385 + $0xd0] sm:$0xf]
        %v439 = vld [vmem:[%s385 + $0xd4] sm:$0xf]
        %v440 = vld [vmem:[%s385 + $0xd8] sm:$0xf]
        %v441 = vld [vmem:[%s385 + $0xdc] sm:$0xf]
        %v442 = vld [vmem:[%s385 + $0xe0] sm:$0xf]
        %v443 = vld [vmem:[%s385 + $0xe4] sm:$0xf]
        %v444 = vld [vmem:[%s385 + $0xe8] sm:$0xf]
        %v445 = vld [vmem:[%s385 + $0xec] sm:$0xf]
        %v446 = vld [vmem:[%s385 + $0xf0] sm:$0xf]
        %v447 = vld [vmem:[%s385 + $0xf4] sm:$0xf]
        %v448 = vld [vmem:[%s385 + $0xf8] sm:$0xf]
        %v449 = vld [vmem:[%s385 + $0xfc] sm:$0xf]
        %v472 = vunpack.c.l.b16 %v299
        %v473 = vunpack.c.h.b16 %v299
        %v474 = vunpack.c.l.b16 %v300
        %v475 = vunpack.c.h.b16 %v300
        %v476 = vunpack.c.l.b16 %v301
        %v477 = vunpack.c.h.b16 %v301
        %v478 = vunpack.c.l.b16 %v302
        %v479 = vunpack.c.h.b16 %v302
        %v480 = vunpack.c.l.b16 %v303
        %v481 = vunpack.c.h.b16 %v303
        %v482 = vunpack.c.l.b16 %v304
        %v483 = vunpack.c.h.b16 %v304
        %v484 = vunpack.c.l.b16 %v305
        %v485 = vunpack.c.h.b16 %v305
        %v486 = vunpack.c.l.b16 %v306
        %v487 = vunpack.c.h.b16 %v306
        %v488 = vunpack.c.l.b16 %v307
        %v489 = vunpack.c.h.b16 %v307
        %v490 = vunpack.c.l.b16 %v308
        %v491 = vunpack.c.h.b16 %v308
        %v492 = vunpack.c.l.b16 %v309
        %v493 = vunpack.c.h.b16 %v309
        %v494 = vunpack.c.l.b16 %v310
        %v495 = vunpack.c.h.b16 %v310
        %v496 = vunpack.c.l.b16 %v311
        %v497 = vunpack.c.h.b16 %v311
        %v498 = vunpack.c.l.b16 %v312
        %v499 = vunpack.c.h.b16 %v312
        %v500 = vunpack.c.l.b16 %v313
        %v501 = vunpack.c.h.b16 %v313
        %v502 = vunpack.c.l.b16 %v314
        %v503 = vunpack.c.h.b16 %v314
        %v504 = vunpack.c.l.b16 %v315
        %v505 = vunpack.c.h.b16 %v315
        %v506 = vunpack.c.l.b16 %v316
        %v507 = vunpack.c.h.b16 %v316
        %v508 = vunpack.c.l.b16 %v317
        %v509 = vunpack.c.h.b16 %v317
        %v510 = vunpack.c.l.b16 %v318
        %v511 = vunpack.c.h.b16 %v318
        %v512 = vunpack.c.l.b16 %v383
        %v513 = vunpack.c.h.b16 %v383
        %v514 = vunpack.c.l.b16 %v384
        %v515 = vunpack.c.h.b16 %v384
        %v516 = vpack.c.b16 %v476, %v472
        %v517 = vpack.c.b16 %v477, %v473
        %v518 = vpack.c.b16 %v478, %v474
        %v519 = vpack.c.b16 %v479, %v475
        %v520 = vpack.c.b16 %v484, %v480
        %v521 = vpack.c.b16 %v485, %v481
        %v522 = vpack.c.b16 %v486, %v482
        %v523 = vpack.c.b16 %v487, %v483
        %v524 = vpack.c.b16 %v492, %v488
        %v525 = vpack.c.b16 %v493, %v489
        %v526 = vpack.c.b16 %v494, %v490
        %v527 = vpack.c.b16 %v495, %v491
        %v528 = vpack.c.b16 %v500, %v496
        %v529 = vpack.c.b16 %v501, %v497
        %v530 = vpack.c.b16 %v502, %v498
        %v531 = vpack.c.b16 %v503, %v499
        %v532 = vpack.c.b16 %v508, %v504
        %v533 = vpack.c.b16 %v509, %v505
        %v534 = vpack.c.b16 %v510, %v506
        %v535 = vpack.c.b16 %v511, %v507
        %v536 = vpack.c.b16 %v512, %v512
        %v537 = vpack.c.b16 %v513, %v513
        %v538 = vpack.c.b16 %v514, %v514
        %v539 = vpack.c.b16 %v515, %v515
        %vm540 = vsmask.f32 7424
        %v542 = vshrl.u32 %v516, 16
        %v544 = vshll.u32 %v516, 16
        %v546 = vrot.slane %v544, 1
        %v547 = vor.u32 %v542, %v546
        %v549 = vshll.u32 %v520, 16
        %v551 = vrot.slane %v549, 1
        %v552 = vsel %vm540, %v547, %v551
        %v554 = vshrl.u32 %v517, 16
        %v556 = vshll.u32 %v517, 16
        %v558 = vrot.slane %v556, 1
        %v559 = vor.u32 %v554, %v558
        %v561 = vshll.u32 %v521, 16
        %v563 = vrot.slane %v561, 1
        %v564 = vsel %vm540, %v559, %v563
        %v566 = vshrl.u32 %v518, 16
        %v568 = vshll.u32 %v518, 16
        %v570 = vrot.slane %v568, 1
        %v571 = vor.u32 %v566, %v570
        %v573 = vshll.u32 %v522, 16
        %v575 = vrot.slane %v573, 1
        %v576 = vsel %vm540, %v571, %v575
        %v578 = vshrl.u32 %v519, 16
        %v580 = vshll.u32 %v519, 16
        %v582 = vrot.slane %v580, 1
        %v583 = vor.u32 %v578, %v582
        %v585 = vshll.u32 %v523, 16
        %v587 = vrot.slane %v585, 1
        %v588 = vsel %vm540, %v583, %v587
        %v589 = vshrl.u32 %v520, 16
        %v591 = vor.u32 %v589, %v551
        %v593 = vshll.u32 %v524, 16
        %v595 = vrot.slane %v593, 1
        %v596 = vsel %vm540, %v591, %v595
        %v597 = vshrl.u32 %v521, 16
        %v599 = vor.u32 %v597, %v563
        %v601 = vshll.u32 %v525, 16
        %v603 = vrot.slane %v601, 1
        %v604 = vsel %vm540, %v599, %v603
        %v605 = vshrl.u32 %v522, 16
        %v607 = vor.u32 %v605, %v575
        %v609 = vshll.u32 %v526, 16
        %v611 = vrot.slane %v609, 1
        %v612 = vsel %vm540, %v607, %v611
        %v613 = vshrl.u32 %v523, 16
        %v615 = vor.u32 %v613, %v587
        %v617 = vshll.u32 %v527, 16
        %v619 = vrot.slane %v617, 1
        %v620 = vsel %vm540, %v615, %v619
        %v621 = vshrl.u32 %v524, 16
        %v623 = vor.u32 %v621, %v595
        %v625 = vshll.u32 %v528, 16
        %v627 = vrot.slane %v625, 1
        %v628 = vsel %vm540, %v623, %v627
        %v629 = vshrl.u32 %v525, 16
        %v631 = vor.u32 %v629, %v603
        %v633 = vshll.u32 %v529, 16
        %v635 = vrot.slane %v633, 1
        %v636 = vsel %vm540, %v631, %v635
        %v637 = vshrl.u32 %v526, 16
        %v639 = vor.u32 %v637, %v611
        %v641 = vshll.u32 %v530, 16
        %v643 = vrot.slane %v641, 1
        %v644 = vsel %vm540, %v639, %v643
        %v645 = vshrl.u32 %v527, 16
        %v647 = vor.u32 %v645, %v619
        %v649 = vshll.u32 %v531, 16
        %v651 = vrot.slane %v649, 1
        %v652 = vsel %vm540, %v647, %v651
        %v653 = vshrl.u32 %v528, 16
        %v655 = vor.u32 %v653, %v627
        %v657 = vshll.u32 %v532, 16
        %v659 = vrot.slane %v657, 1
        %v660 = vsel %vm540, %v655, %v659
        %v661 = vshrl.u32 %v529, 16
        %v663 = vor.u32 %v661, %v635
        %v665 = vshll.u32 %v533, 16
        %v667 = vrot.slane %v665, 1
        %v668 = vsel %vm540, %v663, %v667
        %v669 = vshrl.u32 %v530, 16
        %v671 = vor.u32 %v669, %v643
        %v673 = vshll.u32 %v534, 16
        %v675 = vrot.slane %v673, 1
        %v676 = vsel %vm540, %v671, %v675
        %v677 = vshrl.u32 %v531, 16
        %v679 = vor.u32 %v677, %v651
        %v681 = vshll.u32 %v535, 16
        %v683 = vrot.slane %v681, 1
        %v684 = vsel %vm540, %v679, %v683
        %v685 = vshrl.u32 %v532, 16
        %v687 = vor.u32 %v685, %v659
        %v689 = vshll.u32 %v536, 16
        %v691 = vrot.slane %v689, 1
        %v692 = vsel %vm540, %v687, %v691
        %v693 = vshrl.u32 %v533, 16
        %v695 = vor.u32 %v693, %v667
        %v697 = vshll.u32 %v537, 16
        %v699 = vrot.slane %v697, 1
        %v700 = vsel %vm540, %v695, %v699
        %v701 = vshrl.u32 %v534, 16
        %v703 = vor.u32 %v701, %v675
        %v705 = vshll.u32 %v538, 16
        %v707 = vrot.slane %v705, 1
        %v708 = vsel %vm540, %v703, %v707
        %v709 = vshrl.u32 %v535, 16
        %v711 = vor.u32 %v709, %v683
        %v713 = vshll.u32 %v539, 16
        %v715 = vrot.slane %v713, 1
        %v716 = vsel %vm540, %v711, %v715
        %v801 = vunpack.c.l.b16 %v386
        %v802 = vunpack.c.l.b16 %v387
        %v803 = vunpack.c.l.b16 %v388
        %v804 = vunpack.c.l.b16 %v389
        %v805 = vunpack.c.l.b16 %v390
        %v806 = vunpack.c.l.b16 %v391
        %v807 = vunpack.c.l.b16 %v392
        %v808 = vunpack.c.l.b16 %v393
        %v809 = vunpack.c.l.b16 %v394
        %v810 = vunpack.c.l.b16 %v395
        %v811 = vunpack.c.l.b16 %v396
        %v812 = vunpack.c.l.b16 %v397
        %v813 = vunpack.c.l.b16 %v398
        %v814 = vunpack.c.l.b16 %v399
        %v815 = vunpack.c.l.b16 %v400
        %v816 = vunpack.c.l.b16 %v401
        %v817 = vunpack.c.l.b16 %v402
        %v818 = vunpack.c.l.b16 %v403
        %v819 = vunpack.c.l.b16 %v404
        %v820 = vunpack.c.l.b16 %v405
        %v821 = vunpack.c.l.b16 %v406
        %v822 = vunpack.c.l.b16 %v407
        %v823 = vunpack.c.l.b16 %v408
        %v824 = vunpack.c.l.b16 %v409
        %v825 = vunpack.c.l.b16 %v410
        %v826 = vunpack.c.l.b16 %v411
        %v827 = vunpack.c.l.b16 %v412
        %v828 = vunpack.c.l.b16 %v413
        %v829 = vunpack.c.l.b16 %v414
        %v830 = vunpack.c.l.b16 %v415
        %v831 = vunpack.c.l.b16 %v416
        %v832 = vunpack.c.l.b16 %v417
        %v833 = vunpack.c.l.b16 %v418
        %v834 = vunpack.c.l.b16 %v419
        %v835 = vunpack.c.l.b16 %v420
        %v836 = vunpack.c.l.b16 %v421
        %v837 = vunpack.c.l.b16 %v422
        %v838 = vunpack.c.l.b16 %v423
        %v839 = vunpack.c.l.b16 %v424
        %v840 = vunpack.c.l.b16 %v425
        %v841 = vunpack.c.l.b16 %v426
        %v842 = vunpack.c.l.b16 %v427
        %v843 = vunpack.c.l.b16 %v428
        %v844 = vunpack.c.l.b16 %v429
        %v845 = vunpack.c.l.b16 %v430
        %v846 = vunpack.c.l.b16 %v431
        %v847 = vunpack.c.l.b16 %v432
        %v848 = vunpack.c.l.b16 %v433
        %v849 = vunpack.c.l.b16 %v434
        %v850 = vunpack.c.l.b16 %v435
        %v851 = vunpack.c.l.b16 %v436
        %v852 = vunpack.c.l.b16 %v437
        %v853 = vunpack.c.l.b16 %v438
        %v854 = vunpack.c.l.b16 %v439
        %v855 = vunpack.c.l.b16 %v440
        %v856 = vunpack.c.l.b16 %v441
        %v857 = vunpack.c.l.b16 %v442
        %v858 = vunpack.c.l.b16 %v443
        %v859 = vunpack.c.l.b16 %v444
        %v860 = vunpack.c.l.b16 %v445
        %v861 = vunpack.c.l.b16 %v446
        %v862 = vunpack.c.l.b16 %v447
        %v863 = vunpack.c.l.b16 %v448
        %v864 = vunpack.c.l.b16 %v449
        %v865 = vpack.c.b16 %v802, %v801
        %v866 = vpack.c.b16 %v804, %v803
        %v867 = vpack.c.b16 %v806, %v805
        %v868 = vpack.c.b16 %v808, %v807
        %v869 = vpack.c.b16 %v810, %v809
        %v870 = vpack.c.b16 %v812, %v811
        %v871 = vpack.c.b16 %v814, %v813
        %v872 = vpack.c.b16 %v816, %v815
        %v873 = vpack.c.b16 %v818, %v817
        %v874 = vpack.c.b16 %v820, %v819
        %v875 = vpack.c.b16 %v822, %v821
        %v876 = vpack.c.b16 %v824, %v823
        %v877 = vpack.c.b16 %v826, %v825
        %v878 = vpack.c.b16 %v828, %v827
        %v879 = vpack.c.b16 %v830, %v829
        %v880 = vpack.c.b16 %v832, %v831
        %v881 = vpack.c.b16 %v834, %v833
        %v882 = vpack.c.b16 %v836, %v835
        %v883 = vpack.c.b16 %v838, %v837
        %v884 = vpack.c.b16 %v840, %v839
        %v885 = vpack.c.b16 %v842, %v841
        %v886 = vpack.c.b16 %v844, %v843
        %v887 = vpack.c.b16 %v846, %v845
        %v888 = vpack.c.b16 %v848, %v847
        %v889 = vpack.c.b16 %v850, %v849
        %v890 = vpack.c.b16 %v852, %v851
        %v891 = vpack.c.b16 %v854, %v853
        %v892 = vpack.c.b16 %v856, %v855
        %v893 = vpack.c.b16 %v858, %v857
        %v894 = vpack.c.b16 %v860, %v859
        %v895 = vpack.c.b16 %v862, %v861
        %v896 = vpack.c.b16 %v864, %v863
        %929 = vmatprep.subr.bf16.mxu0 0
        %930 = vmatpush1.bf16.msra.mxu0 %v865
        %931 = vmatprep.subr.bf16.mxu0 0
        %932 = vmatpush1.bf16.msra.mxu0 %v866
        %933 = vmatprep.subr.bf16.mxu0 0
        %934 = vmatpush1.bf16.msra.mxu0 %v867
        %935 = vmatprep.subr.bf16.mxu0 0
        %936 = vmatpush1.bf16.msra.mxu0 %v868
        %937 = vmatprep.subr.bf16.mxu0 0
        %938 = vmatpush1.bf16.msra.mxu0 %v869
        %939 = vmatprep.subr.bf16.mxu0 0
        %940 = vmatpush1.bf16.msra.mxu0 %v870
        %941 = vmatprep.subr.bf16.mxu0 0
        %942 = vmatpush1.bf16.msra.mxu0 %v871
        %943 = vmatprep.subr.bf16.mxu0 0
        %944 = vmatpush1.bf16.msra.mxu0 %v872
        %945 = vmatprep.subr.bf16.mxu0 0
        %946 = vmatpush1.bf16.msra.mxu0 %v873
        %947 = vmatprep.subr.bf16.mxu0 0
        %948 = vmatpush1.bf16.msra.mxu0 %v874
        %949 = vmatprep.subr.bf16.mxu0 0
        %950 = vmatpush1.bf16.msra.mxu0 %v875
        %951 = vmatprep.subr.bf16.mxu0 0
        %952 = vmatpush1.bf16.msra.mxu0 %v876
        %953 = vmatprep.subr.bf16.mxu0 0
        %954 = vmatpush1.bf16.msra.mxu0 %v877
        %955 = vmatprep.subr.bf16.mxu0 0
        %956 = vmatpush1.bf16.msra.mxu0 %v878
        %957 = vmatprep.subr.bf16.mxu0 0
        %958 = vmatpush1.bf16.msra.mxu0 %v879
        %959 = vmatprep.subr.bf16.mxu0 0
        %960 = vmatpush1.bf16.msra.mxu0 %v880
        %961 = vmatprep.mubr.bf16.mxu0 %v564
        %962 = vmatmul.mubr.bf16.gmra.mrb[0].mxu0 %v552
        %v963 = vpop.f32.mrb[0].mxu0
        %v964 = vadd.f32 0.0, %v963
        %v965 = vpop.f32.mrb[0].mxu0
        %v966 = vpop.f32.mrb[0].mxu0
        %v967 = vadd.f32 0.0, %v966
        %v968 = vpop.f32.mrb[0].mxu0
        %969 = vmatprep.mubr.bf16.mxu0 %v604
        %970 = vmatmul.mubr.bf16.gmra.mrb[0].mxu0 %v596
        %v971 = vpop.f32.mrb[0].mxu0
        %v972 = vadd.f32 0.0, %v971
        %v973 = vpop.f32.mrb[0].mxu0
        %v974 = vpop.f32.mrb[0].mxu0
        %v975 = vadd.f32 0.0, %v974
        %v976 = vpop.f32.mrb[0].mxu0
        %977 = vmatprep.mubr.bf16.mxu0 %v636
        %978 = vmatmul.mubr.bf16.gmra.mrb[0].mxu0 %v628
        %v979 = vpop.f32.mrb[0].mxu0
        %v980 = vadd.f32 0.0, %v979
        %v981 = vpop.f32.mrb[0].mxu0
        %v982 = vpop.f32.mrb[0].mxu0
        %v983 = vadd.f32 0.0, %v982
        %v984 = vpop.f32.mrb[0].mxu0
        %985 = vmatprep.mubr.bf16.mxu0 %v668
        %986 = vmatmul.mubr.bf16.gmra.mrb[0].mxu0 %v660
        %v987 = vpop.f32.mrb[0].mxu0
        %v988 = vadd.f32 0.0, %v987
        %v989 = vpop.f32.mrb[0].mxu0
        %v990 = vpop.f32.mrb[0].mxu0
        %v991 = vadd.f32 0.0, %v990
        %v992 = vpop.f32.mrb[0].mxu0
        %993 = vmatprep.mubr.bf16.mxu0 %v700
        %994 = vmatmul.mubr.bf16.gmra.mrb[0].mxu0 %v692
        %v995 = vpop.f32.mrb[0].mxu0
        %v996 = vadd.f32 0.0, %v995
        %v997 = vpop.f32.mrb[0].mxu0
        %v998 = vpop.f32.mrb[0].mxu0
        %v999 = vadd.f32 0.0, %v998
        %v1000 = vpop.f32.mrb[0].mxu0
        %1001 = vdwg.mxu0
        %1002 = vmatprep.subr.bf16.mxu0 0
        %1003 = vmatpush1.bf16.msra.mxu0 %v881
        %1004 = vmatprep.subr.bf16.mxu0 0
        %1005 = vmatpush1.bf16.msra.mxu0 %v882
        %1006 = vmatprep.subr.bf16.mxu0 0
        %1007 = vmatpush1.bf16.msra.mxu0 %v883
        %1008 = vmatprep.subr.bf16.mxu0 0
        %1009 = vmatpush1.bf16.msra.mxu0 %v884
        %1010 = vmatprep.subr.bf16.mxu0 0
        %1011 = vmatpush1.bf16.msra.mxu0 %v885
        %1012 = vmatprep.subr.bf16.mxu0 0
        %1013 = vmatpush1.bf16.msra.mxu0 %v886
        %1014 = vmatprep.subr.bf16.mxu0 0
        %1015 = vmatpush1.bf16.msra.mxu0 %v887
        %1016 = vmatprep.subr.bf16.mxu0 0
        %1017 = vmatpush1.bf16.msra.mxu0 %v888
        %1018 = vmatprep.subr.bf16.mxu0 0
        %1019 = vmatpush1.bf16.msra.mxu0 %v889
        %1020 = vmatprep.subr.bf16.mxu0 0
        %1021 = vmatpush1.bf16.msra.mxu0 %v890
        %1022 = vmatprep.subr.bf16.mxu0 0
        %1023 = vmatpush1.bf16.msra.mxu0 %v891
        %1024 = vmatprep.subr.bf16.mxu0 0
        %1025 = vmatpush1.bf16.msra.mxu0 %v892
        %1026 = vmatprep.subr.bf16.mxu0 0
        %1027 = vmatpush1.bf16.msra.mxu0 %v893
        %1028 = vmatprep.subr.bf16.mxu0 0
        %1029 = vmatpush1.bf16.msra.mxu0 %v894
        %1030 = vmatprep.subr.bf16.mxu0 0
        %1031 = vmatpush1.bf16.msra.mxu0 %v895
        %1032 = vmatprep.subr.bf16.mxu0 0
        %1033 = vmatpush1.bf16.msra.mxu0 %v896
        %1034 = vmatprep.mubr.bf16.mxu0 %v588
        %1035 = vmatmul.mubr.bf16.gmra.mrb[0].mxu0 %v576
        %v1036 = vpop.f32.mrb[0].mxu0
        %v1037 = vadd.f32 %v964, %v1036
        %v1038 = vpop.f32.mrb[0].mxu0
        %v1039 = vpop.f32.mrb[0].mxu0
        %v1040 = vadd.f32 %v967, %v1039
        %v1041 = vpop.f32.mrb[0].mxu0
        %1042 = vmatprep.mubr.bf16.mxu0 %v620
        %1043 = vmatmul.mubr.bf16.gmra.mrb[0].mxu0 %v612
        %v1044 = vpop.f32.mrb[0].mxu0
        %v1045 = vadd.f32 %v972, %v1044
        %v1046 = vpop.f32.mrb[0].mxu0
        %v1047 = vpop.f32.mrb[0].mxu0
        %v1048 = vadd.f32 %v975, %v1047
        %v1049 = vpop.f32.mrb[0].mxu0
        %1050 = vmatprep.mubr.bf16.mxu0 %v652
        %1051 = vmatmul.mubr.bf16.gmra.mrb[0].mxu0 %v644
        %v1052 = vpop.f32.mrb[0].mxu0
        %v1053 = vadd.f32 %v980, %v1052
        %v1054 = vpop.f32.mrb[0].mxu0
        %v1055 = vpop.f32.mrb[0].mxu0
        %v1056 = vadd.f32 %v983, %v1055
        %v1057 = vpop.f32.mrb[0].mxu0
        %1058 = vmatprep.mubr.bf16.mxu0 %v684
        %1059 = vmatmul.mubr.bf16.gmra.mrb[0].mxu0 %v676
        %v1060 = vpop.f32.mrb[0].mxu0
        %v1061 = vadd.f32 %v988, %v1060
        %v1062 = vpop.f32.mrb[0].mxu0
        %v1063 = vpop.f32.mrb[0].mxu0
        %v1064 = vadd.f32 %v991, %v1063
        %v1065 = vpop.f32.mrb[0].mxu0
        %1066 = vmatprep.mubr.bf16.mxu0 %v716
        %1067 = vmatmul.mubr.bf16.gmra.mrb[0].mxu0 %v708
        %v1068 = vpop.f32.mrb[0].mxu0
        %v1069 = vadd.f32 %v996, %v1068
        %v1070 = vpop.f32.mrb[0].mxu0
        %v1071 = vpop.f32.mrb[0].mxu0
        %v1072 = vadd.f32 %v999, %v1071
        %v1073 = vpop.f32.mrb[0].mxu0
        %1074 = vdwg.mxu0
        %v1159 = vunpack.c.l.b16 %v319
        %v1160 = vunpack.c.l.b16 %v320
        %v1161 = vunpack.c.l.b16 %v321
        %v1162 = vunpack.c.l.b16 %v322
        %v1163 = vunpack.c.l.b16 %v323
        %v1164 = vunpack.c.l.b16 %v324
        %v1165 = vunpack.c.l.b16 %v325
        %v1166 = vunpack.c.l.b16 %v326
        %v1167 = vunpack.c.l.b16 %v327
        %v1168 = vunpack.c.l.b16 %v328
        %v1169 = vunpack.c.l.b16 %v329
        %v1170 = vunpack.c.l.b16 %v330
        %v1171 = vunpack.c.l.b16 %v331
        %v1172 = vunpack.c.l.b16 %v332
        %v1173 = vunpack.c.l.b16 %v333
        %v1174 = vunpack.c.l.b16 %v334
        %v1175 = vunpack.c.l.b16 %v335
        %v1176 = vunpack.c.l.b16 %v336
        %v1177 = vunpack.c.l.b16 %v337
        %v1178 = vunpack.c.l.b16 %v338
        %v1179 = vunpack.c.l.b16 %v339
        %v1180 = vunpack.c.l.b16 %v340
        %v1181 = vunpack.c.l.b16 %v341
        %v1182 = vunpack.c.l.b16 %v342
        %v1183 = vunpack.c.l.b16 %v343
        %v1184 = vunpack.c.l.b16 %v344
        %v1185 = vunpack.c.l.b16 %v345
        %v1186 = vunpack.c.l.b16 %v346
        %v1187 = vunpack.c.l.b16 %v347
        %v1188 = vunpack.c.l.b16 %v348
        %v1189 = vunpack.c.l.b16 %v349
        %v1190 = vunpack.c.l.b16 %v350
        %v1191 = vunpack.c.l.b16 %v351
        %v1192 = vunpack.c.l.b16 %v352
        %v1193 = vunpack.c.l.b16 %v353
        %v1194 = vunpack.c.l.b16 %v354
        %v1195 = vunpack.c.l.b16 %v355
        %v1196 = vunpack.c.l.b16 %v356
        %v1197 = vunpack.c.l.b16 %v357
        %v1198 = vunpack.c.l.b16 %v358
        %v1199 = vunpack.c.l.b16 %v359
        %v1200 = vunpack.c.l.b16 %v360
        %v1201 = vunpack.c.l.b16 %v361
        %v1202 = vunpack.c.l.b16 %v362
        %v1203 = vunpack.c.l.b16 %v363
        %v1204 = vunpack.c.l.b16 %v364
        %v1205 = vunpack.c.l.b16 %v365
        %v1206 = vunpack.c.l.b16 %v366
        %v1207 = vunpack.c.l.b16 %v367
        %v1208 = vunpack.c.l.b16 %v368
        %v1209 = vunpack.c.l.b16 %v369
        %v1210 = vunpack.c.l.b16 %v370
        %v1211 = vunpack.c.l.b16 %v371
        %v1212 = vunpack.c.l.b16 %v372
        %v1213 = vunpack.c.l.b16 %v373
        %v1214 = vunpack.c.l.b16 %v374
        %v1215 = vunpack.c.l.b16 %v375
        %v1216 = vunpack.c.l.b16 %v376
        %v1217 = vunpack.c.l.b16 %v377
        %v1218 = vunpack.c.l.b16 %v378
        %v1219 = vunpack.c.l.b16 %v379
        %v1220 = vunpack.c.l.b16 %v380
        %v1221 = vunpack.c.l.b16 %v381
        %v1222 = vunpack.c.l.b16 %v382
        %v1223 = vpack.c.b16 %v1160, %v1159
        %v1224 = vpack.c.b16 %v1162, %v1161
        %v1225 = vpack.c.b16 %v1164, %v1163
        %v1226 = vpack.c.b16 %v1166, %v1165
        %v1227 = vpack.c.b16 %v1168, %v1167
        %v1228 = vpack.c.b16 %v1170, %v1169
        %v1229 = vpack.c.b16 %v1172, %v1171
        %v1230 = vpack.c.b16 %v1174, %v1173
        %v1231 = vpack.c.b16 %v1176, %v1175
        %v1232 = vpack.c.b16 %v1178, %v1177
        %v1233 = vpack.c.b16 %v1180, %v1179
        %v1234 = vpack.c.b16 %v1182, %v1181
        %v1235 = vpack.c.b16 %v1184, %v1183
        %v1236 = vpack.c.b16 %v1186, %v1185
        %v1237 = vpack.c.b16 %v1188, %v1187
        %v1238 = vpack.c.b16 %v1190, %v1189
        %v1239 = vpack.c.b16 %v1192, %v1191
        %v1240 = vpack.c.b16 %v1194, %v1193
        %v1241 = vpack.c.b16 %v1196, %v1195
        %v1242 = vpack.c.b16 %v1198, %v1197
        %v1243 = vpack.c.b16 %v1200, %v1199
        %v1244 = vpack.c.b16 %v1202, %v1201
        %v1245 = vpack.c.b16 %v1204, %v1203
        %v1246 = vpack.c.b16 %v1206, %v1205
        %v1247 = vpack.c.b16 %v1208, %v1207
        %v1248 = vpack.c.b16 %v1210, %v1209
        %v1249 = vpack.c.b16 %v1212, %v1211
        %v1250 = vpack.c.b16 %v1214, %v1213
        %v1251 = vpack.c.b16 %v1216, %v1215
        %v1252 = vpack.c.b16 %v1218, %v1217
        %v1253 = vpack.c.b16 %v1220, %v1219
        %v1254 = vpack.c.b16 %v1222, %v1221
        %1287 = vmatprep.subr.bf16.mxu0 0
        %1288 = vmatpush1.bf16.msra.mxu0 %v1223
        %1289 = vmatprep.subr.bf16.mxu0 0
        %1290 = vmatpush1.bf16.msra.mxu0 %v1224
        %1291 = vmatprep.subr.bf16.mxu0 0
        %1292 = vmatpush1.bf16.msra.mxu0 %v1225
        %1293 = vmatprep.subr.bf16.mxu0 0
        %1294 = vmatpush1.bf16.msra.mxu0 %v1226
        %1295 = vmatprep.subr.bf16.mxu0 0
        %1296 = vmatpush1.bf16.msra.mxu0 %v1227
        %1297 = vmatprep.subr.bf16.mxu0 0
        %1298 = vmatpush1.bf16.msra.mxu0 %v1228
        %1299 = vmatprep.subr.bf16.mxu0 0
        %1300 = vmatpush1.bf16.msra.mxu0 %v1229
        %1301 = vmatprep.subr.bf16.mxu0 0
        %1302 = vmatpush1.bf16.msra.mxu0 %v1230
        %1303 = vmatprep.subr.bf16.mxu0 0
        %1304 = vmatpush1.bf16.msra.mxu0 %v1231
        %1305 = vmatprep.subr.bf16.mxu0 0
        %1306 = vmatpush1.bf16.msra.mxu0 %v1232
        %1307 = vmatprep.subr.bf16.mxu0 0
        %1308 = vmatpush1.bf16.msra.mxu0 %v1233
        %1309 = vmatprep.subr.bf16.mxu0 0
        %1310 = vmatpush1.bf16.msra.mxu0 %v1234
        %1311 = vmatprep.subr.bf16.mxu0 0
        %1312 = vmatpush1.bf16.msra.mxu0 %v1235
        %1313 = vmatprep.subr.bf16.mxu0 0
        %1314 = vmatpush1.bf16.msra.mxu0 %v1236
        %1315 = vmatprep.subr.bf16.mxu0 0
        %1316 = vmatpush1.bf16.msra.mxu0 %v1237
        %1317 = vmatprep.subr.bf16.mxu0 0
        %1318 = vmatpush1.bf16.msra.mxu0 %v1238
        %1319 = vmatprep.mubr.bf16.mxu0 %v517
        %1320 = vmatmul.mubr.bf16.gmra.mrb[0].mxu0 %v516
        %v1321 = vpop.f32.mrb[0].mxu0
        %v1322 = vadd.f32 %v1037, %v1321
        %v1323 = vpop.f32.mrb[0].mxu0
        %v1324 = vpop.f32.mrb[0].mxu0
        %v1325 = vadd.f32 %v1040, %v1324
        %v1326 = vpop.f32.mrb[0].mxu0
        %1327 = vmatprep.mubr.bf16.mxu0 %v521
        %1328 = vmatmul.mubr.bf16.gmra.mrb[0].mxu0 %v520
        %v1329 = vpop.f32.mrb[0].mxu0
        %v1330 = vadd.f32 %v1045, %v1329
        %v1331 = vpop.f32.mrb[0].mxu0
        %v1332 = vpop.f32.mrb[0].mxu0
        %v1333 = vadd.f32 %v1048, %v1332
        %v1334 = vpop.f32.mrb[0].mxu0
        %1335 = vmatprep.mubr.bf16.mxu0 %v525
        %1336 = vmatmul.mubr.bf16.gmra.mrb[0].mxu0 %v524
        %v1337 = vpop.f32.mrb[0].mxu0
        %v1338 = vadd.f32 %v1053, %v1337
        %v1339 = vpop.f32.mrb[0].mxu0
        %v1340 = vpop.f32.mrb[0].mxu0
        %v1341 = vadd.f32 %v1056, %v1340
        %v1342 = vpop.f32.mrb[0].mxu0
        %1343 = vmatprep.mubr.bf16.mxu0 %v529
        %1344 = vmatmul.mubr.bf16.gmra.mrb[0].mxu0 %v528
        %v1345 = vpop.f32.mrb[0].mxu0
        %v1346 = vadd.f32 %v1061, %v1345
        %v1347 = vpop.f32.mrb[0].mxu0
        %v1348 = vpop.f32.mrb[0].mxu0
        %v1349 = vadd.f32 %v1064, %v1348
        %v1350 = vpop.f32.mrb[0].mxu0
        %1351 = vmatprep.mubr.bf16.mxu0 %v533
        %1352 = vmatmul.mubr.bf16.gmra.mrb[0].mxu0 %v532
        %v1353 = vpop.f32.mrb[0].mxu0
        %v1354 = vadd.f32 %v1069, %v1353
        %v1355 = vpop.f32.mrb[0].mxu0
        %v1356 = vpop.f32.mrb[0].mxu0
        %v1357 = vadd.f32 %v1072, %v1356
        %v1358 = vpop.f32.mrb[0].mxu0
        %1359 = vdwg.mxu0
        %1360 = vmatprep.subr.bf16.mxu0 0
        %1361 = vmatpush1.bf16.msra.mxu0 %v1239
        %1362 = vmatprep.subr.bf16.mxu0 0
        %1363 = vmatpush1.bf16.msra.mxu0 %v1240
        %1364 = vmatprep.subr.bf16.mxu0 0
        %1365 = vmatpush1.bf16.msra.mxu0 %v1241
        %1366 = vmatprep.subr.bf16.mxu0 0
        %1367 = vmatpush1.bf16.msra.mxu0 %v1242
        %1368 = vmatprep.subr.bf16.mxu0 0
        %1369 = vmatpush1.bf16.msra.mxu0 %v1243
        %1370 = vmatprep.subr.bf16.mxu0 0
        %1371 = vmatpush1.bf16.msra.mxu0 %v1244
        %1372 = vmatprep.subr.bf16.mxu0 0
        %1373 = vmatpush1.bf16.msra.mxu0 %v1245
        %1374 = vmatprep.subr.bf16.mxu0 0
        %1375 = vmatpush1.bf16.msra.mxu0 %v1246
        %1376 = vmatprep.subr.bf16.mxu0 0
        %1377 = vmatpush1.bf16.msra.mxu0 %v1247
        %1378 = vmatprep.subr.bf16.mxu0 0
        %1379 = vmatpush1.bf16.msra.mxu0 %v1248
        %1380 = vmatprep.subr.bf16.mxu0 0
        %1381 = vmatpush1.bf16.msra.mxu0 %v1249
        %1382 = vmatprep.subr.bf16.mxu0 0
        %1383 = vmatpush1.bf16.msra.mxu0 %v1250
        %1384 = vmatprep.subr.bf16.mxu0 0
        %1385 = vmatpush1.bf16.msra.mxu0 %v1251
        %1386 = vmatprep.subr.bf16.mxu0 0
        %1387 = vmatpush1.bf16.msra.mxu0 %v1252
        %1388 = vmatprep.subr.bf16.mxu0 0
        %1389 = vmatpush1.bf16.msra.mxu0 %v1253
        %1390 = vmatprep.subr.bf16.mxu0 0
        %1391 = vmatpush1.bf16.msra.mxu0 %v1254
        %1392 = vmatprep.mubr.bf16.mxu0 %v519
        %1393 = vmatmul.mubr.bf16.gmra.mrb[0].mxu0 %v518
        %v1394 = vpop.f32.mrb[0].mxu0
        %v1395 = vadd.f32 %v1322, %v1394
        %v1396 = vpop.f32.mrb[0].mxu0
        %v1397 = vpop.f32.mrb[0].mxu0
        %v1398 = vadd.f32 %v1325, %v1397
        %v1399 = vpop.f32.mrb[0].mxu0
        %1400 = vmatprep.mubr.bf16.mxu0 %v523
        %1401 = vmatmul.mubr.bf16.gmra.mrb[0].mxu0 %v522
        %v1402 = vpop.f32.mrb[0].mxu0
        %v1403 = vadd.f32 %v1330, %v1402
        %v1404 = vpop.f32.mrb[0].mxu0
        %v1405 = vpop.f32.mrb[0].mxu0
        %v1406 = vadd.f32 %v1333, %v1405
        %v1407 = vpop.f32.mrb[0].mxu0
        %1408 = vmatprep.mubr.bf16.mxu0 %v527
        %1409 = vmatmul.mubr.bf16.gmra.mrb[0].mxu0 %v526
        %v1410 = vpop.f32.mrb[0].mxu0
        %v1411 = vadd.f32 %v1338, %v1410
        %v1412 = vpop.f32.mrb[0].mxu0
        %v1413 = vpop.f32.mrb[0].mxu0
        %v1414 = vadd.f32 %v1341, %v1413
        %v1415 = vpop.f32.mrb[0].mxu0
        %1416 = vmatprep.mubr.bf16.mxu0 %v531
        %1417 = vmatmul.mubr.bf16.gmra.mrb[0].mxu0 %v530
        %v1418 = vpop.f32.mrb[0].mxu0
        %v1419 = vadd.f32 %v1346, %v1418
        %v1420 = vpop.f32.mrb[0].mxu0
        %v1421 = vpop.f32.mrb[0].mxu0
        %v1422 = vadd.f32 %v1349, %v1421
        %v1423 = vpop.f32.mrb[0].mxu0
        %1424 = vmatprep.mubr.bf16.mxu0 %v535
        %1425 = vmatmul.mubr.bf16.gmra.mrb[0].mxu0 %v534
        %v1426 = vpop.f32.mrb[0].mxu0
        %v1427 = vadd.f32 %v1354, %v1426
        %v1428 = vpop.f32.mrb[0].mxu0
        %v1429 = vpop.f32.mrb[0].mxu0
        %v1430 = vadd.f32 %v1357, %v1429
        %v1431 = vpop.f32.mrb[0].mxu0
        %1432 = vdwg.mxu0
        %v1433 = vld [vmem:[%s241] sm:$0xee]
        %v1434 = vld [vmem:[%s241 + $0x8] sm:$0xee]
        %s1435 = scalar_lea.vmem %s250, 512 [#allocation6]
        %v1436 = vld [vmem:[%s1435] sm:$0xf]
        %v1437 = vld [vmem:[%s1435 + $0x4] sm:$0xf]
        %v1438 = vld [vmem:[%s1435 + $0x8] sm:$0xf]
        %v1439 = vld [vmem:[%s1435 + $0xc] sm:$0xf]
        %v1440 = vld [vmem:[%s1435 + $0x10] sm:$0xf]
        %v1441 = vld [vmem:[%s1435 + $0x14] sm:$0xf]
        %v1442 = vld [vmem:[%s1435 + $0x18] sm:$0xf]
        %v1443 = vld [vmem:[%s1435 + $0x1c] sm:$0xf]
        %v1444 = vld [vmem:[%s1435 + $0x20] sm:$0xf]
        %v1445 = vld [vmem:[%s1435 + $0x24] sm:$0xf]
        %v1446 = vld [vmem:[%s1435 + $0x28] sm:$0xf]
        %v1447 = vld [vmem:[%s1435 + $0x2c] sm:$0xf]
        %v1448 = vld [vmem:[%s1435 + $0x30] sm:$0xf]
        %v1449 = vld [vmem:[%s1435 + $0x34] sm:$0xf]
        %v1450 = vld [vmem:[%s1435 + $0x38] sm:$0xf]
        %v1451 = vld [vmem:[%s1435 + $0x3c] sm:$0xf]
        %v1452 = vld [vmem:[%s1435 + $0x40] sm:$0xf]
        %v1453 = vld [vmem:[%s1435 + $0x44] sm:$0xf]
        %v1454 = vld [vmem:[%s1435 + $0x48] sm:$0xf]
        %v1455 = vld [vmem:[%s1435 + $0x4c] sm:$0xf]
        %v1456 = vld [vmem:[%s1435 + $0x50] sm:$0xf]
        %v1457 = vld [vmem:[%s1435 + $0x54] sm:$0xf]
        %v1458 = vld [vmem:[%s1435 + $0x58] sm:$0xf]
        %v1459 = vld [vmem:[%s1435 + $0x5c] sm:$0xf]
        %v1460 = vld [vmem:[%s1435 + $0x60] sm:$0xf]
        %v1461 = vld [vmem:[%s1435 + $0x64] sm:$0xf]
        %v1462 = vld [vmem:[%s1435 + $0x68] sm:$0xf]
        %v1463 = vld [vmem:[%s1435 + $0x6c] sm:$0xf]
        %v1464 = vld [vmem:[%s1435 + $0x70] sm:$0xf]
        %v1465 = vld [vmem:[%s1435 + $0x74] sm:$0xf]
        %v1466 = vld [vmem:[%s1435 + $0x78] sm:$0xf]
        %v1467 = vld [vmem:[%s1435 + $0x7c] sm:$0xf]
        %v1468 = vld [vmem:[%s1435 + $0x80] sm:$0xf]
        %v1469 = vld [vmem:[%s1435 + $0x84] sm:$0xf]
        %v1470 = vld [vmem:[%s1435 + $0x88] sm:$0xf]
        %v1471 = vld [vmem:[%s1435 + $0x8c] sm:$0xf]
        %v1472 = vld [vmem:[%s1435 + $0x90] sm:$0xf]
        %v1473 = vld [vmem:[%s1435 + $0x94] sm:$0xf]
        %v1474 = vld [vmem:[%s1435 + $0x98] sm:$0xf]
        %v1475 = vld [vmem:[%s1435 + $0x9c] sm:$0xf]
        %v1476 = vld [vmem:[%s1435 + $0xa0] sm:$0xf]
        %v1477 = vld [vmem:[%s1435 + $0xa4] sm:$0xf]
        %v1478 = vld [vmem:[%s1435 + $0xa8] sm:$0xf]
        %v1479 = vld [vmem:[%s1435 + $0xac] sm:$0xf]
        %v1480 = vld [vmem:[%s1435 + $0xb0] sm:$0xf]
        %v1481 = vld [vmem:[%s1435 + $0xb4] sm:$0xf]
        %v1482 = vld [vmem:[%s1435 + $0xb8] sm:$0xf]
        %v1483 = vld [vmem:[%s1435 + $0xbc] sm:$0xf]
        %v1484 = vld [vmem:[%s1435 + $0xc0] sm:$0xf]
        %v1485 = vld [vmem:[%s1435 + $0xc4] sm:$0xf]
        %v1486 = vld [vmem:[%s1435 + $0xc8] sm:$0xf]
        %v1487 = vld [vmem:[%s1435 + $0xcc] sm:$0xf]
        %v1488 = vld [vmem:[%s1435 + $0xd0] sm:$0xf]
        %v1489 = vld [vmem:[%s1435 + $0xd4] sm:$0xf]
        %v1490 = vld [vmem:[%s1435 + $0xd8] sm:$0xf]
        %v1491 = vld [vmem:[%s1435 + $0xdc] sm:$0xf]
        %v1492 = vld [vmem:[%s1435 + $0xe0] sm:$0xf]
        %v1493 = vld [vmem:[%s1435 + $0xe4] sm:$0xf]
        %v1494 = vld [vmem:[%s1435 + $0xe8] sm:$0xf]
        %v1495 = vld [vmem:[%s1435 + $0xec] sm:$0xf]
        %v1496 = vld [vmem:[%s1435 + $0xf0] sm:$0xf]
        %v1497 = vld [vmem:[%s1435 + $0xf4] sm:$0xf]
        %v1498 = vld [vmem:[%s1435 + $0xf8] sm:$0xf]
        %v1499 = vld [vmem:[%s1435 + $0xfc] sm:$0xf]
        %v1502 = vunpack.c.l.b16 %v1433
        %v1503 = vunpack.c.h.b16 %v1433
        %v1504 = vunpack.c.l.b16 %v1434
        %v1505 = vunpack.c.h.b16 %v1434
        %v1506 = vpack.c.b16 %v476, %v1502
        %v1507 = vpack.c.b16 %v477, %v1503
        %v1508 = vpack.c.b16 %v478, %v1504
        %v1509 = vpack.c.b16 %v479, %v1505
        %vm1510 = vcmask 1046528
        %v1511 = vrot.slane %v1506, 1
        %v1512 = vrot.slane %v520, 1
        %v1513 = vsel %vm1510, %v1511, %v1512
        %v1514 = vrot.slane %v1507, 1
        %v1515 = vrot.slane %v521, 1
        %v1516 = vsel %vm1510, %v1514, %v1515
        %v1517 = vrot.slane %v1508, 1
        %v1518 = vrot.slane %v522, 1
        %v1519 = vsel %vm1510, %v1517, %v1518
        %v1520 = vrot.slane %v1509, 1
        %v1521 = vrot.slane %v523, 1
        %v1522 = vsel %vm1510, %v1520, %v1521
        %v1523 = vrot.slane %v524, 1
        %v1524 = vsel %vm1510, %v1512, %v1523
        %v1525 = vrot.slane %v525, 1
        %v1526 = vsel %vm1510, %v1515, %v1525
        %v1527 = vrot.slane %v526, 1
        %v1528 = vsel %vm1510, %v1518, %v1527
        %v1529 = vrot.slane %v527, 1
        %v1530 = vsel %vm1510, %v1521, %v1529
        %v1531 = vrot.slane %v528, 1
        %v1532 = vsel %vm1510, %v1523, %v1531
        %v1533 = vrot.slane %v529, 1
        %v1534 = vsel %vm1510, %v1525, %v1533
        %v1535 = vrot.slane %v530, 1
        %v1536 = vsel %vm1510, %v1527, %v1535
        %v1537 = vrot.slane %v531, 1
        %v1538 = vsel %vm1510, %v1529, %v1537
        %v1539 = vrot.slane %v532, 1
        %v1540 = vsel %vm1510, %v1531, %v1539
        %v1541 = vrot.slane %v533, 1
        %v1542 = vsel %vm1510, %v1533, %v1541
        %v1543 = vrot.slane %v534, 1
        %v1544 = vsel %vm1510, %v1535, %v1543
        %v1545 = vrot.slane %v535, 1
        %v1546 = vsel %vm1510, %v1537, %v1545
        %v1547 = vrot.slane %v536, 1
        %v1548 = vsel %vm1510, %v1539, %v1547
        %v1549 = vrot.slane %v537, 1
        %v1550 = vsel %vm1510, %v1541, %v1549
        %v1551 = vrot.slane %v538, 1
        %v1552 = vsel %vm1510, %v1543, %v1551
        %v1553 = vrot.slane %v539, 1
        %v1554 = vsel %vm1510, %v1545, %v1553
        %v1639 = vunpack.c.l.b16 %v1436
        %v1640 = vunpack.c.l.b16 %v1437
        %v1641 = vunpack.c.l.b16 %v1438
        %v1642 = vunpack.c.l.b16 %v1439
        %v1643 = vunpack.c.l.b16 %v1440
        %v1644 = vunpack.c.l.b16 %v1441
        %v1645 = vunpack.c.l.b16 %v1442
        %v1646 = vunpack.c.l.b16 %v1443
        %v1647 = vunpack.c.l.b16 %v1444
        %v1648 = vunpack.c.l.b16 %v1445
        %v1649 = vunpack.c.l.b16 %v1446
        %v1650 = vunpack.c.l.b16 %v1447
        %v1651 = vunpack.c.l.b16 %v1448
        %v1652 = vunpack.c.l.b16 %v1449
        %v1653 = vunpack.c.l.b16 %v1450
        %v1654 = vunpack.c.l.b16 %v1451
        %v1655 = vunpack.c.l.b16 %v1452
        %v1656 = vunpack.c.l.b16 %v1453
        %v1657 = vunpack.c.l.b16 %v1454
        %v1658 = vunpack.c.l.b16 %v1455
        %v1659 = vunpack.c.l.b16 %v1456
        %v1660 = vunpack.c.l.b16 %v1457
        %v1661 = vunpack.c.l.b16 %v1458
        %v1662 = vunpack.c.l.b16 %v1459
        %v1663 = vunpack.c.l.b16 %v1460
        %v1664 = vunpack.c.l.b16 %v1461
        %v1665 = vunpack.c.l.b16 %v1462
        %v1666 = vunpack.c.l.b16 %v1463
        %v1667 = vunpack.c.l.b16 %v1464
        %v1668 = vunpack.c.l.b16 %v1465
        %v1669 = vunpack.c.l.b16 %v1466
        %v1670 = vunpack.c.l.b16 %v1467
        %v1671 = vunpack.c.l.b16 %v1468
        %v1672 = vunpack.c.l.b16 %v1469
        %v1673 = vunpack.c.l.b16 %v1470
        %v1674 = vunpack.c.l.b16 %v1471
        %v1675 = vunpack.c.l.b16 %v1472
        %v1676 = vunpack.c.l.b16 %v1473
        %v1677 = vunpack.c.l.b16 %v1474
        %v1678 = vunpack.c.l.b16 %v1475
        %v1679 = vunpack.c.l.b16 %v1476
        %v1680 = vunpack.c.l.b16 %v1477
        %v1681 = vunpack.c.l.b16 %v1478
        %v1682 = vunpack.c.l.b16 %v1479
        %v1683 = vunpack.c.l.b16 %v1480
        %v1684 = vunpack.c.l.b16 %v1481
        %v1685 = vunpack.c.l.b16 %v1482
        %v1686 = vunpack.c.l.b16 %v1483
        %v1687 = vunpack.c.l.b16 %v1484
        %v1688 = vunpack.c.l.b16 %v1485
        %v1689 = vunpack.c.l.b16 %v1486
        %v1690 = vunpack.c.l.b16 %v1487
        %v1691 = vunpack.c.l.b16 %v1488
        %v1692 = vunpack.c.l.b16 %v1489
        %v1693 = vunpack.c.l.b16 %v1490
        %v1694 = vunpack.c.l.b16 %v1491
        %v1695 = vunpack.c.l.b16 %v1492
        %v1696 = vunpack.c.l.b16 %v1493
        %v1697 = vunpack.c.l.b16 %v1494
        %v1698 = vunpack.c.l.b16 %v1495
        %v1699 = vunpack.c.l.b16 %v1496
        %v1700 = vunpack.c.l.b16 %v1497
        %v1701 = vunpack.c.l.b16 %v1498
        %v1702 = vunpack.c.l.b16 %v1499
        %v1703 = vpack.c.b16 %v1640, %v1639
        %v1704 = vpack.c.b16 %v1642, %v1641
        %v1705 = vpack.c.b16 %v1644, %v1643
        %v1706 = vpack.c.b16 %v1646, %v1645
        %v1707 = vpack.c.b16 %v1648, %v1647
        %v1708 = vpack.c.b16 %v1650, %v1649
        %v1709 = vpack.c.b16 %v1652, %v1651
        %v1710 = vpack.c.b16 %v1654, %v1653
        %v1711 = vpack.c.b16 %v1656, %v1655
        %v1712 = vpack.c.b16 %v1658, %v1657
        %v1713 = vpack.c.b16 %v1660, %v1659
        %v1714 = vpack.c.b16 %v1662, %v1661
        %v1715 = vpack.c.b16 %v1664, %v1663
        %v1716 = vpack.c.b16 %v1666, %v1665
        %v1717 = vpack.c.b16 %v1668, %v1667
        %v1718 = vpack.c.b16 %v1670, %v1669
        %v1719 = vpack.c.b16 %v1672, %v1671
        %v1720 = vpack.c.b16 %v1674, %v1673
        %v1721 = vpack.c.b16 %v1676, %v1675
        %v1722 = vpack.c.b16 %v1678, %v1677
        %v1723 = vpack.c.b16 %v1680, %v1679
        %v1724 = vpack.c.b16 %v1682, %v1681
        %v1725 = vpack.c.b16 %v1684, %v1683
        %v1726 = vpack.c.b16 %v1686, %v1685
        %v1727 = vpack.c.b16 %v1688, %v1687
        %v1728 = vpack.c.b16 %v1690, %v1689
        %v1729 = vpack.c.b16 %v1692, %v1691
        %v1730 = vpack.c.b16 %v1694, %v1693
        %v1731 = vpack.c.b16 %v1696, %v1695
        %v1732 = vpack.c.b16 %v1698, %v1697
        %v1733 = vpack.c.b16 %v1700, %v1699
        %v1734 = vpack.c.b16 %v1702, %v1701
        %1767 = vmatprep.subr.bf16.mxu0 0
        %1768 = vmatpush1.bf16.msra.mxu0 %v1703
        %1769 = vmatprep.subr.bf16.mxu0 0
        %1770 = vmatpush1.bf16.msra.mxu0 %v1704
        %1771 = vmatprep.subr.bf16.mxu0 0
        %1772 = vmatpush1.bf16.msra.mxu0 %v1705
        %1773 = vmatprep.subr.bf16.mxu0 0
        %1774 = vmatpush1.bf16.msra.mxu0 %v1706
        %1775 = vmatprep.subr.bf16.mxu0 0
        %1776 = vmatpush1.bf16.msra.mxu0 %v1707
        %1777 = vmatprep.subr.bf16.mxu0 0
        %1778 = vmatpush1.bf16.msra.mxu0 %v1708
        %1779 = vmatprep.subr.bf16.mxu0 0
        %1780 = vmatpush1.bf16.msra.mxu0 %v1709
        %1781 = vmatprep.subr.bf16.mxu0 0
        %1782 = vmatpush1.bf16.msra.mxu0 %v1710
        %1783 = vmatprep.subr.bf16.mxu0 0
        %1784 = vmatpush1.bf16.msra.mxu0 %v1711
        %1785 = vmatprep.subr.bf16.mxu0 0
        %1786 = vmatpush1.bf16.msra.mxu0 %v1712
        %1787 = vmatprep.subr.bf16.mxu0 0
        %1788 = vmatpush1.bf16.msra.mxu0 %v1713
        %1789 = vmatprep.subr.bf16.mxu0 0
        %1790 = vmatpush1.bf16.msra.mxu0 %v1714
        %1791 = vmatprep.subr.bf16.mxu0 0
        %1792 = vmatpush1.bf16.msra.mxu0 %v1715
        %1793 = vmatprep.subr.bf16.mxu0 0
        %1794 = vmatpush1.bf16.msra.mxu0 %v1716
        %1795 = vmatprep.subr.bf16.mxu0 0
        %1796 = vmatpush1.bf16.msra.mxu0 %v1717
        %1797 = vmatprep.subr.bf16.mxu0 0
        %1798 = vmatpush1.bf16.msra.mxu0 %v1718
        %1799 = vmatprep.mubr.bf16.mxu0 %v1516
        %1800 = vmatmul.mubr.bf16.gmra.mrb[0].mxu0 %v1513
        %v1801 = vpop.f32.mrb[0].mxu0
        %v1802 = vadd.f32 0.0, %v1801
        %v1803 = vpop.f32.mrb[0].mxu0
        %v1804 = vpop.f32.mrb[0].mxu0
        %v1805 = vadd.f32 0.0, %v1804
        %v1806 = vpop.f32.mrb[0].mxu0
        %1807 = vmatprep.mubr.bf16.mxu0 %v1526
        %1808 = vmatmul.mubr.bf16.gmra.mrb[0].mxu0 %v1524
        %v1809 = vpop.f32.mrb[0].mxu0
        %v1810 = vadd.f32 0.0, %v1809
        %v1811 = vpop.f32.mrb[0].mxu0
        %v1812 = vpop.f32.mrb[0].mxu0
        %v1813 = vadd.f32 0.0, %v1812
        %v1814 = vpop.f32.mrb[0].mxu0
        %1815 = vmatprep.mubr.bf16.mxu0 %v1534
        %1816 = vmatmul.mubr.bf16.gmra.mrb[0].mxu0 %v1532
        %v1817 = vpop.f32.mrb[0].mxu0
        %v1818 = vadd.f32 0.0, %v1817
        %v1819 = vpop.f32.mrb[0].mxu0
        %v1820 = vpop.f32.mrb[0].mxu0
        %v1821 = vadd.f32 0.0, %v1820
        %v1822 = vpop.f32.mrb[0].mxu0
        %1823 = vmatprep.mubr.bf16.mxu0 %v1542
        %1824 = vmatmul.mubr.bf16.gmra.mrb[0].mxu0 %v1540
        %v1825 = vpop.f32.mrb[0].mxu0
        %v1826 = vadd.f32 0.0, %v1825
        %v1827 = vpop.f32.mrb[0].mxu0
        %v1828 = vpop.f32.mrb[0].mxu0
        %v1829 = vadd.f32 0.0, %v1828
        %v1830 = vpop.f32.mrb[0].mxu0
        %1831 = vmatprep.mubr.bf16.mxu0 %v1550
        %1832 = vmatmul.mubr.bf16.gmra.mrb[0].mxu0 %v1548
        %v1833 = vpop.f32.mrb[0].mxu0
        %v1834 = vadd.f32 0.0, %v1833
        %v1835 = vpop.f32.mrb[0].mxu0
        %v1836 = vpop.f32.mrb[0].mxu0
        %v1837 = vadd.f32 0.0, %v1836
        %v1838 = vpop.f32.mrb[0].mxu0
        %1839 = vdwg.mxu0
        %1840 = vmatprep.subr.bf16.mxu0 0
        %1841 = vmatpush1.bf16.msra.mxu0 %v1719
        %1842 = vmatprep.subr.bf16.mxu0 0
        %1843 = vmatpush1.bf16.msra.mxu0 %v1720
        %1844 = vmatprep.subr.bf16.mxu0 0
        %1845 = vmatpush1.bf16.msra.mxu0 %v1721
        %1846 = vmatprep.subr.bf16.mxu0 0
        %1847 = vmatpush1.bf16.msra.mxu0 %v1722
        %1848 = vmatprep.subr.bf16.mxu0 0
        %1849 = vmatpush1.bf16.msra.mxu0 %v1723
        %1850 = vmatprep.subr.bf16.mxu0 0
        %1851 = vmatpush1.bf16.msra.mxu0 %v1724
        %1852 = vmatprep.subr.bf16.mxu0 0
        %1853 = vmatpush1.bf16.msra.mxu0 %v1725
        %1854 = vmatprep.subr.bf16.mxu0 0
        %1855 = vmatpush1.bf16.msra.mxu0 %v1726
        %1856 = vmatprep.subr.bf16.mxu0 0
        %1857 = vmatpush1.bf16.msra.mxu0 %v1727
        %1858 = vmatprep.subr.bf16.mxu0 0
        %1859 = vmatpush1.bf16.msra.mxu0 %v1728
        %1860 = vmatprep.subr.bf16.mxu0 0
        %1861 = vmatpush1.bf16.msra.mxu0 %v1729
        %1862 = vmatprep.subr.bf16.mxu0 0
        %1863 = vmatpush1.bf16.msra.mxu0 %v1730
        %1864 = vmatprep.subr.bf16.mxu0 0
        %1865 = vmatpush1.bf16.msra.mxu0 %v1731
        %1866 = vmatprep.subr.bf16.mxu0 0
        %1867 = vmatpush1.bf16.msra.mxu0 %v1732
        %1868 = vmatprep.subr.bf16.mxu0 0
        %1869 = vmatpush1.bf16.msra.mxu0 %v1733
        %1870 = vmatprep.subr.bf16.mxu0 0
        %1871 = vmatpush1.bf16.msra.mxu0 %v1734
        %1872 = vmatprep.mubr.bf16.mxu0 %v1522
        %1873 = vmatmul.mubr.bf16.gmra.mrb[0].mxu0 %v1519
        %v1874 = vpop.f32.mrb[0].mxu0
        %v1875 = vadd.f32 %v1802, %v1874
        %v1876 = vpop.f32.mrb[0].mxu0
        %v1877 = vpop.f32.mrb[0].mxu0
        %v1878 = vadd.f32 %v1805, %v1877
        %v1879 = vpop.f32.mrb[0].mxu0
        %1880 = vmatprep.mubr.bf16.mxu0 %v1530
        %1881 = vmatmul.mubr.bf16.gmra.mrb[0].mxu0 %v1528
        %v1882 = vpop.f32.mrb[0].mxu0
        %v1883 = vadd.f32 %v1810, %v1882
        %v1884 = vpop.f32.mrb[0].mxu0
        %v1885 = vpop.f32.mrb[0].mxu0
        %v1886 = vadd.f32 %v1813, %v1885
        %v1887 = vpop.f32.mrb[0].mxu0
        %1888 = vmatprep.mubr.bf16.mxu0 %v1538
        %1889 = vmatmul.mubr.bf16.gmra.mrb[0].mxu0 %v1536
        %v1890 = vpop.f32.mrb[0].mxu0
        %v1891 = vadd.f32 %v1818, %v1890
        %v1892 = vpop.f32.mrb[0].mxu0
        %v1893 = vpop.f32.mrb[0].mxu0
        %v1894 = vadd.f32 %v1821, %v1893
        %v1895 = vpop.f32.mrb[0].mxu0
        %1896 = vmatprep.mubr.bf16.mxu0 %v1546
        %1897 = vmatmul.mubr.bf16.gmra.mrb[0].mxu0 %v1544
        %v1898 = vpop.f32.mrb[0].mxu0
        %v1899 = vadd.f32 %v1826, %v1898
        %v1900 = vpop.f32.mrb[0].mxu0
        %v1901 = vpop.f32.mrb[0].mxu0
        %v1902 = vadd.f32 %v1829, %v1901
        %v1903 = vpop.f32.mrb[0].mxu0
        %1904 = vmatprep.mubr.bf16.mxu0 %v1554
        %1905 = vmatmul.mubr.bf16.gmra.mrb[0].mxu0 %v1552
        %v1906 = vpop.f32.mrb[0].mxu0
        %v1907 = vadd.f32 %v1834, %v1906
        %v1908 = vpop.f32.mrb[0].mxu0
        %v1909 = vpop.f32.mrb[0].mxu0
        %v1910 = vadd.f32 %v1837, %v1909
        %v1911 = vpop.f32.mrb[0].mxu0
        %1912 = vdwg.mxu0
        %v1913 = vadd.f32 %v1395, %v1875
        %v1914 = vadd.f32 %v1398, %v1878
        %v1915 = vadd.f32 %v1403, %v1883
        %v1916 = vadd.f32 %v1406, %v1886
        %v1917 = vadd.f32 %v1411, %v1891
        %v1918 = vadd.f32 %v1414, %v1894
        %v1919 = vadd.f32 %v1419, %v1899
        %v1920 = vadd.f32 %v1422, %v1902
        %v1921 = vadd.f32 %v1427, %v1907
        %v1922 = vadd.f32 %v1430, %v1910
        %v1923 = vld [vmem:[%s241 + $0x10] sm:$0xee]
        %v1924 = vld [vmem:[%s241 + $0x18] sm:$0xee]
        %v1925 = vld [vmem:[%s241 + $0x20] sm:$0xff]
        %v1926 = vld [vmem:[%s241 + $0x28] sm:$0xff]
        %v1927 = vld [vmem:[%s241 + $0x30] sm:$0xff]
        %v1928 = vld [vmem:[%s241 + $0x38] sm:$0xff]
        %v1929 = vld [vmem:[%s241 + $0x40] sm:$0xff]
        %v1930 = vld [vmem:[%s241 + $0x48] sm:$0xff]
        %v1931 = vld [vmem:[%s241 + $0x50] sm:$0xff]
        %v1932 = vld [vmem:[%s241 + $0x58] sm:$0xff]
        %v1933 = vld [vmem:[%s241 + $0x60] sm:$0xff]
        %v1934 = vld [vmem:[%s241 + $0x68] sm:$0xff]
        %v1935 = vld [vmem:[%s241 + $0x70] sm:$0xff]
        %v1936 = vld [vmem:[%s241 + $0x78] sm:$0xff]
        %v1937 = vld [vmem:[%s241 + $0x80] sm:$0xff]
        %v1938 = vld [vmem:[%s241 + $0x88] sm:$0xff]
        %v1939 = vld [vmem:[%s241 + $0x90] sm:$0xff]
        %v1940 = vld [vmem:[%s241 + $0x98] sm:$0xff]
        %v1941 = vld [vmem:[%s241 + $0xa0] sm:$0xff]
        %v1942 = vld [vmem:[%s241 + $0xa8] sm:$0xff]
        %v1943 = vld [vmem:[%s241 + $0xb0] sm:$0x11]
        %v1944 = vld [vmem:[%s241 + $0xb8] sm:$0x11]
        %s1945 = scalar_lea.vmem %s250, 768 [#allocation6]
        %v1946 = vld [vmem:[%s1945] sm:$0xf]
        %v1947 = vld [vmem:[%s1945 + $0x4] sm:$0xf]
        %v1948 = vld [vmem:[%s1945 + $0x8] sm:$0xf]
        %v1949 = vld [vmem:[%s1945 + $0xc] sm:$0xf]
        %v1950 = vld [vmem:[%s1945 + $0x10] sm:$0xf]
        %v1951 = vld [vmem:[%s1945 + $0x14] sm:$0xf]
        %v1952 = vld [vmem:[%s1945 + $0x18] sm:$0xf]
        %v1953 = vld [vmem:[%s1945 + $0x1c] sm:$0xf]
        %v1954 = vld [vmem:[%s1945 + $0x20] sm:$0xf]
        %v1955 = vld [vmem:[%s1945 + $0x24] sm:$0xf]
        %v1956 = vld [vmem:[%s1945 + $0x28] sm:$0xf]
        %v1957 = vld [vmem:[%s1945 + $0x2c] sm:$0xf]
        %v1958 = vld [vmem:[%s1945 + $0x30] sm:$0xf]
        %v1959 = vld [vmem:[%s1945 + $0x34] sm:$0xf]
        %v1960 = vld [vmem:[%s1945 + $0x38] sm:$0xf]
        %v1961 = vld [vmem:[%s1945 + $0x3c] sm:$0xf]
        %v1962 = vld [vmem:[%s1945 + $0x40] sm:$0xf]
        %v1963 = vld [vmem:[%s1945 + $0x44] sm:$0xf]
        %v1964 = vld [vmem:[%s1945 + $0x48] sm:$0xf]
        %v1965 = vld [vmem:[%s1945 + $0x4c] sm:$0xf]
        %v1966 = vld [vmem:[%s1945 + $0x50] sm:$0xf]
        %v1967 = vld [vmem:[%s1945 + $0x54] sm:$0xf]
        %v1968 = vld [vmem:[%s1945 + $0x58] sm:$0xf]
        %v1969 = vld [vmem:[%s1945 + $0x5c] sm:$0xf]
        %v1970 = vld [vmem:[%s1945 + $0x60] sm:$0xf]
        %v1971 = vld [vmem:[%s1945 + $0x64] sm:$0xf]
        %v1972 = vld [vmem:[%s1945 + $0x68] sm:$0xf]
        %v1973 = vld [vmem:[%s1945 + $0x6c] sm:$0xf]
        %v1974 = vld [vmem:[%s1945 + $0x70] sm:$0xf]
        %v1975 = vld [vmem:[%s1945 + $0x74] sm:$0xf]
        %v1976 = vld [vmem:[%s1945 + $0x78] sm:$0xf]
        %v1977 = vld [vmem:[%s1945 + $0x7c] sm:$0xf]
        %v1978 = vld [vmem:[%s1945 + $0x80] sm:$0xf]
        %v1979 = vld [vmem:[%s1945 + $0x84] sm:$0xf]
        %v1980 = vld [vmem:[%s1945 + $0x88] sm:$0xf]
        %v1981 = vld [vmem:[%s1945 + $0x8c] sm:$0xf]
        %v1982 = vld [vmem:[%s1945 + $0x90] sm:$0xf]
        %v1983 = vld [vmem:[%s1945 + $0x94] sm:$0xf]
        %v1984 = vld [vmem:[%s1945 + $0x98] sm:$0xf]
        %v1985 = vld [vmem:[%s1945 + $0x9c] sm:$0xf]
        %v1986 = vld [vmem:[%s1945 + $0xa0] sm:$0xf]
        %v1987 = vld [vmem:[%s1945 + $0xa4] sm:$0xf]
        %v1988 = vld [vmem:[%s1945 + $0xa8] sm:$0xf]
        %v1989 = vld [vmem:[%s1945 + $0xac] sm:$0xf]
        %v1990 = vld [vmem:[%s1945 + $0xb0] sm:$0xf]
        %v1991 = vld [vmem:[%s1945 + $0xb4] sm:$0xf]
        %v1992 = vld [vmem:[%s1945 + $0xb8] sm:$0xf]
        %v1993 = vld [vmem:[%s1945 + $0xbc] sm:$0xf]
        %v1994 = vld [vmem:[%s1945 + $0xc0] sm:$0xf]
        %v1995 = vld [vmem:[%s1945 + $0xc4] sm:$0xf]
        %v1996 = vld [vmem:[%s1945 + $0xc8] sm:$0xf]
        %v1997 = vld [vmem:[%s1945 + $0xcc] sm:$0xf]
        %v1998 = vld [vmem:[%s1945 + $0xd0] sm:$0xf]
        %v1999 = vld [vmem:[%s1945 + $0xd4] sm:$0xf]
        %v2000 = vld [vmem:[%s1945 + $0xd8] sm:$0xf]
        %v2001 = vld [vmem:[%s1945 + $0xdc] sm:$0xf]
        %v2002 = vld [vmem:[%s1945 + $0xe0] sm:$0xf]
        %v2003 = vld [vmem:[%s1945 + $0xe4] sm:$0xf]
        %v2004 = vld [vmem:[%s1945 + $0xe8] sm:$0xf]
        %v2005 = vld [vmem:[%s1945 + $0xec] sm:$0xf]
        %v2006 = vld [vmem:[%s1945 + $0xf0] sm:$0xf]
        %v2007 = vld [vmem:[%s1945 + $0xf4] sm:$0xf]
        %v2008 = vld [vmem:[%s1945 + $0xf8] sm:$0xf]
        %v2009 = vld [vmem:[%s1945 + $0xfc] sm:$0xf]
        %v2032 = vunpack.c.l.b16 %v1923
        %v2033 = vunpack.c.h.b16 %v1923
        %v2034 = vunpack.c.l.b16 %v1924
        %v2035 = vunpack.c.h.b16 %v1924
        %v2036 = vunpack.c.l.b16 %v1925
        %v2037 = vunpack.c.h.b16 %v1925
        %v2038 = vunpack.c.l.b16 %v1926
        %v2039 = vunpack.c.h.b16 %v1926
        %v2040 = vunpack.c.l.b16 %v1927
        %v2041 = vunpack.c.h.b16 %v1927
        %v2042 = vunpack.c.l.b16 %v1928
        %v2043 = vunpack.c.h.b16 %v1928
        %v2044 = vunpack.c.l.b16 %v1929
        %v2045 = vunpack.c.h.b16 %v1929
        %v2046 = vunpack.c.l.b16 %v1930
        %v2047 = vunpack.c.h.b16 %v1930
        %v2048 = vunpack.c.l.b16 %v1931
        %v2049 = vunpack.c.h.b16 %v1931
        %v2050 = vunpack.c.l.b16 %v1932
        %v2051 = vunpack.c.h.b16 %v1932
        %v2052 = vunpack.c.l.b16 %v1933
        %v2053 = vunpack.c.h.b16 %v1933
        %v2054 = vunpack.c.l.b16 %v1934
        %v2055 = vunpack.c.h.b16 %v1934
        %v2056 = vunpack.c.l.b16 %v1935
        %v2057 = vunpack.c.h.b16 %v1935
        %v2058 = vunpack.c.l.b16 %v1936
        %v2059 = vunpack.c.h.b16 %v1936
        %v2060 = vunpack.c.l.b16 %v1937
        %v2061 = vunpack.c.h.b16 %v1937
        %v2062 = vunpack.c.l.b16 %v1938
        %v2063 = vunpack.c.h.b16 %v1938
        %v2064 = vunpack.c.l.b16 %v1939
        %v2065 = vunpack.c.h.b16 %v1939
        %v2066 = vunpack.c.l.b16 %v1940
        %v2067 = vunpack.c.h.b16 %v1940
        %v2068 = vunpack.c.l.b16 %v1941
        %v2069 = vunpack.c.h.b16 %v1941
        %v2070 = vunpack.c.l.b16 %v1942
        %v2071 = vunpack.c.h.b16 %v1942
        %v2072 = vunpack.c.l.b16 %v1943
        %v2073 = vunpack.c.h.b16 %v1943
        %v2074 = vunpack.c.l.b16 %v1944
        %v2075 = vunpack.c.h.b16 %v1944
        %v2076 = vpack.c.b16 %v2036, %v2032
        %v2077 = vpack.c.b16 %v2037, %v2033
        %v2078 = vpack.c.b16 %v2038, %v2034
        %v2079 = vpack.c.b16 %v2039, %v2035
        %v2080 = vpack.c.b16 %v2044, %v2040
        %v2081 = vpack.c.b16 %v2045, %v2041
        %v2082 = vpack.c.b16 %v2046, %v2042
        %v2083 = vpack.c.b16 %v2047, %v2043
        %v2084 = vpack.c.b16 %v2052, %v2048
        %v2085 = vpack.c.b16 %v2053, %v2049
        %v2086 = vpack.c.b16 %v2054, %v2050
        %v2087 = vpack.c.b16 %v2055, %v2051
        %v2088 = vpack.c.b16 %v2060, %v2056
        %v2089 = vpack.c.b16 %v2061, %v2057
        %v2090 = vpack.c.b16 %v2062, %v2058
        %v2091 = vpack.c.b16 %v2063, %v2059
        %v2092 = vpack.c.b16 %v2068, %v2064
        %v2093 = vpack.c.b16 %v2069, %v2065
        %v2094 = vpack.c.b16 %v2070, %v2066
        %v2095 = vpack.c.b16 %v2071, %v2067
        %v2096 = vpack.c.b16 %v2072, %v2072
        %v2097 = vpack.c.b16 %v2073, %v2073
        %v2098 = vpack.c.b16 %v2074, %v2074
        %v2099 = vpack.c.b16 %v2075, %v2075
        %v2100 = vrot.slane %v2076, 1
        %v2101 = vrot.slane %v2080, 1
        %v2102 = vsel %vm1510, %v2100, %v2101
        %v2103 = vrot.slane %v2077, 1
        %v2104 = vrot.slane %v2081, 1
        %v2105 = vsel %vm1510, %v2103, %v2104
        %v2106 = vrot.slane %v2078, 1
        %v2107 = vrot.slane %v2082, 1
        %v2108 = vsel %vm1510, %v2106, %v2107
        %v2109 = vrot.slane %v2079, 1
        %v2110 = vrot.slane %v2083, 1
        %v2111 = vsel %vm1510, %v2109, %v2110
        %v2112 = vrot.slane %v2084, 1
        %v2113 = vsel %vm1510, %v2101, %v2112
        %v2114 = vrot.slane %v2085, 1
        %v2115 = vsel %vm1510, %v2104, %v2114
        %v2116 = vrot.slane %v2086, 1
        %v2117 = vsel %vm1510, %v2107, %v2116
        %v2118 = vrot.slane %v2087, 1
        %v2119 = vsel %vm1510, %v2110, %v2118
        %v2120 = vrot.slane %v2088, 1
        %v2121 = vsel %vm1510, %v2112, %v2120
        %v2122 = vrot.slane %v2089, 1
        %v2123 = vsel %vm1510, %v2114, %v2122
        %v2124 = vrot.slane %v2090, 1
        %v2125 = vsel %vm1510, %v2116, %v2124
        %v2126 = vrot.slane %v2091, 1
        %v2127 = vsel %vm1510, %v2118, %v2126
        %v2128 = vrot.slane %v2092, 1
        %v2129 = vsel %vm1510, %v2120, %v2128
        %v2130 = vrot.slane %v2093, 1
        %v2131 = vsel %vm1510, %v2122, %v2130
        %v2132 = vrot.slane %v2094, 1
        %v2133 = vsel %vm1510, %v2124, %v2132
        %v2134 = vrot.slane %v2095, 1
        %v2135 = vsel %vm1510, %v2126, %v2134
        %v2136 = vrot.slane %v2096, 1
        %v2137 = vsel %vm1510, %v2128, %v2136
        %v2138 = vrot.slane %v2097, 1
        %v2139 = vsel %vm1510, %v2130, %v2138
        %v2140 = vrot.slane %v2098, 1
        %v2141 = vsel %vm1510, %v2132, %v2140
        %v2142 = vrot.slane %v2099, 1
        %v2143 = vsel %vm1510, %v2134, %v2142
        %v2228 = vunpack.c.l.b16 %v1946
        %v2229 = vunpack.c.l.b16 %v1947
        %v2230 = vunpack.c.l.b16 %v1948
        %v2231 = vunpack.c.l.b16 %v1949
        %v2232 = vunpack.c.l.b16 %v1950
        %v2233 = vunpack.c.l.b16 %v1951
        %v2234 = vunpack.c.l.b16 %v1952
        %v2235 = vunpack.c.l.b16 %v1953
        %v2236 = vunpack.c.l.b16 %v1954
        %v2237 = vunpack.c.l.b16 %v1955
        %v2238 = vunpack.c.l.b16 %v1956
        %v2239 = vunpack.c.l.b16 %v1957
        %v2240 = vunpack.c.l.b16 %v1958
        %v2241 = vunpack.c.l.b16 %v1959
        %v2242 = vunpack.c.l.b16 %v1960
        %v2243 = vunpack.c.l.b16 %v1961
        %v2244 = vunpack.c.l.b16 %v1962
        %v2245 = vunpack.c.l.b16 %v1963
        %v2246 = vunpack.c.l.b16 %v1964
        %v2247 = vunpack.c.l.b16 %v1965
        %v2248 = vunpack.c.l.b16 %v1966
        %v2249 = vunpack.c.l.b16 %v1967
        %v2250 = vunpack.c.l.b16 %v1968
        %v2251 = vunpack.c.l.b16 %v1969
        %v2252 = vunpack.c.l.b16 %v1970
        %v2253 = vunpack.c.l.b16 %v1971
        %v2254 = vunpack.c.l.b16 %v1972
        %v2255 = vunpack.c.l.b16 %v1973
        %v2256 = vunpack.c.l.b16 %v1974
        %v2257 = vunpack.c.l.b16 %v1975
        %v2258 = vunpack.c.l.b16 %v1976
        %v2259 = vunpack.c.l.b16 %v1977
        %v2260 = vunpack.c.l.b16 %v1978
        %v2261 = vunpack.c.l.b16 %v1979
        %v2262 = vunpack.c.l.b16 %v1980
        %v2263 = vunpack.c.l.b16 %v1981
        %v2264 = vunpack.c.l.b16 %v1982
        %v2265 = vunpack.c.l.b16 %v1983
        %v2266 = vunpack.c.l.b16 %v1984
        %v2267 = vunpack.c.l.b16 %v1985
        %v2268 = vunpack.c.l.b16 %v1986
        %v2269 = vunpack.c.l.b16 %v1987
        %v2270 = vunpack.c.l.b16 %v1988
        %v2271 = vunpack.c.l.b16 %v1989
        %v2272 = vunpack.c.l.b16 %v1990
        %v2273 = vunpack.c.l.b16 %v1991
        %v2274 = vunpack.c.l.b16 %v1992
        %v2275 = vunpack.c.l.b16 %v1993
        %v2276 = vunpack.c.l.b16 %v1994
        %v2277 = vunpack.c.l.b16 %v1995
        %v2278 = vunpack.c.l.b16 %v1996
        %v2279 = vunpack.c.l.b16 %v1997
        %v2280 = vunpack.c.l.b16 %v1998
        %v2281 = vunpack.c.l.b16 %v1999
        %v2282 = vunpack.c.l.b16 %v2000
        %v2283 = vunpack.c.l.b16 %v2001
        %v2284 = vunpack.c.l.b16 %v2002
        %v2285 = vunpack.c.l.b16 %v2003
        %v2286 = vunpack.c.l.b16 %v2004
        %v2287 = vunpack.c.l.b16 %v2005
        %v2288 = vunpack.c.l.b16 %v2006
        %v2289 = vunpack.c.l.b16 %v2007
        %v2290 = vunpack.c.l.b16 %v2008
        %v2291 = vunpack.c.l.b16 %v2009
        %v2292 = vpack.c.b16 %v2229, %v2228
        %v2293 = vpack.c.b16 %v2231, %v2230
        %v2294 = vpack.c.b16 %v2233, %v2232
        %v2295 = vpack.c.b16 %v2235, %v2234
        %v2296 = vpack.c.b16 %v2237, %v2236
        %v2297 = vpack.c.b16 %v2239, %v2238
        %v2298 = vpack.c.b16 %v2241, %v2240
        %v2299 = vpack.c.b16 %v2243, %v2242
        %v2300 = vpack.c.b16 %v2245, %v2244
        %v2301 = vpack.c.b16 %v2247, %v2246
        %v2302 = vpack.c.b16 %v2249, %v2248
        %v2303 = vpack.c.b16 %v2251, %v2250
        %v2304 = vpack.c.b16 %v2253, %v2252
        %v2305 = vpack.c.b16 %v2255, %v2254
        %v2306 = vpack.c.b16 %v2257, %v2256
        %v2307 = vpack.c.b16 %v2259, %v2258
        %v2308 = vpack.c.b16 %v2261, %v2260
        %v2309 = vpack.c.b16 %v2263, %v2262
        %v2310 = vpack.c.b16 %v2265, %v2264
        %v2311 = vpack.c.b16 %v2267, %v2266
        %v2312 = vpack.c.b16 %v2269, %v2268
        %v2313 = vpack.c.b16 %v2271, %v2270
        %v2314 = vpack.c.b16 %v2273, %v2272
        %v2315 = vpack.c.b16 %v2275, %v2274
        %v2316 = vpack.c.b16 %v2277, %v2276
        %v2317 = vpack.c.b16 %v2279, %v2278
        %v2318 = vpack.c.b16 %v2281, %v2280
        %v2319 = vpack.c.b16 %v2283, %v2282
        %v2320 = vpack.c.b16 %v2285, %v2284
        %v2321 = vpack.c.b16 %v2287, %v2286
        %v2322 = vpack.c.b16 %v2289, %v2288
        %v2323 = vpack.c.b16 %v2291, %v2290
        %2356 = vmatprep.subr.bf16.mxu0 0
        %2357 = vmatpush1.bf16.msra.mxu0 %v2292
        %2358 = vmatprep.subr.bf16.mxu0 0
        %2359 = vmatpush1.bf16.msra.mxu0 %v2293
        %2360 = vmatprep.subr.bf16.mxu0 0
        %2361 = vmatpush1.bf16.msra.mxu0 %v2294
        %2362 = vmatprep.subr.bf16.mxu0 0
        %2363 = vmatpush1.bf16.msra.mxu0 %v2295
        %2364 = vmatprep.subr.bf16.mxu0 0
        %2365 = vmatpush1.bf16.msra.mxu0 %v2296
        %2366 = vmatprep.subr.bf16.mxu0 0
        %2367 = vmatpush1.bf16.msra.mxu0 %v2297
        %2368 = vmatprep.subr.bf16.mxu0 0
        %2369 = vmatpush1.bf16.msra.mxu0 %v2298
        %2370 = vmatprep.subr.bf16.mxu0 0
        %2371 = vmatpush1.bf16.msra.mxu0 %v2299
        %2372 = vmatprep.subr.bf16.mxu0 0
        %2373 = vmatpush1.bf16.msra.mxu0 %v2300
        %2374 = vmatprep.subr.bf16.mxu0 0
        %2375 = vmatpush1.bf16.msra.mxu0 %v2301
        %2376 = vmatprep.subr.bf16.mxu0 0
        %2377 = vmatpush1.bf16.msra.mxu0 %v2302
        %2378 = vmatprep.subr.bf16.mxu0 0
        %2379 = vmatpush1.bf16.msra.mxu0 %v2303
        %2380 = vmatprep.subr.bf16.mxu0 0
        %2381 = vmatpush1.bf16.msra.mxu0 %v2304
        %2382 = vmatprep.subr.bf16.mxu0 0
        %2383 = vmatpush1.bf16.msra.mxu0 %v2305
        %2384 = vmatprep.subr.bf16.mxu0 0
        %2385 = vmatpush1.bf16.msra.mxu0 %v2306
        %2386 = vmatprep.subr.bf16.mxu0 0
        %2387 = vmatpush1.bf16.msra.mxu0 %v2307
        %2388 = vmatprep.mubr.bf16.mxu0 %v2105
        %2389 = vmatmul.mubr.bf16.gmra.mrb[0].mxu0 %v2102
        %v2390 = vpop.f32.mrb[0].mxu0
        %v2391 = vadd.f32 0.0, %v2390
        %v2392 = vpop.f32.mrb[0].mxu0
        %v2393 = vpop.f32.mrb[0].mxu0
        %v2394 = vadd.f32 0.0, %v2393
        %v2395 = vpop.f32.mrb[0].mxu0
        %2396 = vmatprep.mubr.bf16.mxu0 %v2115
        %2397 = vmatmul.mubr.bf16.gmra.mrb[0].mxu0 %v2113
        %v2398 = vpop.f32.mrb[0].mxu0
        %v2399 = vadd.f32 0.0, %v2398
        %v2400 = vpop.f32.mrb[0].mxu0
        %v2401 = vpop.f32.mrb[0].mxu0
        %v2402 = vadd.f32 0.0, %v2401
        %v2403 = vpop.f32.mrb[0].mxu0
        %2404 = vmatprep.mubr.bf16.mxu0 %v2123
        %2405 = vmatmul.mubr.bf16.gmra.mrb[0].mxu0 %v2121
        %v2406 = vpop.f32.mrb[0].mxu0
        %v2407 = vadd.f32 0.0, %v2406
        %v2408 = vpop.f32.mrb[0].mxu0
        %v2409 = vpop.f32.mrb[0].mxu0
        %v2410 = vadd.f32 0.0, %v2409
        %v2411 = vpop.f32.mrb[0].mxu0
        %2412 = vmatprep.mubr.bf16.mxu0 %v2131
        %2413 = vmatmul.mubr.bf16.gmra.mrb[0].mxu0 %v2129
        %v2414 = vpop.f32.mrb[0].mxu0
        %v2415 = vadd.f32 0.0, %v2414
        %v2416 = vpop.f32.mrb[0].mxu0
        %v2417 = vpop.f32.mrb[0].mxu0
        %v2418 = vadd.f32 0.0, %v2417
        %v2419 = vpop.f32.mrb[0].mxu0
        %2420 = vmatprep.mubr.bf16.mxu0 %v2139
        %2421 = vmatmul.mubr.bf16.gmra.mrb[0].mxu0 %v2137
        %v2422 = vpop.f32.mrb[0].mxu0
        %v2423 = vadd.f32 0.0, %v2422
        %v2424 = vpop.f32.mrb[0].mxu0
        %v2425 = vpop.f32.mrb[0].mxu0
        %v2426 = vadd.f32 0.0, %v2425
        %v2427 = vpop.f32.mrb[0].mxu0
        %2428 = vdwg.mxu0
        %2429 = vmatprep.subr.bf16.mxu0 0
        %2430 = vmatpush1.bf16.msra.mxu0 %v2308
        %2431 = vmatprep.subr.bf16.mxu0 0
        %2432 = vmatpush1.bf16.msra.mxu0 %v2309
        %2433 = vmatprep.subr.bf16.mxu0 0
        %2434 = vmatpush1.bf16.msra.mxu0 %v2310
        %2435 = vmatprep.subr.bf16.mxu0 0
        %2436 = vmatpush1.bf16.msra.mxu0 %v2311
        %2437 = vmatprep.subr.bf16.mxu0 0
        %2438 = vmatpush1.bf16.msra.mxu0 %v2312
        %2439 = vmatprep.subr.bf16.mxu0 0
        %2440 = vmatpush1.bf16.msra.mxu0 %v2313
        %2441 = vmatprep.subr.bf16.mxu0 0
        %2442 = vmatpush1.bf16.msra.mxu0 %v2314
        %2443 = vmatprep.subr.bf16.mxu0 0
        %2444 = vmatpush1.bf16.msra.mxu0 %v2315
        %2445 = vmatprep.subr.bf16.mxu0 0
        %2446 = vmatpush1.bf16.msra.mxu0 %v2316
        %2447 = vmatprep.subr.bf16.mxu0 0
        %2448 = vmatpush1.bf16.msra.mxu0 %v2317
        %2449 = vmatprep.subr.bf16.mxu0 0
        %2450 = vmatpush1.bf16.msra.mxu0 %v2318
        %2451 = vmatprep.subr.bf16.mxu0 0
        %2452 = vmatpush1.bf16.msra.mxu0 %v2319
        %2453 = vmatprep.subr.bf16.mxu0 0
        %2454 = vmatpush1.bf16.msra.mxu0 %v2320
        %2455 = vmatprep.subr.bf16.mxu0 0
        %2456 = vmatpush1.bf16.msra.mxu0 %v2321
        %2457 = vmatprep.subr.bf16.mxu0 0
        %2458 = vmatpush1.bf16.msra.mxu0 %v2322
        %2459 = vmatprep.subr.bf16.mxu0 0
        %2460 = vmatpush1.bf16.msra.mxu0 %v2323
        %2461 = vmatprep.mubr.bf16.mxu0 %v2111
        %2462 = vmatmul.mubr.bf16.gmra.mrb[0].mxu0 %v2108
        %v2463 = vpop.f32.mrb[0].mxu0
        %v2464 = vadd.f32 %v2391, %v2463
        %v2465 = vpop.f32.mrb[0].mxu0
        %v2466 = vpop.f32.mrb[0].mxu0
        %v2467 = vadd.f32 %v2394, %v2466
        %v2468 = vpop.f32.mrb[0].mxu0
        %2469 = vmatprep.mubr.bf16.mxu0 %v2119
        %2470 = vmatmul.mubr.bf16.gmra.mrb[0].mxu0 %v2117
        %v2471 = vpop.f32.mrb[0].mxu0
        %v2472 = vadd.f32 %v2399, %v2471
        %v2473 = vpop.f32.mrb[0].mxu0
        %v2474 = vpop.f32.mrb[0].mxu0
        %v2475 = vadd.f32 %v2402, %v2474
        %v2476 = vpop.f32.mrb[0].mxu0
        %2477 = vmatprep.mubr.bf16.mxu0 %v2127
        %2478 = vmatmul.mubr.bf16.gmra.mrb[0].mxu0 %v2125
        %v2479 = vpop.f32.mrb[0].mxu0
        %v2480 = vadd.f32 %v2407, %v2479
        %v2481 = vpop.f32.mrb[0].mxu0
        %v2482 = vpop.f32.mrb[0].mxu0
        %v2483 = vadd.f32 %v2410, %v2482
        %v2484 = vpop.f32.mrb[0].mxu0
        %2485 = vmatprep.mubr.bf16.mxu0 %v2135
        %2486 = vmatmul.mubr.bf16.gmra.mrb[0].mxu0 %v2133
        %v2487 = vpop.f32.mrb[0].mxu0
        %v2488 = vadd.f32 %v2415, %v2487
        %v2489 = vpop.f32.mrb[0].mxu0
        %v2490 = vpop.f32.mrb[0].mxu0
        %v2491 = vadd.f32 %v2418, %v2490
        %v2492 = vpop.f32.mrb[0].mxu0
        %2493 = vmatprep.mubr.bf16.mxu0 %v2143
        %2494 = vmatmul.mubr.bf16.gmra.mrb[0].mxu0 %v2141
        %v2495 = vpop.f32.mrb[0].mxu0
        %v2496 = vadd.f32 %v2423, %v2495
        %v2497 = vpop.f32.mrb[0].mxu0
        %v2498 = vpop.f32.mrb[0].mxu0
        %v2499 = vadd.f32 %v2426, %v2498
        %v2500 = vpop.f32.mrb[0].mxu0
        %2501 = vdwg.mxu0
        %v2502 = vadd.f32 %v1913, %v2464
        %v2503 = vadd.f32 %v1914, %v2467
        %v2504 = vadd.f32 %v1915, %v2472
        %v2505 = vadd.f32 %v1916, %v2475
        %v2506 = vadd.f32 %v1917, %v2480
        %v2507 = vadd.f32 %v1918, %v2483
        %v2508 = vadd.f32 %v1919, %v2488
        %v2509 = vadd.f32 %v1920, %v2491
        %v2510 = vadd.f32 %v1921, %v2496
        %v2511 = vadd.f32 %v1922, %v2499
        %v2512 = vld [vmem:[%s241 + $0xb0] sm:$0x33]
        %v2513 = vld [vmem:[%s241 + $0xb8] sm:$0x33]
        %s2514 = scalar_lea.vmem %s250, 1024 [#allocation6]
        %v2515 = vld [vmem:[%s2514] sm:$0xf]
        %v2516 = vld [vmem:[%s2514 + $0x4] sm:$0xf]
        %v2517 = vld [vmem:[%s2514 + $0x8] sm:$0xf]
        %v2518 = vld [vmem:[%s2514 + $0xc] sm:$0xf]
        %v2519 = vld [vmem:[%s2514 + $0x10] sm:$0xf]
        %v2520 = vld [vmem:[%s2514 + $0x14] sm:$0xf]
        %v2521 = vld [vmem:[%s2514 + $0x18] sm:$0xf]
        %v2522 = vld [vmem:[%s2514 + $0x1c] sm:$0xf]
        %v2523 = vld [vmem:[%s2514 + $0x20] sm:$0xf]
        %v2524 = vld [vmem:[%s2514 + $0x24] sm:$0xf]
        %v2525 = vld [vmem:[%s2514 + $0x28] sm:$0xf]
        %v2526 = vld [vmem:[%s2514 + $0x2c] sm:$0xf]
        %v2527 = vld [vmem:[%s2514 + $0x30] sm:$0xf]
        %v2528 = vld [vmem:[%s2514 + $0x34] sm:$0xf]
        %v2529 = vld [vmem:[%s2514 + $0x38] sm:$0xf]
        %v2530 = vld [vmem:[%s2514 + $0x3c] sm:$0xf]
        %v2531 = vld [vmem:[%s2514 + $0x40] sm:$0xf]
        %v2532 = vld [vmem:[%s2514 + $0x44] sm:$0xf]
        %v2533 = vld [vmem:[%s2514 + $0x48] sm:$0xf]
        %v2534 = vld [vmem:[%s2514 + $0x4c] sm:$0xf]
        %v2535 = vld [vmem:[%s2514 + $0x50] sm:$0xf]
        %v2536 = vld [vmem:[%s2514 + $0x54] sm:$0xf]
        %v2537 = vld [vmem:[%s2514 + $0x58] sm:$0xf]
        %v2538 = vld [vmem:[%s2514 + $0x5c] sm:$0xf]
        %v2539 = vld [vmem:[%s2514 + $0x60] sm:$0xf]
        %v2540 = vld [vmem:[%s2514 + $0x64] sm:$0xf]
        %v2541 = vld [vmem:[%s2514 + $0x68] sm:$0xf]
        %v2542 = vld [vmem:[%s2514 + $0x6c] sm:$0xf]
        %v2543 = vld [vmem:[%s2514 + $0x70] sm:$0xf]
        %v2544 = vld [vmem:[%s2514 + $0x74] sm:$0xf]
        %v2545 = vld [vmem:[%s2514 + $0x78] sm:$0xf]
        %v2546 = vld [vmem:[%s2514 + $0x7c] sm:$0xf]
        %v2547 = vld [vmem:[%s2514 + $0x80] sm:$0xf]
        %v2548 = vld [vmem:[%s2514 + $0x84] sm:$0xf]
        %v2549 = vld [vmem:[%s2514 + $0x88] sm:$0xf]
        %v2550 = vld [vmem:[%s2514 + $0x8c] sm:$0xf]
        %v2551 = vld [vmem:[%s2514 + $0x90] sm:$0xf]
        %v2552 = vld [vmem:[%s2514 + $0x94] sm:$0xf]
        %v2553 = vld [vmem:[%s2514 + $0x98] sm:$0xf]
        %v2554 = vld [vmem:[%s2514 + $0x9c] sm:$0xf]
        %v2555 = vld [vmem:[%s2514 + $0xa0] sm:$0xf]
        %v2556 = vld [vmem:[%s2514 + $0xa4] sm:$0xf]
        %v2557 = vld [vmem:[%s2514 + $0xa8] sm:$0xf]
        %v2558 = vld [vmem:[%s2514 + $0xac] sm:$0xf]
        %v2559 = vld [vmem:[%s2514 + $0xb0] sm:$0xf]
        %v2560 = vld [vmem:[%s2514 + $0xb4] sm:$0xf]
        %v2561 = vld [vmem:[%s2514 + $0xb8] sm:$0xf]
        %v2562 = vld [vmem:[%s2514 + $0xbc] sm:$0xf]
        %v2563 = vld [vmem:[%s2514 + $0xc0] sm:$0xf]
        %v2564 = vld [vmem:[%s2514 + $0xc4] sm:$0xf]
        %v2565 = vld [vmem:[%s2514 + $0xc8] sm:$0xf]
        %v2566 = vld [vmem:[%s2514 + $0xcc] sm:$0xf]
        %v2567 = vld [vmem:[%s2514 + $0xd0] sm:$0xf]
        %v2568 = vld [vmem:[%s2514 + $0xd4] sm:$0xf]
        %v2569 = vld [vmem:[%s2514 + $0xd8] sm:$0xf]
        %v2570 = vld [vmem:[%s2514 + $0xdc] sm:$0xf]
        %v2571 = vld [vmem:[%s2514 + $0xe0] sm:$0xf]
        %v2572 = vld [vmem:[%s2514 + $0xe4] sm:$0xf]
        %v2573 = vld [vmem:[%s2514 + $0xe8] sm:$0xf]
        %v2574 = vld [vmem:[%s2514 + $0xec] sm:$0xf]
        %v2575 = vld [vmem:[%s2514 + $0xf0] sm:$0xf]
        %v2576 = vld [vmem:[%s2514 + $0xf4] sm:$0xf]
        %v2577 = vld [vmem:[%s2514 + $0xf8] sm:$0xf]
        %v2578 = vld [vmem:[%s2514 + $0xfc] sm:$0xf]
        %v2581 = vunpack.c.l.b16 %v2512
        %v2582 = vunpack.c.h.b16 %v2512
        %v2583 = vunpack.c.l.b16 %v2513
        %v2584 = vunpack.c.h.b16 %v2513
        %v2585 = vpack.c.b16 %v2581, %v2581
        %v2586 = vpack.c.b16 %v2582, %v2582
        %v2587 = vpack.c.b16 %v2583, %v2583
        %v2588 = vpack.c.b16 %v2584, %v2584
        %vm2589 = vsmask.f32 6400
        %v2591 = vshrl.u32 %v2076, 16
        %v2593 = vrot.slane %v2591, 1
        %v2594 = vshll.u32 %v2076, 16
        %v2596 = vrot.slane %v2594, 2
        %v2597 = vor.u32 %v2593, %v2596
        %v2599 = vshrl.u32 %v2080, 16
        %v2601 = vrot.slane %v2599, 1
        %v2602 = vshll.u32 %v2080, 16
        %v2604 = vrot.slane %v2602, 2
        %v2605 = vor.u32 %v2601, %v2604
        %v2606 = vsel %vm2589, %v2597, %v2605
        %v2608 = vshrl.u32 %v2077, 16
        %v2610 = vrot.slane %v2608, 1
        %v2611 = vshll.u32 %v2077, 16
        %v2613 = vrot.slane %v2611, 2
        %v2614 = vor.u32 %v2610, %v2613
        %v2616 = vshrl.u32 %v2081, 16
        %v2618 = vrot.slane %v2616, 1
        %v2619 = vshll.u32 %v2081, 16
        %v2621 = vrot.slane %v2619, 2
        %v2622 = vor.u32 %v2618, %v2621
        %v2623 = vsel %vm2589, %v2614, %v2622
        %v2625 = vshrl.u32 %v2078, 16
        %v2627 = vrot.slane %v2625, 1
        %v2628 = vshll.u32 %v2078, 16
        %v2630 = vrot.slane %v2628, 2
        %v2631 = vor.u32 %v2627, %v2630
        %v2633 = vshrl.u32 %v2082, 16
        %v2635 = vrot.slane %v2633, 1
        %v2636 = vshll.u32 %v2082, 16
        %v2638 = vrot.slane %v2636, 2
        %v2639 = vor.u32 %v2635, %v2638
        %v2640 = vsel %vm2589, %v2631, %v2639
        %v2642 = vshrl.u32 %v2079, 16
        %v2644 = vrot.slane %v2642, 1
        %v2645 = vshll.u32 %v2079, 16
        %v2647 = vrot.slane %v2645, 2
        %v2648 = vor.u32 %v2644, %v2647
        %v2650 = vshrl.u32 %v2083, 16
        %v2652 = vrot.slane %v2650, 1
        %v2653 = vshll.u32 %v2083, 16
        %v2655 = vrot.slane %v2653, 2
        %v2656 = vor.u32 %v2652, %v2655
        %v2657 = vsel %vm2589, %v2648, %v2656
        %v2659 = vshrl.u32 %v2084, 16
        %v2661 = vrot.slane %v2659, 1
        %v2662 = vshll.u32 %v2084, 16
        %v2664 = vrot.slane %v2662, 2
        %v2665 = vor.u32 %v2661, %v2664
        %v2666 = vsel %vm2589, %v2605, %v2665
        %v2668 = vshrl.u32 %v2085, 16
        %v2670 = vrot.slane %v2668, 1
        %v2671 = vshll.u32 %v2085, 16
        %v2673 = vrot.slane %v2671, 2
        %v2674 = vor.u32 %v2670, %v2673
        %v2675 = vsel %vm2589, %v2622, %v2674
        %v2677 = vshrl.u32 %v2086, 16
        %v2679 = vrot.slane %v2677, 1
        %v2680 = vshll.u32 %v2086, 16
        %v2682 = vrot.slane %v2680, 2
        %v2683 = vor.u32 %v2679, %v2682
        %v2684 = vsel %vm2589, %v2639, %v2683
        %v2686 = vshrl.u32 %v2087, 16
        %v2688 = vrot.slane %v2686, 1
        %v2689 = vshll.u32 %v2087, 16
        %v2691 = vrot.slane %v2689, 2
        %v2692 = vor.u32 %v2688, %v2691
        %v2693 = vsel %vm2589, %v2656, %v2692
        %v2695 = vshrl.u32 %v2088, 16
        %v2697 = vrot.slane %v2695, 1
        %v2698 = vshll.u32 %v2088, 16
        %v2700 = vrot.slane %v2698, 2
        %v2701 = vor.u32 %v2697, %v2700
        %v2702 = vsel %vm2589, %v2665, %v2701
        %v2704 = vshrl.u32 %v2089, 16
        %v2706 = vrot.slane %v2704, 1
        %v2707 = vshll.u32 %v2089, 16
        %v2709 = vrot.slane %v2707, 2
        %v2710 = vor.u32 %v2706, %v2709
        %v2711 = vsel %vm2589, %v2674, %v2710
        %v2713 = vshrl.u32 %v2090, 16
        %v2715 = vrot.slane %v2713, 1
        %v2716 = vshll.u32 %v2090, 16
        %v2718 = vrot.slane %v2716, 2
        %v2719 = vor.u32 %v2715, %v2718
        %v2720 = vsel %vm2589, %v2683, %v2719
        %v2722 = vshrl.u32 %v2091, 16
        %v2724 = vrot.slane %v2722, 1
        %v2725 = vshll.u32 %v2091, 16
        %v2727 = vrot.slane %v2725, 2
        %v2728 = vor.u32 %v2724, %v2727
        %v2729 = vsel %vm2589, %v2692, %v2728
        %v2731 = vshrl.u32 %v2092, 16
        %v2733 = vrot.slane %v2731, 1
        %v2734 = vshll.u32 %v2092, 16
        %v2736 = vrot.slane %v2734, 2
        %v2737 = vor.u32 %v2733, %v2736
        %v2738 = vsel %vm2589, %v2701, %v2737
        %v2740 = vshrl.u32 %v2093, 16
        %v2742 = vrot.slane %v2740, 1
        %v2743 = vshll.u32 %v2093, 16
        %v2745 = vrot.slane %v2743, 2
        %v2746 = vor.u32 %v2742, %v2745
        %v2747 = vsel %vm2589, %v2710, %v2746
        %v2749 = vshrl.u32 %v2094, 16
        %v2751 = vrot.slane %v2749, 1
        %v2752 = vshll.u32 %v2094, 16
        %v2754 = vrot.slane %v2752, 2
        %v2755 = vor.u32 %v2751, %v2754
        %v2756 = vsel %vm2589, %v2719, %v2755
        %v2758 = vshrl.u32 %v2095, 16
        %v2760 = vrot.slane %v2758, 1
        %v2761 = vshll.u32 %v2095, 16
        %v2763 = vrot.slane %v2761, 2
        %v2764 = vor.u32 %v2760, %v2763
        %v2765 = vsel %vm2589, %v2728, %v2764
        %v2767 = vshrl.u32 %v2585, 16
        %v2769 = vrot.slane %v2767, 1
        %v2770 = vshll.u32 %v2585, 16
        %v2772 = vrot.slane %v2770, 2
        %v2773 = vor.u32 %v2769, %v2772
        %v2774 = vsel %vm2589, %v2737, %v2773
        %v2776 = vshrl.u32 %v2586, 16
        %v2778 = vrot.slane %v2776, 1
        %v2779 = vshll.u32 %v2586, 16
        %v2781 = vrot.slane %v2779, 2
        %v2782 = vor.u32 %v2778, %v2781
        %v2783 = vsel %vm2589, %v2746, %v2782
        %v2785 = vshrl.u32 %v2587, 16
        %v2787 = vrot.slane %v2785, 1
        %v2788 = vshll.u32 %v2587, 16
        %v2790 = vrot.slane %v2788, 2
        %v2791 = vor.u32 %v2787, %v2790
        %v2792 = vsel %vm2589, %v2755, %v2791
        %v2794 = vshrl.u32 %v2588, 16
        %v2796 = vrot.slane %v2794, 1
        %v2797 = vshll.u32 %v2588, 16
        %v2799 = vrot.slane %v2797, 2
        %v2800 = vor.u32 %v2796, %v2799
        %v2801 = vsel %vm2589, %v2764, %v2800
        %v2886 = vunpack.c.l.b16 %v2515
        %v2887 = vunpack.c.l.b16 %v2516
        %v2888 = vunpack.c.l.b16 %v2517
        %v2889 = vunpack.c.l.b16 %v2518
        %v2890 = vunpack.c.l.b16 %v2519
        %v2891 = vunpack.c.l.b16 %v2520
        %v2892 = vunpack.c.l.b16 %v2521
        %v2893 = vunpack.c.l.b16 %v2522
        %v2894 = vunpack.c.l.b16 %v2523
        %v2895 = vunpack.c.l.b16 %v2524
        %v2896 = vunpack.c.l.b16 %v2525
        %v2897 = vunpack.c.l.b16 %v2526
        %v2898 = vunpack.c.l.b16 %v2527
        %v2899 = vunpack.c.l.b16 %v2528
        %v2900 = vunpack.c.l.b16 %v2529
        %v2901 = vunpack.c.l.b16 %v2530
        %v2902 = vunpack.c.l.b16 %v2531
        %v2903 = vunpack.c.l.b16 %v2532
        %v2904 = vunpack.c.l.b16 %v2533
        %v2905 = vunpack.c.l.b16 %v2534
        %v2906 = vunpack.c.l.b16 %v2535
        %v2907 = vunpack.c.l.b16 %v2536
        %v2908 = vunpack.c.l.b16 %v2537
        %v2909 = vunpack.c.l.b16 %v2538
        %v2910 = vunpack.c.l.b16 %v2539
        %v2911 = vunpack.c.l.b16 %v2540
        %v2912 = vunpack.c.l.b16 %v2541
        %v2913 = vunpack.c.l.b16 %v2542
        %v2914 = vunpack.c.l.b16 %v2543
        %v2915 = vunpack.c.l.b16 %v2544
        %v2916 = vunpack.c.l.b16 %v2545
        %v2917 = vunpack.c.l.b16 %v2546
        %v2918 = vunpack.c.l.b16 %v2547
        %v2919 = vunpack.c.l.b16 %v2548
        %v2920 = vunpack.c.l.b16 %v2549
        %v2921 = vunpack.c.l.b16 %v2550
        %v2922 = vunpack.c.l.b16 %v2551
        %v2923 = vunpack.c.l.b16 %v2552
        %v2924 = vunpack.c.l.b16 %v2553
        %v2925 = vunpack.c.l.b16 %v2554
        %v2926 = vunpack.c.l.b16 %v2555
        %v2927 = vunpack.c.l.b16 %v2556
        %v2928 = vunpack.c.l.b16 %v2557
        %v2929 = vunpack.c.l.b16 %v2558
        %v2930 = vunpack.c.l.b16 %v2559
        %v2931 = vunpack.c.l.b16 %v2560
        %v2932 = vunpack.c.l.b16 %v2561
        %v2933 = vunpack.c.l.b16 %v2562
        %v2934 = vunpack.c.l.b16 %v2563
        %v2935 = vunpack.c.l.b16 %v2564
        %v2936 = vunpack.c.l.b16 %v2565
        %v2937 = vunpack.c.l.b16 %v2566
        %v2938 = vunpack.c.l.b16 %v2567
        %v2939 = vunpack.c.l.b16 %v2568
        %v2940 = vunpack.c.l.b16 %v2569
        %v2941 = vunpack.c.l.b16 %v2570
        %v2942 = vunpack.c.l.b16 %v2571
        %v2943 = vunpack.c.l.b16 %v2572
        %v2944 = vunpack.c.l.b16 %v2573
        %v2945 = vunpack.c.l.b16 %v2574
        %v2946 = vunpack.c.l.b16 %v2575
        %v2947 = vunpack.c.l.b16 %v2576
        %v2948 = vunpack.c.l.b16 %v2577
        %v2949 = vunpack.c.l.b16 %v2578
        %v2950 = vpack.c.b16 %v2887, %v2886
        %v2951 = vpack.c.b16 %v2889, %v2888
        %v2952 = vpack.c.b16 %v2891, %v2890
        %v2953 = vpack.c.b16 %v2893, %v2892
        %v2954 = vpack.c.b16 %v2895, %v2894
        %v2955 = vpack.c.b16 %v2897, %v2896
        %v2956 = vpack.c.b16 %v2899, %v2898
        %v2957 = vpack.c.b16 %v2901, %v2900
        %v2958 = vpack.c.b16 %v2903, %v2902
        %v2959 = vpack.c.b16 %v2905, %v2904
        %v2960 = vpack.c.b16 %v2907, %v2906
        %v2961 = vpack.c.b16 %v2909, %v2908
        %v2962 = vpack.c.b16 %v2911, %v2910
        %v2963 = vpack.c.b16 %v2913, %v2912
        %v2964 = vpack.c.b16 %v2915, %v2914
        %v2965 = vpack.c.b16 %v2917, %v2916
        %v2966 = vpack.c.b16 %v2919, %v2918
        %v2967 = vpack.c.b16 %v2921, %v2920
        %v2968 = vpack.c.b16 %v2923, %v2922
        %v2969 = vpack.c.b16 %v2925, %v2924
        %v2970 = vpack.c.b16 %v2927, %v2926
        %v2971 = vpack.c.b16 %v2929, %v2928
        %v2972 = vpack.c.b16 %v2931, %v2930
        %v2973 = vpack.c.b16 %v2933, %v2932
        %v2974 = vpack.c.b16 %v2935, %v2934
        %v2975 = vpack.c.b16 %v2937, %v2936
        %v2976 = vpack.c.b16 %v2939, %v2938
        %v2977 = vpack.c.b16 %v2941, %v2940
        %v2978 = vpack.c.b16 %v2943, %v2942
        %v2979 = vpack.c.b16 %v2945, %v2944
        %v2980 = vpack.c.b16 %v2947, %v2946
        %v2981 = vpack.c.b16 %v2949, %v2948
        %3014 = vmatprep.subr.bf16.mxu0 0
        %3015 = vmatpush1.bf16.msra.mxu0 %v2950
        %3016 = vmatprep.subr.bf16.mxu0 0
        %3017 = vmatpush1.bf16.msra.mxu0 %v2951
        %3018 = vmatprep.subr.bf16.mxu0 0
        %3019 = vmatpush1.bf16.msra.mxu0 %v2952
        %3020 = vmatprep.subr.bf16.mxu0 0
        %3021 = vmatpush1.bf16.msra.mxu0 %v2953
        %3022 = vmatprep.subr.bf16.mxu0 0
        %3023 = vmatpush1.bf16.msra.mxu0 %v2954
        %3024 = vmatprep.subr.bf16.mxu0 0
        %3025 = vmatpush1.bf16.msra.mxu0 %v2955
        %3026 = vmatprep.subr.bf16.mxu0 0
        %3027 = vmatpush1.bf16.msra.mxu0 %v2956
        %3028 = vmatprep.subr.bf16.mxu0 0
        %3029 = vmatpush1.bf16.msra.mxu0 %v2957
        %3030 = vmatprep.subr.bf16.mxu0 0
        %3031 = vmatpush1.bf16.msra.mxu0 %v2958
        %3032 = vmatprep.subr.bf16.mxu0 0
        %3033 = vmatpush1.bf16.msra.mxu0 %v2959
        %3034 = vmatprep.subr.bf16.mxu0 0
        %3035 = vmatpush1.bf16.msra.mxu0 %v2960
        %3036 = vmatprep.subr.bf16.mxu0 0
        %3037 = vmatpush1.bf16.msra.mxu0 %v2961
        %3038 = vmatprep.subr.bf16.mxu0 0
        %3039 = vmatpush1.bf16.msra.mxu0 %v2962
        %3040 = vmatprep.subr.bf16.mxu0 0
        %3041 = vmatpush1.bf16.msra.mxu0 %v2963
        %3042 = vmatprep.subr.bf16.mxu0 0
        %3043 = vmatpush1.bf16.msra.mxu0 %v2964
        %3044 = vmatprep.subr.bf16.mxu0 0
        %3045 = vmatpush1.bf16.msra.mxu0 %v2965
        %3046 = vmatprep.mubr.bf16.mxu0 %v2623
        %3047 = vmatmul.mubr.bf16.gmra.mrb[0].mxu0 %v2606
        %v3048 = vpop.f32.mrb[0].mxu0
        %v3049 = vadd.f32 0.0, %v3048
        %v3050 = vpop.f32.mrb[0].mxu0
        %v3051 = vpop.f32.mrb[0].mxu0
        %v3052 = vadd.f32 0.0, %v3051
        %v3053 = vpop.f32.mrb[0].mxu0
        %3054 = vmatprep.mubr.bf16.mxu0 %v2675
        %3055 = vmatmul.mubr.bf16.gmra.mrb[0].mxu0 %v2666
        %v3056 = vpop.f32.mrb[0].mxu0
        %v3057 = vadd.f32 0.0, %v3056
        %v3058 = vpop.f32.mrb[0].mxu0
        %v3059 = vpop.f32.mrb[0].mxu0
        %v3060 = vadd.f32 0.0, %v3059
        %v3061 = vpop.f32.mrb[0].mxu0
        %3062 = vmatprep.mubr.bf16.mxu0 %v2711
        %3063 = vmatmul.mubr.bf16.gmra.mrb[0].mxu0 %v2702
        %v3064 = vpop.f32.mrb[0].mxu0
        %v3065 = vadd.f32 0.0, %v3064
        %v3066 = vpop.f32.mrb[0].mxu0
        %v3067 = vpop.f32.mrb[0].mxu0
        %v3068 = vadd.f32 0.0, %v3067
        %v3069 = vpop.f32.mrb[0].mxu0
        %3070 = vmatprep.mubr.bf16.mxu0 %v2747
        %3071 = vmatmul.mubr.bf16.gmra.mrb[0].mxu0 %v2738
        %v3072 = vpop.f32.mrb[0].mxu0
        %v3073 = vadd.f32 0.0, %v3072
        %v3074 = vpop.f32.mrb[0].mxu0
        %v3075 = vpop.f32.mrb[0].mxu0
        %v3076 = vadd.f32 0.0, %v3075
        %v3077 = vpop.f32.mrb[0].mxu0
        %3078 = vmatprep.mubr.bf16.mxu0 %v2783
        %3079 = vmatmul.mubr.bf16.gmra.mrb[0].mxu0 %v2774
        %v3080 = vpop.f32.mrb[0].mxu0
        %v3081 = vadd.f32 0.0, %v3080
        %v3082 = vpop.f32.mrb[0].mxu0
        %v3083 = vpop.f32.mrb[0].mxu0
        %v3084 = vadd.f32 0.0, %v3083
        %v3085 = vpop.f32.mrb[0].mxu0
        %3086 = vdwg.mxu0
        %3087 = vmatprep.subr.bf16.mxu0 0
        %3088 = vmatpush1.bf16.msra.mxu0 %v2966
        %3089 = vmatprep.subr.bf16.mxu0 0
        %3090 = vmatpush1.bf16.msra.mxu0 %v2967
        %3091 = vmatprep.subr.bf16.mxu0 0
        %3092 = vmatpush1.bf16.msra.mxu0 %v2968
        %3093 = vmatprep.subr.bf16.mxu0 0
        %3094 = vmatpush1.bf16.msra.mxu0 %v2969
        %3095 = vmatprep.subr.bf16.mxu0 0
        %3096 = vmatpush1.bf16.msra.mxu0 %v2970
        %3097 = vmatprep.subr.bf16.mxu0 0
        %3098 = vmatpush1.bf16.msra.mxu0 %v2971
        %3099 = vmatprep.subr.bf16.mxu0 0
        %3100 = vmatpush1.bf16.msra.mxu0 %v2972
        %3101 = vmatprep.subr.bf16.mxu0 0
        %3102 = vmatpush1.bf16.msra.mxu0 %v2973
        %3103 = vmatprep.subr.bf16.mxu0 0
        %3104 = vmatpush1.bf16.msra.mxu0 %v2974
        %3105 = vmatprep.subr.bf16.mxu0 0
        %3106 = vmatpush1.bf16.msra.mxu0 %v2975
        %3107 = vmatprep.subr.bf16.mxu0 0
        %3108 = vmatpush1.bf16.msra.mxu0 %v2976
        %3109 = vmatprep.subr.bf16.mxu0 0
        %3110 = vmatpush1.bf16.msra.mxu0 %v2977
        %3111 = vmatprep.subr.bf16.mxu0 0
        %3112 = vmatpush1.bf16.msra.mxu0 %v2978
        %3113 = vmatprep.subr.bf16.mxu0 0
        %3114 = vmatpush1.bf16.msra.mxu0 %v2979
        %3115 = vmatprep.subr.bf16.mxu0 0
        %3116 = vmatpush1.bf16.msra.mxu0 %v2980
        %3117 = vmatprep.subr.bf16.mxu0 0
        %3118 = vmatpush1.bf16.msra.mxu0 %v2981
        %3119 = vmatprep.mubr.bf16.mxu0 %v2657
        %3120 = vmatmul.mubr.bf16.gmra.mrb[0].mxu0 %v2640
        %v3121 = vpop.f32.mrb[0].mxu0
        %v3122 = vadd.f32 %v3049, %v3121
        %v3123 = vpop.f32.mrb[0].mxu0
        %v3124 = vpop.f32.mrb[0].mxu0
        %v3125 = vadd.f32 %v3052, %v3124
        %v3126 = vpop.f32.mrb[0].mxu0
        %3127 = vmatprep.mubr.bf16.mxu0 %v2693
        %3128 = vmatmul.mubr.bf16.gmra.mrb[0].mxu0 %v2684
        %v3129 = vpop.f32.mrb[0].mxu0
        %v3130 = vadd.f32 %v3057, %v3129
        %v3131 = vpop.f32.mrb[0].mxu0
        %v3132 = vpop.f32.mrb[0].mxu0
        %v3133 = vadd.f32 %v3060, %v3132
        %v3134 = vpop.f32.mrb[0].mxu0
        %3135 = vmatprep.mubr.bf16.mxu0 %v2729
        %3136 = vmatmul.mubr.bf16.gmra.mrb[0].mxu0 %v2720
        %v3137 = vpop.f32.mrb[0].mxu0
        %v3138 = vadd.f32 %v3065, %v3137
        %v3139 = vpop.f32.mrb[0].mxu0
        %v3140 = vpop.f32.mrb[0].mxu0
        %v3141 = vadd.f32 %v3068, %v3140
        %v3142 = vpop.f32.mrb[0].mxu0
        %3143 = vmatprep.mubr.bf16.mxu0 %v2765
        %3144 = vmatmul.mubr.bf16.gmra.mrb[0].mxu0 %v2756
        %v3145 = vpop.f32.mrb[0].mxu0
        %v3146 = vadd.f32 %v3073, %v3145
        %v3147 = vpop.f32.mrb[0].mxu0
        %v3148 = vpop.f32.mrb[0].mxu0
        %v3149 = vadd.f32 %v3076, %v3148
        %v3150 = vpop.f32.mrb[0].mxu0
        %3151 = vmatprep.mubr.bf16.mxu0 %v2801
        %3152 = vmatmul.mubr.bf16.gmra.mrb[0].mxu0 %v2792
        %v3153 = vpop.f32.mrb[0].mxu0
        %v3154 = vadd.f32 %v3081, %v3153
        %v3155 = vpop.f32.mrb[0].mxu0
        %v3156 = vpop.f32.mrb[0].mxu0
        %v3157 = vadd.f32 %v3084, %v3156
        %v3158 = vpop.f32.mrb[0].mxu0
        %3159 = vdwg.mxu0
        %v3160 = vadd.f32 %v2502, %v3122
        %v3161 = vadd.f32 %v2503, %v3125
        %v3162 = vadd.f32 %v2504, %v3130
        %v3163 = vadd.f32 %v2505, %v3133
        %v3164 = vadd.f32 %v2506, %v3138
        %v3165 = vadd.f32 %v2507, %v3141
        %v3166 = vadd.f32 %v2508, %v3146
        %v3167 = vadd.f32 %v2509, %v3149
        %v3168 = vadd.f32 %v2510, %v3154
        %v3169 = vadd.f32 %v2511, %v3157
        %v3170 = vld [vmem:[%s241 + $0x10] sm:$0xcc]
        %v3171 = vld [vmem:[%s241 + $0x18] sm:$0xcc]
        %s3172 = scalar_lea.vmem %s250, 1280 [#allocation6]
        %v3173 = vld [vmem:[%s3172] sm:$0xf]
        %v3174 = vld [vmem:[%s3172 + $0x4] sm:$0xf]
        %v3175 = vld [vmem:[%s3172 + $0x8] sm:$0xf]
        %v3176 = vld [vmem:[%s3172 + $0xc] sm:$0xf]
        %v3177 = vld [vmem:[%s3172 + $0x10] sm:$0xf]
        %v3178 = vld [vmem:[%s3172 + $0x14] sm:$0xf]
        %v3179 = vld [vmem:[%s3172 + $0x18] sm:$0xf]
        %v3180 = vld [vmem:[%s3172 + $0x1c] sm:$0xf]
        %v3181 = vld [vmem:[%s3172 + $0x20] sm:$0xf]
        %v3182 = vld [vmem:[%s3172 + $0x24] sm:$0xf]
        %v3183 = vld [vmem:[%s3172 + $0x28] sm:$0xf]
        %v3184 = vld [vmem:[%s3172 + $0x2c] sm:$0xf]
        %v3185 = vld [vmem:[%s3172 + $0x30] sm:$0xf]
        %v3186 = vld [vmem:[%s3172 + $0x34] sm:$0xf]
        %v3187 = vld [vmem:[%s3172 + $0x38] sm:$0xf]
        %v3188 = vld [vmem:[%s3172 + $0x3c] sm:$0xf]
        %v3189 = vld [vmem:[%s3172 + $0x40] sm:$0xf]
        %v3190 = vld [vmem:[%s3172 + $0x44] sm:$0xf]
        %v3191 = vld [vmem:[%s3172 + $0x48] sm:$0xf]
        %v3192 = vld [vmem:[%s3172 + $0x4c] sm:$0xf]
        %v3193 = vld [vmem:[%s3172 + $0x50] sm:$0xf]
        %v3194 = vld [vmem:[%s3172 + $0x54] sm:$0xf]
        %v3195 = vld [vmem:[%s3172 + $0x58] sm:$0xf]
        %v3196 = vld [vmem:[%s3172 + $0x5c] sm:$0xf]
        %v3197 = vld [vmem:[%s3172 + $0x60] sm:$0xf]
        %v3198 = vld [vmem:[%s3172 + $0x64] sm:$0xf]
        %v3199 = vld [vmem:[%s3172 + $0x68] sm:$0xf]
        %v3200 = vld [vmem:[%s3172 + $0x6c] sm:$0xf]
        %v3201 = vld [vmem:[%s3172 + $0x70] sm:$0xf]
        %v3202 = vld [vmem:[%s3172 + $0x74] sm:$0xf]
        %v3203 = vld [vmem:[%s3172 + $0x78] sm:$0xf]
        %v3204 = vld [vmem:[%s3172 + $0x7c] sm:$0xf]
        %v3205 = vld [vmem:[%s3172 + $0x80] sm:$0xf]
        %v3206 = vld [vmem:[%s3172 + $0x84] sm:$0xf]
        %v3207 = vld [vmem:[%s3172 + $0x88] sm:$0xf]
        %v3208 = vld [vmem:[%s3172 + $0x8c] sm:$0xf]
        %v3209 = vld [vmem:[%s3172 + $0x90] sm:$0xf]
        %v3210 = vld [vmem:[%s3172 + $0x94] sm:$0xf]
        %v3211 = vld [vmem:[%s3172 + $0x98] sm:$0xf]
        %v3212 = vld [vmem:[%s3172 + $0x9c] sm:$0xf]
        %v3213 = vld [vmem:[%s3172 + $0xa0] sm:$0xf]
        %v3214 = vld [vmem:[%s3172 + $0xa4] sm:$0xf]
        %v3215 = vld [vmem:[%s3172 + $0xa8] sm:$0xf]
        %v3216 = vld [vmem:[%s3172 + $0xac] sm:$0xf]
        %v3217 = vld [vmem:[%s3172 + $0xb0] sm:$0xf]
        %v3218 = vld [vmem:[%s3172 + $0xb4] sm:$0xf]
        %v3219 = vld [vmem:[%s3172 + $0xb8] sm:$0xf]
        %v3220 = vld [vmem:[%s3172 + $0xbc] sm:$0xf]
        %v3221 = vld [vmem:[%s3172 + $0xc0] sm:$0xf]
        %v3222 = vld [vmem:[%s3172 + $0xc4] sm:$0xf]
        %v3223 = vld [vmem:[%s3172 + $0xc8] sm:$0xf]
        %v3224 = vld [vmem:[%s3172 + $0xcc] sm:$0xf]
        %v3225 = vld [vmem:[%s3172 + $0xd0] sm:$0xf]
        %v3226 = vld [vmem:[%s3172 + $0xd4] sm:$0xf]
        %v3227 = vld [vmem:[%s3172 + $0xd8] sm:$0xf]
        %v3228 = vld [vmem:[%s3172 + $0xdc] sm:$0xf]
        %v3229 = vld [vmem:[%s3172 + $0xe0] sm:$0xf]
        %v3230 = vld [vmem:[%s3172 + $0xe4] sm:$0xf]
        %v3231 = vld [vmem:[%s3172 + $0xe8] sm:$0xf]
        %v3232 = vld [vmem:[%s3172 + $0xec] sm:$0xf]
        %v3233 = vld [vmem:[%s3172 + $0xf0] sm:$0xf]
        %v3234 = vld [vmem:[%s3172 + $0xf4] sm:$0xf]
        %v3235 = vld [vmem:[%s3172 + $0xf8] sm:$0xf]
        %v3236 = vld [vmem:[%s3172 + $0xfc] sm:$0xf]
        %v3239 = vunpack.c.l.b16 %v3170
        %v3240 = vunpack.c.h.b16 %v3170
        %v3241 = vunpack.c.l.b16 %v3171
        %v3242 = vunpack.c.h.b16 %v3171
        %v3243 = vpack.c.b16 %v2036, %v3239
        %v3244 = vpack.c.b16 %v2037, %v3240
        %v3245 = vpack.c.b16 %v2038, %v3241
        %v3246 = vpack.c.b16 %v2039, %v3242
        %vm3247 = vcmask 1045504
        %v3248 = vrot.slane %v3243, 2
        %v3249 = vrot.slane %v2080, 2
        %v3250 = vsel %vm3247, %v3248, %v3249
        %v3251 = vrot.slane %v3244, 2
        %v3252 = vrot.slane %v2081, 2
        %v3253 = vsel %vm3247, %v3251, %v3252
        %v3254 = vrot.slane %v3245, 2
        %v3255 = vrot.slane %v2082, 2
        %v3256 = vsel %vm3247, %v3254, %v3255
        %v3257 = vrot.slane %v3246, 2
        %v3258 = vrot.slane %v2083, 2
        %v3259 = vsel %vm3247, %v3257, %v3258
        %v3260 = vrot.slane %v2084, 2
        %v3261 = vsel %vm3247, %v3249, %v3260
        %v3262 = vrot.slane %v2085, 2
        %v3263 = vsel %vm3247, %v3252, %v3262
        %v3264 = vrot.slane %v2086, 2
        %v3265 = vsel %vm3247, %v3255, %v3264
        %v3266 = vrot.slane %v2087, 2
        %v3267 = vsel %vm3247, %v3258, %v3266
        %v3268 = vrot.slane %v2088, 2
        %v3269 = vsel %vm3247, %v3260, %v3268
        %v3270 = vrot.slane %v2089, 2
        %v3271 = vsel %vm3247, %v3262, %v3270
        %v3272 = vrot.slane %v2090, 2
        %v3273 = vsel %vm3247, %v3264, %v3272
        %v3274 = vrot.slane %v2091, 2
        %v3275 = vsel %vm3247, %v3266, %v3274
        %v3276 = vrot.slane %v2092, 2
        %v3277 = vsel %vm3247, %v3268, %v3276
        %v3278 = vrot.slane %v2093, 2
        %v3279 = vsel %vm3247, %v3270, %v3278
        %v3280 = vrot.slane %v2094, 2
        %v3281 = vsel %vm3247, %v3272, %v3280
        %v3282 = vrot.slane %v2095, 2
        %v3283 = vsel %vm3247, %v3274, %v3282
        %v3284 = vrot.slane %v2585, 2
        %v3285 = vsel %vm3247, %v3276, %v3284
        %v3286 = vrot.slane %v2586, 2
        %v3287 = vsel %vm3247, %v3278, %v3286
        %v3288 = vrot.slane %v2587, 2
        %v3289 = vsel %vm3247, %v3280, %v3288
        %v3290 = vrot.slane %v2588, 2
        %v3291 = vsel %vm3247, %v3282, %v3290
        %v3376 = vunpack.c.l.b16 %v3173
        %v3377 = vunpack.c.l.b16 %v3174
        %v3378 = vunpack.c.l.b16 %v3175
        %v3379 = vunpack.c.l.b16 %v3176
        %v3380 = vunpack.c.l.b16 %v3177
        %v3381 = vunpack.c.l.b16 %v3178
        %v3382 = vunpack.c.l.b16 %v3179
        %v3383 = vunpack.c.l.b16 %v3180
        %v3384 = vunpack.c.l.b16 %v3181
        %v3385 = vunpack.c.l.b16 %v3182
        %v3386 = vunpack.c.l.b16 %v3183
        %v3387 = vunpack.c.l.b16 %v3184
        %v3388 = vunpack.c.l.b16 %v3185
        %v3389 = vunpack.c.l.b16 %v3186
        %v3390 = vunpack.c.l.b16 %v3187
        %v3391 = vunpack.c.l.b16 %v3188
        %v3392 = vunpack.c.l.b16 %v3189
        %v3393 = vunpack.c.l.b16 %v3190
        %v3394 = vunpack.c.l.b16 %v3191
        %v3395 = vunpack.c.l.b16 %v3192
        %v3396 = vunpack.c.l.b16 %v3193
        %v3397 = vunpack.c.l.b16 %v3194
        %v3398 = vunpack.c.l.b16 %v3195
        %v3399 = vunpack.c.l.b16 %v3196
        %v3400 = vunpack.c.l.b16 %v3197
        %v3401 = vunpack.c.l.b16 %v3198
        %v3402 = vunpack.c.l.b16 %v3199
        %v3403 = vunpack.c.l.b16 %v3200
        %v3404 = vunpack.c.l.b16 %v3201
        %v3405 = vunpack.c.l.b16 %v3202
        %v3406 = vunpack.c.l.b16 %v3203
        %v3407 = vunpack.c.l.b16 %v3204
        %v3408 = vunpack.c.l.b16 %v3205
        %v3409 = vunpack.c.l.b16 %v3206
        %v3410 = vunpack.c.l.b16 %v3207
        %v3411 = vunpack.c.l.b16 %v3208
        %v3412 = vunpack.c.l.b16 %v3209
        %v3413 = vunpack.c.l.b16 %v3210
        %v3414 = vunpack.c.l.b16 %v3211
        %v3415 = vunpack.c.l.b16 %v3212
        %v3416 = vunpack.c.l.b16 %v3213
        %v3417 = vunpack.c.l.b16 %v3214
        %v3418 = vunpack.c.l.b16 %v3215
        %v3419 = vunpack.c.l.b16 %v3216
        %v3420 = vunpack.c.l.b16 %v3217
        %v3421 = vunpack.c.l.b16 %v3218
        %v3422 = vunpack.c.l.b16 %v3219
        %v3423 = vunpack.c.l.b16 %v3220
        %v3424 = vunpack.c.l.b16 %v3221
        %v3425 = vunpack.c.l.b16 %v3222
        %v3426 = vunpack.c.l.b16 %v3223
        %v3427 = vunpack.c.l.b16 %v3224
        %v3428 = vunpack.c.l.b16 %v3225
        %v3429 = vunpack.c.l.b16 %v3226
        %v3430 = vunpack.c.l.b16 %v3227
        %v3431 = vunpack.c.l.b16 %v3228
        %v3432 = vunpack.c.l.b16 %v3229
        %v3433 = vunpack.c.l.b16 %v3230
        %v3434 = vunpack.c.l.b16 %v3231
        %v3435 = vunpack.c.l.b16 %v3232
        %v3436 = vunpack.c.l.b16 %v3233
        %v3437 = vunpack.c.l.b16 %v3234
        %v3438 = vunpack.c.l.b16 %v3235
        %v3439 = vunpack.c.l.b16 %v3236
        %v3440 = vpack.c.b16 %v3377, %v3376
        %v3441 = vpack.c.b16 %v3379, %v3378
        %v3442 = vpack.c.b16 %v3381, %v3380
        %v3443 = vpack.c.b16 %v3383, %v3382
        %v3444 = vpack.c.b16 %v3385, %v3384
        %v3445 = vpack.c.b16 %v3387, %v3386
        %v3446 = vpack.c.b16 %v3389, %v3388
        %v3447 = vpack.c.b16 %v3391, %v3390
        %v3448 = vpack.c.b16 %v3393, %v3392
        %v3449 = vpack.c.b16 %v3395, %v3394
        %v3450 = vpack.c.b16 %v3397, %v3396
        %v3451 = vpack.c.b16 %v3399, %v3398
        %v3452 = vpack.c.b16 %v3401, %v3400
        %v3453 = vpack.c.b16 %v3403, %v3402
        %v3454 = vpack.c.b16 %v3405, %v3404
        %v3455 = vpack.c.b16 %v3407, %v3406
        %v3456 = vpack.c.b16 %v3409, %v3408
        %v3457 = vpack.c.b16 %v3411, %v3410
        %v3458 = vpack.c.b16 %v3413, %v3412
        %v3459 = vpack.c.b16 %v3415, %v3414
        %v3460 = vpack.c.b16 %v3417, %v3416
        %v3461 = vpack.c.b16 %v3419, %v3418
        %v3462 = vpack.c.b16 %v3421, %v3420
        %v3463 = vpack.c.b16 %v3423, %v3422
        %v3464 = vpack.c.b16 %v3425, %v3424
        %v3465 = vpack.c.b16 %v3427, %v3426
        %v3466 = vpack.c.b16 %v3429, %v3428
        %v3467 = vpack.c.b16 %v3431, %v3430
        %v3468 = vpack.c.b16 %v3433, %v3432
        %v3469 = vpack.c.b16 %v3435, %v3434
        %v3470 = vpack.c.b16 %v3437, %v3436
        %v3471 = vpack.c.b16 %v3439, %v3438
        %3504 = vmatprep.subr.bf16.mxu0 0
        %3505 = vmatpush1.bf16.msra.mxu0 %v3440
        %3506 = vmatprep.subr.bf16.mxu0 0
        %3507 = vmatpush1.bf16.msra.mxu0 %v3441
        %3508 = vmatprep.subr.bf16.mxu0 0
        %3509 = vmatpush1.bf16.msra.mxu0 %v3442
        %3510 = vmatprep.subr.bf16.mxu0 0
        %3511 = vmatpush1.bf16.msra.mxu0 %v3443
        %3512 = vmatprep.subr.bf16.mxu0 0
        %3513 = vmatpush1.bf16.msra.mxu0 %v3444
        %3514 = vmatprep.subr.bf16.mxu0 0
        %3515 = vmatpush1.bf16.msra.mxu0 %v3445
        %3516 = vmatprep.subr.bf16.mxu0 0
        %3517 = vmatpush1.bf16.msra.mxu0 %v3446
        %3518 = vmatprep.subr.bf16.mxu0 0
        %3519 = vmatpush1.bf16.msra.mxu0 %v3447
        %3520 = vmatprep.subr.bf16.mxu0 0
        %3521 = vmatpush1.bf16.msra.mxu0 %v3448
        %3522 = vmatprep.subr.bf16.mxu0 0
        %3523 = vmatpush1.bf16.msra.mxu0 %v3449
        %3524 = vmatprep.subr.bf16.mxu0 0
        %3525 = vmatpush1.bf16.msra.mxu0 %v3450
        %3526 = vmatprep.subr.bf16.mxu0 0
        %3527 = vmatpush1.bf16.msra.mxu0 %v3451
        %3528 = vmatprep.subr.bf16.mxu0 0
        %3529 = vmatpush1.bf16.msra.mxu0 %v3452
        %3530 = vmatprep.subr.bf16.mxu0 0
        %3531 = vmatpush1.bf16.msra.mxu0 %v3453
        %3532 = vmatprep.subr.bf16.mxu0 0
        %3533 = vmatpush1.bf16.msra.mxu0 %v3454
        %3534 = vmatprep.subr.bf16.mxu0 0
        %3535 = vmatpush1.bf16.msra.mxu0 %v3455
        %3536 = vmatprep.mubr.bf16.mxu0 %v3253
        %3537 = vmatmul.mubr.bf16.gmra.mrb[0].mxu0 %v3250
        %v3538 = vpop.f32.mrb[0].mxu0
        %v3539 = vadd.f32 0.0, %v3538
        %v3540 = vpop.f32.mrb[0].mxu0
        %v3541 = vpop.f32.mrb[0].mxu0
        %v3542 = vadd.f32 0.0, %v3541
        %v3543 = vpop.f32.mrb[0].mxu0
        %3544 = vmatprep.mubr.bf16.mxu0 %v3263
        %3545 = vmatmul.mubr.bf16.gmra.mrb[0].mxu0 %v3261
        %v3546 = vpop.f32.mrb[0].mxu0
        %v3547 = vadd.f32 0.0, %v3546
        %v3548 = vpop.f32.mrb[0].mxu0
        %v3549 = vpop.f32.mrb[0].mxu0
        %v3550 = vadd.f32 0.0, %v3549
        %v3551 = vpop.f32.mrb[0].mxu0
        %3552 = vmatprep.mubr.bf16.mxu0 %v3271
        %3553 = vmatmul.mubr.bf16.gmra.mrb[0].mxu0 %v3269
        %v3554 = vpop.f32.mrb[0].mxu0
        %v3555 = vadd.f32 0.0, %v3554
        %v3556 = vpop.f32.mrb[0].mxu0
        %v3557 = vpop.f32.mrb[0].mxu0
        %v3558 = vadd.f32 0.0, %v3557
        %v3559 = vpop.f32.mrb[0].mxu0
        %3560 = vmatprep.mubr.bf16.mxu0 %v3279
        %3561 = vmatmul.mubr.bf16.gmra.mrb[0].mxu0 %v3277
        %v3562 = vpop.f32.mrb[0].mxu0
        %v3563 = vadd.f32 0.0, %v3562
        %v3564 = vpop.f32.mrb[0].mxu0
        %v3565 = vpop.f32.mrb[0].mxu0
        %v3566 = vadd.f32 0.0, %v3565
        %v3567 = vpop.f32.mrb[0].mxu0
        %3568 = vmatprep.mubr.bf16.mxu0 %v3287
        %3569 = vmatmul.mubr.bf16.gmra.mrb[0].mxu0 %v3285
        %v3570 = vpop.f32.mrb[0].mxu0
        %v3571 = vadd.f32 0.0, %v3570
        %v3572 = vpop.f32.mrb[0].mxu0
        %v3573 = vpop.f32.mrb[0].mxu0
        %v3574 = vadd.f32 0.0, %v3573
        %v3575 = vpop.f32.mrb[0].mxu0
        %3576 = vdwg.mxu0
        %3577 = vmatprep.subr.bf16.mxu0 0
        %3578 = vmatpush1.bf16.msra.mxu0 %v3456
        %3579 = vmatprep.subr.bf16.mxu0 0
        %3580 = vmatpush1.bf16.msra.mxu0 %v3457
        %3581 = vmatprep.subr.bf16.mxu0 0
        %3582 = vmatpush1.bf16.msra.mxu0 %v3458
        %3583 = vmatprep.subr.bf16.mxu0 0
        %3584 = vmatpush1.bf16.msra.mxu0 %v3459
        %3585 = vmatprep.subr.bf16.mxu0 0
        %3586 = vmatpush1.bf16.msra.mxu0 %v3460
        %3587 = vmatprep.subr.bf16.mxu0 0
        %3588 = vmatpush1.bf16.msra.mxu0 %v3461
        %3589 = vmatprep.subr.bf16.mxu0 0
        %3590 = vmatpush1.bf16.msra.mxu0 %v3462
        %3591 = vmatprep.subr.bf16.mxu0 0
        %3592 = vmatpush1.bf16.msra.mxu0 %v3463
        %3593 = vmatprep.subr.bf16.mxu0 0
        %3594 = vmatpush1.bf16.msra.mxu0 %v3464
        %3595 = vmatprep.subr.bf16.mxu0 0
        %3596 = vmatpush1.bf16.msra.mxu0 %v3465
        %3597 = vmatprep.subr.bf16.mxu0 0
        %3598 = vmatpush1.bf16.msra.mxu0 %v3466
        %3599 = vmatprep.subr.bf16.mxu0 0
        %3600 = vmatpush1.bf16.msra.mxu0 %v3467
        %3601 = vmatprep.subr.bf16.mxu0 0
        %3602 = vmatpush1.bf16.msra.mxu0 %v3468
        %3603 = vmatprep.subr.bf16.mxu0 0
        %3604 = vmatpush1.bf16.msra.mxu0 %v3469
        %3605 = vmatprep.subr.bf16.mxu0 0
        %3606 = vmatpush1.bf16.msra.mxu0 %v3470
        %3607 = vmatprep.subr.bf16.mxu0 0
        %3608 = vmatpush1.bf16.msra.mxu0 %v3471
        %3609 = vmatprep.mubr.bf16.mxu0 %v3259
        %3610 = vmatmul.mubr.bf16.gmra.mrb[0].mxu0 %v3256
        %v3611 = vpop.f32.mrb[0].mxu0
        %v3612 = vadd.f32 %v3539, %v3611
        %v3613 = vpop.f32.mrb[0].mxu0
        %v3614 = vpop.f32.mrb[0].mxu0
        %v3615 = vadd.f32 %v3542, %v3614
        %v3616 = vpop.f32.mrb[0].mxu0
        %3617 = vmatprep.mubr.bf16.mxu0 %v3267
        %3618 = vmatmul.mubr.bf16.gmra.mrb[0].mxu0 %v3265
        %v3619 = vpop.f32.mrb[0].mxu0
        %v3620 = vadd.f32 %v3547, %v3619
        %v3621 = vpop.f32.mrb[0].mxu0
        %v3622 = vpop.f32.mrb[0].mxu0
        %v3623 = vadd.f32 %v3550, %v3622
        %v3624 = vpop.f32.mrb[0].mxu0
        %3625 = vmatprep.mubr.bf16.mxu0 %v3275
        %3626 = vmatmul.mubr.bf16.gmra.mrb[0].mxu0 %v3273
        %v3627 = vpop.f32.mrb[0].mxu0
        %v3628 = vadd.f32 %v3555, %v3627
        %v3629 = vpop.f32.mrb[0].mxu0
        %v3630 = vpop.f32.mrb[0].mxu0
        %v3631 = vadd.f32 %v3558, %v3630
        %v3632 = vpop.f32.mrb[0].mxu0
        %3633 = vmatprep.mubr.bf16.mxu0 %v3283
        %3634 = vmatmul.mubr.bf16.gmra.mrb[0].mxu0 %v3281
        %v3635 = vpop.f32.mrb[0].mxu0
        %v3636 = vadd.f32 %v3563, %v3635
        %v3637 = vpop.f32.mrb[0].mxu0
        %v3638 = vpop.f32.mrb[0].mxu0
        %v3639 = vadd.f32 %v3566, %v3638
        %v3640 = vpop.f32.mrb[0].mxu0
        %3641 = vmatprep.mubr.bf16.mxu0 %v3291
        %3642 = vmatmul.mubr.bf16.gmra.mrb[0].mxu0 %v3289
        %v3643 = vpop.f32.mrb[0].mxu0
        %v3644 = vadd.f32 %v3571, %v3643
        %v3645 = vpop.f32.mrb[0].mxu0
        %v3646 = vpop.f32.mrb[0].mxu0
        %v3647 = vadd.f32 %v3574, %v3646
        %v3648 = vpop.f32.mrb[0].mxu0
        %3649 = vdwg.mxu0
        %v3650 = vadd.f32 %v3160, %v3612
        %v3651 = vadd.f32 %v3161, %v3615
        %v3652 = vadd.f32 %v3162, %v3620
        %v3653 = vadd.f32 %v3163, %v3623
        %v3654 = vadd.f32 %v3164, %v3628
        %v3655 = vadd.f32 %v3165, %v3631
        %v3656 = vadd.f32 %v3166, %v3636
        %v3657 = vadd.f32 %v3167, %v3639
        %v3658 = vadd.f32 %v3168, %v3644
        %v3659 = vadd.f32 %v3169, %v3647
        %v3660 = vld [vmem:[%s241 + $0x20] sm:$0xcc]
        %v3661 = vld [vmem:[%s241 + $0x28] sm:$0xcc]
        %v3662 = vld [vmem:[%s241 + $0x30] sm:$0xff]
        %v3663 = vld [vmem:[%s241 + $0x38] sm:$0xff]
        %v3664 = vld [vmem:[%s241 + $0x40] sm:$0xff]
        %v3665 = vld [vmem:[%s241 + $0x48] sm:$0xff]
        %v3666 = vld [vmem:[%s241 + $0x50] sm:$0xff]
        %v3667 = vld [vmem:[%s241 + $0x58] sm:$0xff]
        %v3668 = vld [vmem:[%s241 + $0x60] sm:$0xff]
        %v3669 = vld [vmem:[%s241 + $0x68] sm:$0xff]
        %v3670 = vld [vmem:[%s241 + $0x70] sm:$0xff]
        %v3671 = vld [vmem:[%s241 + $0x78] sm:$0xff]
        %v3672 = vld [vmem:[%s241 + $0x80] sm:$0xff]
        %v3673 = vld [vmem:[%s241 + $0x88] sm:$0xff]
        %v3674 = vld [vmem:[%s241 + $0x90] sm:$0xff]
        %v3675 = vld [vmem:[%s241 + $0x98] sm:$0xff]
        %v3676 = vld [vmem:[%s241 + $0xa0] sm:$0xff]
        %v3677 = vld [vmem:[%s241 + $0xa8] sm:$0xff]
        %v3678 = vld [vmem:[%s241 + $0xb0] sm:$0xff]
        %v3679 = vld [vmem:[%s241 + $0xb8] sm:$0xff]
        %v3680 = vld [vmem:[%s241 + $0xc0] sm:$0x33]
        %v3681 = vld [vmem:[%s241 + $0xc8] sm:$0x33]
        %s3682 = scalar_lea.vmem %s250, 1536 [#allocation6]
        %v3683 = vld [vmem:[%s3682] sm:$0xf]
        %v3684 = vld [vmem:[%s3682 + $0x4] sm:$0xf]
        %v3685 = vld [vmem:[%s3682 + $0x8] sm:$0xf]
        %v3686 = vld [vmem:[%s3682 + $0xc] sm:$0xf]
        %v3687 = vld [vmem:[%s3682 + $0x10] sm:$0xf]
        %v3688 = vld [vmem:[%s3682 + $0x14] sm:$0xf]
        %v3689 = vld [vmem:[%s3682 + $0x18] sm:$0xf]
        %v3690 = vld [vmem:[%s3682 + $0x1c] sm:$0xf]
        %v3691 = vld [vmem:[%s3682 + $0x20] sm:$0xf]
        %v3692 = vld [vmem:[%s3682 + $0x24] sm:$0xf]
        %v3693 = vld [vmem:[%s3682 + $0x28] sm:$0xf]
        %v3694 = vld [vmem:[%s3682 + $0x2c] sm:$0xf]
        %v3695 = vld [vmem:[%s3682 + $0x30] sm:$0xf]
        %v3696 = vld [vmem:[%s3682 + $0x34] sm:$0xf]
        %v3697 = vld [vmem:[%s3682 + $0x38] sm:$0xf]
        %v3698 = vld [vmem:[%s3682 + $0x3c] sm:$0xf]
        %v3699 = vld [vmem:[%s3682 + $0x40] sm:$0xf]
        %v3700 = vld [vmem:[%s3682 + $0x44] sm:$0xf]
        %v3701 = vld [vmem:[%s3682 + $0x48] sm:$0xf]
        %v3702 = vld [vmem:[%s3682 + $0x4c] sm:$0xf]
        %v3703 = vld [vmem:[%s3682 + $0x50] sm:$0xf]
        %v3704 = vld [vmem:[%s3682 + $0x54] sm:$0xf]
        %v3705 = vld [vmem:[%s3682 + $0x58] sm:$0xf]
        %v3706 = vld [vmem:[%s3682 + $0x5c] sm:$0xf]
        %v3707 = vld [vmem:[%s3682 + $0x60] sm:$0xf]
        %v3708 = vld [vmem:[%s3682 + $0x64] sm:$0xf]
        %v3709 = vld [vmem:[%s3682 + $0x68] sm:$0xf]
        %v3710 = vld [vmem:[%s3682 + $0x6c] sm:$0xf]
        %v3711 = vld [vmem:[%s3682 + $0x70] sm:$0xf]
        %v3712 = vld [vmem:[%s3682 + $0x74] sm:$0xf]
        %v3713 = vld [vmem:[%s3682 + $0x78] sm:$0xf]
        %v3714 = vld [vmem:[%s3682 + $0x7c] sm:$0xf]
        %v3715 = vld [vmem:[%s3682 + $0x80] sm:$0xf]
        %v3716 = vld [vmem:[%s3682 + $0x84] sm:$0xf]
        %v3717 = vld [vmem:[%s3682 + $0x88] sm:$0xf]
        %v3718 = vld [vmem:[%s3682 + $0x8c] sm:$0xf]
        %v3719 = vld [vmem:[%s3682 + $0x90] sm:$0xf]
        %v3720 = vld [vmem:[%s3682 + $0x94] sm:$0xf]
        %v3721 = vld [vmem:[%s3682 + $0x98] sm:$0xf]
        %v3722 = vld [vmem:[%s3682 + $0x9c] sm:$0xf]
        %v3723 = vld [vmem:[%s3682 + $0xa0] sm:$0xf]
        %v3724 = vld [vmem:[%s3682 + $0xa4] sm:$0xf]
        %v3725 = vld [vmem:[%s3682 + $0xa8] sm:$0xf]
        %v3726 = vld [vmem:[%s3682 + $0xac] sm:$0xf]
        %v3727 = vld [vmem:[%s3682 + $0xb0] sm:$0xf]
        %v3728 = vld [vmem:[%s3682 + $0xb4] sm:$0xf]
        %v3729 = vld [vmem:[%s3682 + $0xb8] sm:$0xf]
        %v3730 = vld [vmem:[%s3682 + $0xbc] sm:$0xf]
        %v3731 = vld [vmem:[%s3682 + $0xc0] sm:$0xf]
        %v3732 = vld [vmem:[%s3682 + $0xc4] sm:$0xf]
        %v3733 = vld [vmem:[%s3682 + $0xc8] sm:$0xf]
        %v3734 = vld [vmem:[%s3682 + $0xcc] sm:$0xf]
        %v3735 = vld [vmem:[%s3682 + $0xd0] sm:$0xf]
        %v3736 = vld [vmem:[%s3682 + $0xd4] sm:$0xf]
        %v3737 = vld [vmem:[%s3682 + $0xd8] sm:$0xf]
        %v3738 = vld [vmem:[%s3682 + $0xdc] sm:$0xf]
        %v3739 = vld [vmem:[%s3682 + $0xe0] sm:$0xf]
        %v3740 = vld [vmem:[%s3682 + $0xe4] sm:$0xf]
        %v3741 = vld [vmem:[%s3682 + $0xe8] sm:$0xf]
        %v3742 = vld [vmem:[%s3682 + $0xec] sm:$0xf]
        %v3743 = vld [vmem:[%s3682 + $0xf0] sm:$0xf]
        %v3744 = vld [vmem:[%s3682 + $0xf4] sm:$0xf]
        %v3745 = vld [vmem:[%s3682 + $0xf8] sm:$0xf]
        %v3746 = vld [vmem:[%s3682 + $0xfc] sm:$0xf]
        %v3769 = vunpack.c.l.b16 %v3660
        %v3770 = vunpack.c.h.b16 %v3660
        %v3771 = vunpack.c.l.b16 %v3661
        %v3772 = vunpack.c.h.b16 %v3661
        %v3773 = vunpack.c.l.b16 %v3662
        %v3774 = vunpack.c.h.b16 %v3662
        %v3775 = vunpack.c.l.b16 %v3663
        %v3776 = vunpack.c.h.b16 %v3663
        %v3777 = vunpack.c.l.b16 %v3664
        %v3778 = vunpack.c.h.b16 %v3664
        %v3779 = vunpack.c.l.b16 %v3665
        %v3780 = vunpack.c.h.b16 %v3665
        %v3781 = vunpack.c.l.b16 %v3666
        %v3782 = vunpack.c.h.b16 %v3666
        %v3783 = vunpack.c.l.b16 %v3667
        %v3784 = vunpack.c.h.b16 %v3667
        %v3785 = vunpack.c.l.b16 %v3668
        %v3786 = vunpack.c.h.b16 %v3668
        %v3787 = vunpack.c.l.b16 %v3669
        %v3788 = vunpack.c.h.b16 %v3669
        %v3789 = vunpack.c.l.b16 %v3670
        %v3790 = vunpack.c.h.b16 %v3670
        %v3791 = vunpack.c.l.b16 %v3671
        %v3792 = vunpack.c.h.b16 %v3671
        %v3793 = vunpack.c.l.b16 %v3672
        %v3794 = vunpack.c.h.b16 %v3672
        %v3795 = vunpack.c.l.b16 %v3673
        %v3796 = vunpack.c.h.b16 %v3673
        %v3797 = vunpack.c.l.b16 %v3674
        %v3798 = vunpack.c.h.b16 %v3674
        %v3799 = vunpack.c.l.b16 %v3675
        %v3800 = vunpack.c.h.b16 %v3675
        %v3801 = vunpack.c.l.b16 %v3676
        %v3802 = vunpack.c.h.b16 %v3676
        %v3803 = vunpack.c.l.b16 %v3677
        %v3804 = vunpack.c.h.b16 %v3677
        %v3805 = vunpack.c.l.b16 %v3678
        %v3806 = vunpack.c.h.b16 %v3678
        %v3807 = vunpack.c.l.b16 %v3679
        %v3808 = vunpack.c.h.b16 %v3679
        %v3809 = vunpack.c.l.b16 %v3680
        %v3810 = vunpack.c.h.b16 %v3680
        %v3811 = vunpack.c.l.b16 %v3681
        %v3812 = vunpack.c.h.b16 %v3681
        %v3813 = vpack.c.b16 %v3773, %v3769
        %v3814 = vpack.c.b16 %v3774, %v3770
        %v3815 = vpack.c.b16 %v3775, %v3771
        %v3816 = vpack.c.b16 %v3776, %v3772
        %v3817 = vpack.c.b16 %v3781, %v3777
        %v3818 = vpack.c.b16 %v3782, %v3778
        %v3819 = vpack.c.b16 %v3783, %v3779
        %v3820 = vpack.c.b16 %v3784, %v3780
        %v3821 = vpack.c.b16 %v3789, %v3785
        %v3822 = vpack.c.b16 %v3790, %v3786
        %v3823 = vpack.c.b16 %v3791, %v3787
        %v3824 = vpack.c.b16 %v3792, %v3788
        %v3825 = vpack.c.b16 %v3797, %v3793
        %v3826 = vpack.c.b16 %v3798, %v3794
        %v3827 = vpack.c.b16 %v3799, %v3795
        %v3828 = vpack.c.b16 %v3800, %v3796
        %v3829 = vpack.c.b16 %v3805, %v3801
        %v3830 = vpack.c.b16 %v3806, %v3802
        %v3831 = vpack.c.b16 %v3807, %v3803
        %v3832 = vpack.c.b16 %v3808, %v3804
        %v3833 = vpack.c.b16 %v3809, %v3809
        %v3834 = vpack.c.b16 %v3810, %v3810
        %v3835 = vpack.c.b16 %v3811, %v3811
        %v3836 = vpack.c.b16 %v3812, %v3812
        %v3837 = vrot.slane %v3813, 2
        %v3838 = vrot.slane %v3817, 2
        %v3839 = vsel %vm3247, %v3837, %v3838
        %v3840 = vrot.slane %v3814, 2
        %v3841 = vrot.slane %v3818, 2
        %v3842 = vsel %vm3247, %v3840, %v3841
        %v3843 = vrot.slane %v3815, 2
        %v3844 = vrot.slane %v3819, 2
        %v3845 = vsel %vm3247, %v3843, %v3844
        %v3846 = vrot.slane %v3816, 2
        %v3847 = vrot.slane %v3820, 2
        %v3848 = vsel %vm3247, %v3846, %v3847
        %v3849 = vrot.slane %v3821, 2
        %v3850 = vsel %vm3247, %v3838, %v3849
        %v3851 = vrot.slane %v3822, 2
        %v3852 = vsel %vm3247, %v3841, %v3851
        %v3853 = vrot.slane %v3823, 2
        %v3854 = vsel %vm3247, %v3844, %v3853
        %v3855 = vrot.slane %v3824, 2
        %v3856 = vsel %vm3247, %v3847, %v3855
        %v3857 = vrot.slane %v3825, 2
        %v3858 = vsel %vm3247, %v3849, %v3857
        %v3859 = vrot.slane %v3826, 2
        %v3860 = vsel %vm3247, %v3851, %v3859
        %v3861 = vrot.slane %v3827, 2
        %v3862 = vsel %vm3247, %v3853, %v3861
        %v3863 = vrot.slane %v3828, 2
        %v3864 = vsel %vm3247, %v3855, %v3863
        %v3865 = vrot.slane %v3829, 2
        %v3866 = vsel %vm3247, %v3857, %v3865
        %v3867 = vrot.slane %v3830, 2
        %v3868 = vsel %vm3247, %v3859, %v3867
        %v3869 = vrot.slane %v3831, 2
        %v3870 = vsel %vm3247, %v3861, %v3869
        %v3871 = vrot.slane %v3832, 2
        %v3872 = vsel %vm3247, %v3863, %v3871
        %v3873 = vrot.slane %v3833, 2
        %v3874 = vsel %vm3247, %v3865, %v3873
        %v3875 = vrot.slane %v3834, 2
        %v3876 = vsel %vm3247, %v3867, %v3875
        %v3877 = vrot.slane %v3835, 2
        %v3878 = vsel %vm3247, %v3869, %v3877
        %v3879 = vrot.slane %v3836, 2
        %v3880 = vsel %vm3247, %v3871, %v3879
        %v3965 = vunpack.c.l.b16 %v3683
        %v3966 = vunpack.c.l.b16 %v3684
        %v3967 = vunpack.c.l.b16 %v3685
        %v3968 = vunpack.c.l.b16 %v3686
        %v3969 = vunpack.c.l.b16 %v3687
        %v3970 = vunpack.c.l.b16 %v3688
        %v3971 = vunpack.c.l.b16 %v3689
        %v3972 = vunpack.c.l.b16 %v3690
        %v3973 = vunpack.c.l.b16 %v3691
        %v3974 = vunpack.c.l.b16 %v3692
        %v3975 = vunpack.c.l.b16 %v3693
        %v3976 = vunpack.c.l.b16 %v3694
        %v3977 = vunpack.c.l.b16 %v3695
        %v3978 = vunpack.c.l.b16 %v3696
        %v3979 = vunpack.c.l.b16 %v3697
        %v3980 = vunpack.c.l.b16 %v3698
        %v3981 = vunpack.c.l.b16 %v3699
        %v3982 = vunpack.c.l.b16 %v3700
        %v3983 = vunpack.c.l.b16 %v3701
        %v3984 = vunpack.c.l.b16 %v3702
        %v3985 = vunpack.c.l.b16 %v3703
        %v3986 = vunpack.c.l.b16 %v3704
        %v3987 = vunpack.c.l.b16 %v3705
        %v3988 = vunpack.c.l.b16 %v3706
        %v3989 = vunpack.c.l.b16 %v3707
        %v3990 = vunpack.c.l.b16 %v3708
        %v3991 = vunpack.c.l.b16 %v3709
        %v3992 = vunpack.c.l.b16 %v3710
        %v3993 = vunpack.c.l.b16 %v3711
        %v3994 = vunpack.c.l.b16 %v3712
        %v3995 = vunpack.c.l.b16 %v3713
        %v3996 = vunpack.c.l.b16 %v3714
        %v3997 = vunpack.c.l.b16 %v3715
        %v3998 = vunpack.c.l.b16 %v3716
        %v3999 = vunpack.c.l.b16 %v3717
        %v4000 = vunpack.c.l.b16 %v3718
        %v4001 = vunpack.c.l.b16 %v3719
        %v4002 = vunpack.c.l.b16 %v3720
        %v4003 = vunpack.c.l.b16 %v3721
        %v4004 = vunpack.c.l.b16 %v3722
        %v4005 = vunpack.c.l.b16 %v3723
        %v4006 = vunpack.c.l.b16 %v3724
        %v4007 = vunpack.c.l.b16 %v3725
        %v4008 = vunpack.c.l.b16 %v3726
        %v4009 = vunpack.c.l.b16 %v3727
        %v4010 = vunpack.c.l.b16 %v3728
        %v4011 = vunpack.c.l.b16 %v3729
        %v4012 = vunpack.c.l.b16 %v3730
        %v4013 = vunpack.c.l.b16 %v3731
        %v4014 = vunpack.c.l.b16 %v3732
        %v4015 = vunpack.c.l.b16 %v3733
        %v4016 = vunpack.c.l.b16 %v3734
        %v4017 = vunpack.c.l.b16 %v3735
        %v4018 = vunpack.c.l.b16 %v3736
        %v4019 = vunpack.c.l.b16 %v3737
        %v4020 = vunpack.c.l.b16 %v3738
        %v4021 = vunpack.c.l.b16 %v3739
        %v4022 = vunpack.c.l.b16 %v3740
        %v4023 = vunpack.c.l.b16 %v3741
        %v4024 = vunpack.c.l.b16 %v3742
        %v4025 = vunpack.c.l.b16 %v3743
        %v4026 = vunpack.c.l.b16 %v3744
        %v4027 = vunpack.c.l.b16 %v3745
        %v4028 = vunpack.c.l.b16 %v3746
        %v4029 = vpack.c.b16 %v3966, %v3965
        %v4030 = vpack.c.b16 %v3968, %v3967
        %v4031 = vpack.c.b16 %v3970, %v3969
        %v4032 = vpack.c.b16 %v3972, %v3971
        %v4033 = vpack.c.b16 %v3974, %v3973
        %v4034 = vpack.c.b16 %v3976, %v3975
        %v4035 = vpack.c.b16 %v3978, %v3977
        %v4036 = vpack.c.b16 %v3980, %v3979
        %v4037 = vpack.c.b16 %v3982, %v3981
        %v4038 = vpack.c.b16 %v3984, %v3983
        %v4039 = vpack.c.b16 %v3986, %v3985
        %v4040 = vpack.c.b16 %v3988, %v3987
        %v4041 = vpack.c.b16 %v3990, %v3989
        %v4042 = vpack.c.b16 %v3992, %v3991
        %v4043 = vpack.c.b16 %v3994, %v3993
        %v4044 = vpack.c.b16 %v3996, %v3995
        %v4045 = vpack.c.b16 %v3998, %v3997
        %v4046 = vpack.c.b16 %v4000, %v3999
        %v4047 = vpack.c.b16 %v4002, %v4001
        %v4048 = vpack.c.b16 %v4004, %v4003
        %v4049 = vpack.c.b16 %v4006, %v4005
        %v4050 = vpack.c.b16 %v4008, %v4007
        %v4051 = vpack.c.b16 %v4010, %v4009
        %v4052 = vpack.c.b16 %v4012, %v4011
        %v4053 = vpack.c.b16 %v4014, %v4013
        %v4054 = vpack.c.b16 %v4016, %v4015
        %v4055 = vpack.c.b16 %v4018, %v4017
        %v4056 = vpack.c.b16 %v4020, %v4019
        %v4057 = vpack.c.b16 %v4022, %v4021
        %v4058 = vpack.c.b16 %v4024, %v4023
        %v4059 = vpack.c.b16 %v4026, %v4025
        %v4060 = vpack.c.b16 %v4028, %v4027
        %4093 = vmatprep.subr.bf16.mxu0 0
        %4094 = vmatpush1.bf16.msra.mxu0 %v4029
        %4095 = vmatprep.subr.bf16.mxu0 0
        %4096 = vmatpush1.bf16.msra.mxu0 %v4030
        %4097 = vmatprep.subr.bf16.mxu0 0
        %4098 = vmatpush1.bf16.msra.mxu0 %v4031
        %4099 = vmatprep.subr.bf16.mxu0 0
        %4100 = vmatpush1.bf16.msra.mxu0 %v4032
        %4101 = vmatprep.subr.bf16.mxu0 0
        %4102 = vmatpush1.bf16.msra.mxu0 %v4033
        %4103 = vmatprep.subr.bf16.mxu0 0
        %4104 = vmatpush1.bf16.msra.mxu0 %v4034
        %4105 = vmatprep.subr.bf16.mxu0 0
        %4106 = vmatpush1.bf16.msra.mxu0 %v4035
        %4107 = vmatprep.subr.bf16.mxu0 0
        %4108 = vmatpush1.bf16.msra.mxu0 %v4036
        %4109 = vmatprep.subr.bf16.mxu0 0
        %4110 = vmatpush1.bf16.msra.mxu0 %v4037
        %4111 = vmatprep.subr.bf16.mxu0 0
        %4112 = vmatpush1.bf16.msra.mxu0 %v4038
        %4113 = vmatprep.subr.bf16.mxu0 0
        %4114 = vmatpush1.bf16.msra.mxu0 %v4039
        %4115 = vmatprep.subr.bf16.mxu0 0
        %4116 = vmatpush1.bf16.msra.mxu0 %v4040
        %4117 = vmatprep.subr.bf16.mxu0 0
        %4118 = vmatpush1.bf16.msra.mxu0 %v4041
        %4119 = vmatprep.subr.bf16.mxu0 0
        %4120 = vmatpush1.bf16.msra.mxu0 %v4042
        %4121 = vmatprep.subr.bf16.mxu0 0
        %4122 = vmatpush1.bf16.msra.mxu0 %v4043
        %4123 = vmatprep.subr.bf16.mxu0 0
        %4124 = vmatpush1.bf16.msra.mxu0 %v4044
        %4125 = vmatprep.mubr.bf16.mxu0 %v3842
        %4126 = vmatmul.mubr.bf16.gmra.mrb[0].mxu0 %v3839
        %v4127 = vpop.f32.mrb[0].mxu0
        %v4128 = vadd.f32 0.0, %v4127
        %v4129 = vpop.f32.mrb[0].mxu0
        %v4130 = vpop.f32.mrb[0].mxu0
        %v4131 = vadd.f32 0.0, %v4130
        %v4132 = vpop.f32.mrb[0].mxu0
        %4133 = vmatprep.mubr.bf16.mxu0 %v3852
        %4134 = vmatmul.mubr.bf16.gmra.mrb[0].mxu0 %v3850
        %v4135 = vpop.f32.mrb[0].mxu0
        %v4136 = vadd.f32 0.0, %v4135
        %v4137 = vpop.f32.mrb[0].mxu0
        %v4138 = vpop.f32.mrb[0].mxu0
        %v4139 = vadd.f32 0.0, %v4138
        %v4140 = vpop.f32.mrb[0].mxu0
        %4141 = vmatprep.mubr.bf16.mxu0 %v3860
        %4142 = vmatmul.mubr.bf16.gmra.mrb[0].mxu0 %v3858
        %v4143 = vpop.f32.mrb[0].mxu0
        %v4144 = vadd.f32 0.0, %v4143
        %v4145 = vpop.f32.mrb[0].mxu0
        %v4146 = vpop.f32.mrb[0].mxu0
        %v4147 = vadd.f32 0.0, %v4146
        %v4148 = vpop.f32.mrb[0].mxu0
        %4149 = vmatprep.mubr.bf16.mxu0 %v3868
        %4150 = vmatmul.mubr.bf16.gmra.mrb[0].mxu0 %v3866
        %v4151 = vpop.f32.mrb[0].mxu0
        %v4152 = vadd.f32 0.0, %v4151
        %v4153 = vpop.f32.mrb[0].mxu0
        %v4154 = vpop.f32.mrb[0].mxu0
        %v4155 = vadd.f32 0.0, %v4154
        %v4156 = vpop.f32.mrb[0].mxu0
        %4157 = vmatprep.mubr.bf16.mxu0 %v3876
        %4158 = vmatmul.mubr.bf16.gmra.mrb[0].mxu0 %v3874
        %v4159 = vpop.f32.mrb[0].mxu0
        %v4160 = vadd.f32 0.0, %v4159
        %v4161 = vpop.f32.mrb[0].mxu0
        %v4162 = vpop.f32.mrb[0].mxu0
        %v4163 = vadd.f32 0.0, %v4162
        %v4164 = vpop.f32.mrb[0].mxu0
        %4165 = vdwg.mxu0
        %4166 = vmatprep.subr.bf16.mxu0 0
        %4167 = vmatpush1.bf16.msra.mxu0 %v4045
        %4168 = vmatprep.subr.bf16.mxu0 0
        %4169 = vmatpush1.bf16.msra.mxu0 %v4046
        %4170 = vmatprep.subr.bf16.mxu0 0
        %4171 = vmatpush1.bf16.msra.mxu0 %v4047
        %4172 = vmatprep.subr.bf16.mxu0 0
        %4173 = vmatpush1.bf16.msra.mxu0 %v4048
        %4174 = vmatprep.subr.bf16.mxu0 0
        %4175 = vmatpush1.bf16.msra.mxu0 %v4049
        %4176 = vmatprep.subr.bf16.mxu0 0
        %4177 = vmatpush1.bf16.msra.mxu0 %v4050
        %4178 = vmatprep.subr.bf16.mxu0 0
        %4179 = vmatpush1.bf16.msra.mxu0 %v4051
        %4180 = vmatprep.subr.bf16.mxu0 0
        %4181 = vmatpush1.bf16.msra.mxu0 %v4052
        %4182 = vmatprep.subr.bf16.mxu0 0
        %4183 = vmatpush1.bf16.msra.mxu0 %v4053
        %4184 = vmatprep.subr.bf16.mxu0 0
        %4185 = vmatpush1.bf16.msra.mxu0 %v4054
        %4186 = vmatprep.subr.bf16.mxu0 0
        %4187 = vmatpush1.bf16.msra.mxu0 %v4055
        %4188 = vmatprep.subr.bf16.mxu0 0
        %4189 = vmatpush1.bf16.msra.mxu0 %v4056
        %4190 = vmatprep.subr.bf16.mxu0 0
        %4191 = vmatpush1.bf16.msra.mxu0 %v4057
        %4192 = vmatprep.subr.bf16.mxu0 0
        %4193 = vmatpush1.bf16.msra.mxu0 %v4058
        %4194 = vmatprep.subr.bf16.mxu0 0
        %4195 = vmatpush1.bf16.msra.mxu0 %v4059
        %4196 = vmatprep.subr.bf16.mxu0 0
        %4197 = vmatpush1.bf16.msra.mxu0 %v4060
        %4198 = vmatprep.mubr.bf16.mxu0 %v3848
        %4199 = vmatmul.mubr.bf16.gmra.mrb[0].mxu0 %v3845
        %v4200 = vpop.f32.mrb[0].mxu0
        %v4201 = vadd.f32 %v4128, %v4200
        %v4202 = vpop.f32.mrb[0].mxu0
        %v4203 = vpop.f32.mrb[0].mxu0
        %v4204 = vadd.f32 %v4131, %v4203
        %v4205 = vpop.f32.mrb[0].mxu0
        %4206 = vmatprep.mubr.bf16.mxu0 %v3856
        %4207 = vmatmul.mubr.bf16.gmra.mrb[0].mxu0 %v3854
        %v4208 = vpop.f32.mrb[0].mxu0
        %v4209 = vadd.f32 %v4136, %v4208
        %v4210 = vpop.f32.mrb[0].mxu0
        %v4211 = vpop.f32.mrb[0].mxu0
        %v4212 = vadd.f32 %v4139, %v4211
        %v4213 = vpop.f32.mrb[0].mxu0
        %4214 = vmatprep.mubr.bf16.mxu0 %v3864
        %4215 = vmatmul.mubr.bf16.gmra.mrb[0].mxu0 %v3862
        %v4216 = vpop.f32.mrb[0].mxu0
        %v4217 = vadd.f32 %v4144, %v4216
        %v4218 = vpop.f32.mrb[0].mxu0
        %v4219 = vpop.f32.mrb[0].mxu0
        %v4220 = vadd.f32 %v4147, %v4219
        %v4221 = vpop.f32.mrb[0].mxu0
        %4222 = vmatprep.mubr.bf16.mxu0 %v3872
        %4223 = vmatmul.mubr.bf16.gmra.mrb[0].mxu0 %v3870
        %v4224 = vpop.f32.mrb[0].mxu0
        %v4225 = vadd.f32 %v4152, %v4224
        %v4226 = vpop.f32.mrb[0].mxu0
        %v4227 = vpop.f32.mrb[0].mxu0
        %v4228 = vadd.f32 %v4155, %v4227
        %v4229 = vpop.f32.mrb[0].mxu0
        %4230 = vmatprep.mubr.bf16.mxu0 %v3880
        %4231 = vmatmul.mubr.bf16.gmra.mrb[0].mxu0 %v3878
        %v4232 = vpop.f32.mrb[0].mxu0
        %v4233 = vadd.f32 %v4160, %v4232
        %v4234 = vpop.f32.mrb[0].mxu0
        %v4235 = vpop.f32.mrb[0].mxu0
        %v4236 = vadd.f32 %v4163, %v4235
        %v4237 = vpop.f32.mrb[0].mxu0
        %4238 = vdwg.mxu0
        %v4239 = vadd.f32 %v3650, %v4201
        %v4240 = vadd.f32 %v3651, %v4204
        %v4241 = vadd.f32 %v3652, %v4209
        %v4242 = vadd.f32 %v3653, %v4212
        %v4243 = vadd.f32 %v3654, %v4217
        %v4244 = vadd.f32 %v3655, %v4220
        %v4245 = vadd.f32 %v3656, %v4225
        %v4246 = vadd.f32 %v3657, %v4228
        %v4247 = vadd.f32 %v3658, %v4233
        %v4248 = vadd.f32 %v3659, %v4236
        %v4249 = vld [vmem:[%s241 + $0xc0] sm:$0x77]
        %v4250 = vld [vmem:[%s241 + $0xc8] sm:$0x77]
        %s4251 = scalar_lea.vmem %s250, 1792 [#allocation6]
        %v4252 = vld [vmem:[%s4251] sm:$0xf]
        %v4253 = vld [vmem:[%s4251 + $0x4] sm:$0xf]
        %v4254 = vld [vmem:[%s4251 + $0x8] sm:$0xf]
        %v4255 = vld [vmem:[%s4251 + $0xc] sm:$0xf]
        %v4256 = vld [vmem:[%s4251 + $0x10] sm:$0xf]
        %v4257 = vld [vmem:[%s4251 + $0x14] sm:$0xf]
        %v4258 = vld [vmem:[%s4251 + $0x18] sm:$0xf]
        %v4259 = vld [vmem:[%s4251 + $0x1c] sm:$0xf]
        %v4260 = vld [vmem:[%s4251 + $0x20] sm:$0xf]
        %v4261 = vld [vmem:[%s4251 + $0x24] sm:$0xf]
        %v4262 = vld [vmem:[%s4251 + $0x28] sm:$0xf]
        %v4263 = vld [vmem:[%s4251 + $0x2c] sm:$0xf]
        %v4264 = vld [vmem:[%s4251 + $0x30] sm:$0xf]
        %v4265 = vld [vmem:[%s4251 + $0x34] sm:$0xf]
        %v4266 = vld [vmem:[%s4251 + $0x38] sm:$0xf]
        %v4267 = vld [vmem:[%s4251 + $0x3c] sm:$0xf]
        %v4268 = vld [vmem:[%s4251 + $0x40] sm:$0xf]
        %v4269 = vld [vmem:[%s4251 + $0x44] sm:$0xf]
        %v4270 = vld [vmem:[%s4251 + $0x48] sm:$0xf]
        %v4271 = vld [vmem:[%s4251 + $0x4c] sm:$0xf]
        %v4272 = vld [vmem:[%s4251 + $0x50] sm:$0xf]
        %v4273 = vld [vmem:[%s4251 + $0x54] sm:$0xf]
        %v4274 = vld [vmem:[%s4251 + $0x58] sm:$0xf]
        %v4275 = vld [vmem:[%s4251 + $0x5c] sm:$0xf]
        %v4276 = vld [vmem:[%s4251 + $0x60] sm:$0xf]
        %v4277 = vld [vmem:[%s4251 + $0x64] sm:$0xf]
        %v4278 = vld [vmem:[%s4251 + $0x68] sm:$0xf]
        %v4279 = vld [vmem:[%s4251 + $0x6c] sm:$0xf]
        %v4280 = vld [vmem:[%s4251 + $0x70] sm:$0xf]
        %v4281 = vld [vmem:[%s4251 + $0x74] sm:$0xf]
        %v4282 = vld [vmem:[%s4251 + $0x78] sm:$0xf]
        %v4283 = vld [vmem:[%s4251 + $0x7c] sm:$0xf]
        %v4284 = vld [vmem:[%s4251 + $0x80] sm:$0xf]
        %v4285 = vld [vmem:[%s4251 + $0x84] sm:$0xf]
        %v4286 = vld [vmem:[%s4251 + $0x88] sm:$0xf]
        %v4287 = vld [vmem:[%s4251 + $0x8c] sm:$0xf]
        %v4288 = vld [vmem:[%s4251 + $0x90] sm:$0xf]
        %v4289 = vld [vmem:[%s4251 + $0x94] sm:$0xf]
        %v4290 = vld [vmem:[%s4251 + $0x98] sm:$0xf]
        %v4291 = vld [vmem:[%s4251 + $0x9c] sm:$0xf]
        %v4292 = vld [vmem:[%s4251 + $0xa0] sm:$0xf]
        %v4293 = vld [vmem:[%s4251 + $0xa4] sm:$0xf]
        %v4294 = vld [vmem:[%s4251 + $0xa8] sm:$0xf]
        %v4295 = vld [vmem:[%s4251 + $0xac] sm:$0xf]
        %v4296 = vld [vmem:[%s4251 + $0xb0] sm:$0xf]
        %v4297 = vld [vmem:[%s4251 + $0xb4] sm:$0xf]
        %v4298 = vld [vmem:[%s4251 + $0xb8] sm:$0xf]
        %v4299 = vld [vmem:[%s4251 + $0xbc] sm:$0xf]
        %v4300 = vld [vmem:[%s4251 + $0xc0] sm:$0xf]
        %v4301 = vld [vmem:[%s4251 + $0xc4] sm:$0xf]
        %v4302 = vld [vmem:[%s4251 + $0xc8] sm:$0xf]
        %v4303 = vld [vmem:[%s4251 + $0xcc] sm:$0xf]
        %v4304 = vld [vmem:[%s4251 + $0xd0] sm:$0xf]
        %v4305 = vld [vmem:[%s4251 + $0xd4] sm:$0xf]
        %v4306 = vld [vmem:[%s4251 + $0xd8] sm:$0xf]
        %v4307 = vld [vmem:[%s4251 + $0xdc] sm:$0xf]
        %v4308 = vld [vmem:[%s4251 + $0xe0] sm:$0xf]
        %v4309 = vld [vmem:[%s4251 + $0xe4] sm:$0xf]
        %v4310 = vld [vmem:[%s4251 + $0xe8] sm:$0xf]
        %v4311 = vld [vmem:[%s4251 + $0xec] sm:$0xf]
        %v4312 = vld [vmem:[%s4251 + $0xf0] sm:$0xf]
        %v4313 = vld [vmem:[%s4251 + $0xf4] sm:$0xf]
        %v4314 = vld [vmem:[%s4251 + $0xf8] sm:$0xf]
        %v4315 = vld [vmem:[%s4251 + $0xfc] sm:$0xf]
        %v4318 = vunpack.c.l.b16 %v4249
        %v4319 = vunpack.c.h.b16 %v4249
        %v4320 = vunpack.c.l.b16 %v4250
        %v4321 = vunpack.c.h.b16 %v4250
        %v4322 = vpack.c.b16 %v4318, %v4318
        %v4323 = vpack.c.b16 %v4319, %v4319
        %v4324 = vpack.c.b16 %v4320, %v4320
        %v4325 = vpack.c.b16 %v4321, %v4321
        %vm4326 = vsmask.f32 5376
        %v4328 = vshrl.u32 %v3813, 16
        %v4330 = vrot.slane %v4328, 2
        %v4331 = vshll.u32 %v3813, 16
        %v4333 = vrot.slane %v4331, 3
        %v4334 = vor.u32 %v4330, %v4333
        %v4336 = vshrl.u32 %v3817, 16
        %v4338 = vrot.slane %v4336, 2
        %v4339 = vshll.u32 %v3817, 16
        %v4341 = vrot.slane %v4339, 3
        %v4342 = vor.u32 %v4338, %v4341
        %v4343 = vsel %vm4326, %v4334, %v4342
        %v4345 = vshrl.u32 %v3814, 16
        %v4347 = vrot.slane %v4345, 2
        %v4348 = vshll.u32 %v3814, 16
        %v4350 = vrot.slane %v4348, 3
        %v4351 = vor.u32 %v4347, %v4350
        %v4353 = vshrl.u32 %v3818, 16
        %v4355 = vrot.slane %v4353, 2
        %v4356 = vshll.u32 %v3818, 16
        %v4358 = vrot.slane %v4356, 3
        %v4359 = vor.u32 %v4355, %v4358
        %v4360 = vsel %vm4326, %v4351, %v4359
        %v4362 = vshrl.u32 %v3815, 16
        %v4364 = vrot.slane %v4362, 2
        %v4365 = vshll.u32 %v3815, 16
        %v4367 = vrot.slane %v4365, 3
        %v4368 = vor.u32 %v4364, %v4367
        %v4370 = vshrl.u32 %v3819, 16
        %v4372 = vrot.slane %v4370, 2
        %v4373 = vshll.u32 %v3819, 16
        %v4375 = vrot.slane %v4373, 3
        %v4376 = vor.u32 %v4372, %v4375
        %v4377 = vsel %vm4326, %v4368, %v4376
        %v4379 = vshrl.u32 %v3816, 16
        %v4381 = vrot.slane %v4379, 2
        %v4382 = vshll.u32 %v3816, 16
        %v4384 = vrot.slane %v4382, 3
        %v4385 = vor.u32 %v4381, %v4384
        %v4387 = vshrl.u32 %v3820, 16
        %v4389 = vrot.slane %v4387, 2
        %v4390 = vshll.u32 %v3820, 16
        %v4392 = vrot.slane %v4390, 3
        %v4393 = vor.u32 %v4389, %v4392
        %v4394 = vsel %vm4326, %v4385, %v4393
        %v4396 = vshrl.u32 %v3821, 16
        %v4398 = vrot.slane %v4396, 2
        %v4399 = vshll.u32 %v3821, 16
        %v4401 = vrot.slane %v4399, 3
        %v4402 = vor.u32 %v4398, %v4401
        %v4403 = vsel %vm4326, %v4342, %v4402
        %v4405 = vshrl.u32 %v3822, 16
        %v4407 = vrot.slane %v4405, 2
        %v4408 = vshll.u32 %v3822, 16
        %v4410 = vrot.slane %v4408, 3
        %v4411 = vor.u32 %v4407, %v4410
        %v4412 = vsel %vm4326, %v4359, %v4411
        %v4414 = vshrl.u32 %v3823, 16
        %v4416 = vrot.slane %v4414, 2
        %v4417 = vshll.u32 %v3823, 16
        %v4419 = vrot.slane %v4417, 3
        %v4420 = vor.u32 %v4416, %v4419
        %v4421 = vsel %vm4326, %v4376, %v4420
        %v4423 = vshrl.u32 %v3824, 16
        %v4425 = vrot.slane %v4423, 2
        %v4426 = vshll.u32 %v3824, 16
        %v4428 = vrot.slane %v4426, 3
        %v4429 = vor.u32 %v4425, %v4428
        %v4430 = vsel %vm4326, %v4393, %v4429
        %v4432 = vshrl.u32 %v3825, 16
        %v4434 = vrot.slane %v4432, 2
        %v4435 = vshll.u32 %v3825, 16
        %v4437 = vrot.slane %v4435, 3
        %v4438 = vor.u32 %v4434, %v4437
        %v4439 = vsel %vm4326, %v4402, %v4438
        %v4441 = vshrl.u32 %v3826, 16
        %v4443 = vrot.slane %v4441, 2
        %v4444 = vshll.u32 %v3826, 16
        %v4446 = vrot.slane %v4444, 3
        %v4447 = vor.u32 %v4443, %v4446
        %v4448 = vsel %vm4326, %v4411, %v4447
        %v4450 = vshrl.u32 %v3827, 16
        %v4452 = vrot.slane %v4450, 2
        %v4453 = vshll.u32 %v3827, 16
        %v4455 = vrot.slane %v4453, 3
        %v4456 = vor.u32 %v4452, %v4455
        %v4457 = vsel %vm4326, %v4420, %v4456
        %v4459 = vshrl.u32 %v3828, 16
        %v4461 = vrot.slane %v4459, 2
        %v4462 = vshll.u32 %v3828, 16
        %v4464 = vrot.slane %v4462, 3
        %v4465 = vor.u32 %v4461, %v4464
        %v4466 = vsel %vm4326, %v4429, %v4465
        %v4468 = vshrl.u32 %v3829, 16
        %v4470 = vrot.slane %v4468, 2
        %v4471 = vshll.u32 %v3829, 16
        %v4473 = vrot.slane %v4471, 3
        %v4474 = vor.u32 %v4470, %v4473
        %v4475 = vsel %vm4326, %v4438, %v4474
        %v4477 = vshrl.u32 %v3830, 16
        %v4479 = vrot.slane %v4477, 2
        %v4480 = vshll.u32 %v3830, 16
        %v4482 = vrot.slane %v4480, 3
        %v4483 = vor.u32 %v4479, %v4482
        %v4484 = vsel %vm4326, %v4447, %v4483
        %v4486 = vshrl.u32 %v3831, 16
        %v4488 = vrot.slane %v4486, 2
        %v4489 = vshll.u32 %v3831, 16
        %v4491 = vrot.slane %v4489, 3
        %v4492 = vor.u32 %v4488, %v4491
        %v4493 = vsel %vm4326, %v4456, %v4492
        %v4495 = vshrl.u32 %v3832, 16
        %v4497 = vrot.slane %v4495, 2
        %v4498 = vshll.u32 %v3832, 16
        %v4500 = vrot.slane %v4498, 3
        %v4501 = vor.u32 %v4497, %v4500
        %v4502 = vsel %vm4326, %v4465, %v4501
        %v4504 = vshrl.u32 %v4322, 16
        %v4506 = vrot.slane %v4504, 2
        %v4507 = vshll.u32 %v4322, 16
        %v4509 = vrot.slane %v4507, 3
        %v4510 = vor.u32 %v4506, %v4509
        %v4511 = vsel %vm4326, %v4474, %v4510
        %v4513 = vshrl.u32 %v4323, 16
        %v4515 = vrot.slane %v4513, 2
        %v4516 = vshll.u32 %v4323, 16
        %v4518 = vrot.slane %v4516, 3
        %v4519 = vor.u32 %v4515, %v4518
        %v4520 = vsel %vm4326, %v4483, %v4519
        %v4522 = vshrl.u32 %v4324, 16
        %v4524 = vrot.slane %v4522, 2
        %v4525 = vshll.u32 %v4324, 16
        %v4527 = vrot.slane %v4525, 3
        %v4528 = vor.u32 %v4524, %v4527
        %v4529 = vsel %vm4326, %v4492, %v4528
        %v4531 = vshrl.u32 %v4325, 16
        %v4533 = vrot.slane %v4531, 2
        %v4534 = vshll.u32 %v4325, 16
        %v4536 = vrot.slane %v4534, 3
        %v4537 = vor.u32 %v4533, %v4536
        %v4538 = vsel %vm4326, %v4501, %v4537
        %v4623 = vunpack.c.l.b16 %v4252
        %v4624 = vunpack.c.l.b16 %v4253
        %v4625 = vunpack.c.l.b16 %v4254
        %v4626 = vunpack.c.l.b16 %v4255
        %v4627 = vunpack.c.l.b16 %v4256
        %v4628 = vunpack.c.l.b16 %v4257
        %v4629 = vunpack.c.l.b16 %v4258
        %v4630 = vunpack.c.l.b16 %v4259
        %v4631 = vunpack.c.l.b16 %v4260
        %v4632 = vunpack.c.l.b16 %v4261
        %v4633 = vunpack.c.l.b16 %v4262
        %v4634 = vunpack.c.l.b16 %v4263
        %v4635 = vunpack.c.l.b16 %v4264
        %v4636 = vunpack.c.l.b16 %v4265
        %v4637 = vunpack.c.l.b16 %v4266
        %v4638 = vunpack.c.l.b16 %v4267
        %v4639 = vunpack.c.l.b16 %v4268
        %v4640 = vunpack.c.l.b16 %v4269
        %v4641 = vunpack.c.l.b16 %v4270
        %v4642 = vunpack.c.l.b16 %v4271
        %v4643 = vunpack.c.l.b16 %v4272
        %v4644 = vunpack.c.l.b16 %v4273
        %v4645 = vunpack.c.l.b16 %v4274
        %v4646 = vunpack.c.l.b16 %v4275
        %v4647 = vunpack.c.l.b16 %v4276
        %v4648 = vunpack.c.l.b16 %v4277
        %v4649 = vunpack.c.l.b16 %v4278
        %v4650 = vunpack.c.l.b16 %v4279
        %v4651 = vunpack.c.l.b16 %v4280
        %v4652 = vunpack.c.l.b16 %v4281
        %v4653 = vunpack.c.l.b16 %v4282
        %v4654 = vunpack.c.l.b16 %v4283
        %v4655 = vunpack.c.l.b16 %v4284
        %v4656 = vunpack.c.l.b16 %v4285
        %v4657 = vunpack.c.l.b16 %v4286
        %v4658 = vunpack.c.l.b16 %v4287
        %v4659 = vunpack.c.l.b16 %v4288
        %v4660 = vunpack.c.l.b16 %v4289
        %v4661 = vunpack.c.l.b16 %v4290
        %v4662 = vunpack.c.l.b16 %v4291
        %v4663 = vunpack.c.l.b16 %v4292
        %v4664 = vunpack.c.l.b16 %v4293
        %v4665 = vunpack.c.l.b16 %v4294
        %v4666 = vunpack.c.l.b16 %v4295
        %v4667 = vunpack.c.l.b16 %v4296
        %v4668 = vunpack.c.l.b16 %v4297
        %v4669 = vunpack.c.l.b16 %v4298
        %v4670 = vunpack.c.l.b16 %v4299
        %v4671 = vunpack.c.l.b16 %v4300
        %v4672 = vunpack.c.l.b16 %v4301
        %v4673 = vunpack.c.l.b16 %v4302
        %v4674 = vunpack.c.l.b16 %v4303
        %v4675 = vunpack.c.l.b16 %v4304
        %v4676 = vunpack.c.l.b16 %v4305
        %v4677 = vunpack.c.l.b16 %v4306
        %v4678 = vunpack.c.l.b16 %v4307
        %v4679 = vunpack.c.l.b16 %v4308
        %v4680 = vunpack.c.l.b16 %v4309
        %v4681 = vunpack.c.l.b16 %v4310
        %v4682 = vunpack.c.l.b16 %v4311
        %v4683 = vunpack.c.l.b16 %v4312
        %v4684 = vunpack.c.l.b16 %v4313
        %v4685 = vunpack.c.l.b16 %v4314
        %v4686 = vunpack.c.l.b16 %v4315
        %v4687 = vpack.c.b16 %v4624, %v4623
        %v4688 = vpack.c.b16 %v4626, %v4625
        %v4689 = vpack.c.b16 %v4628, %v4627
        %v4690 = vpack.c.b16 %v4630, %v4629
        %v4691 = vpack.c.b16 %v4632, %v4631
        %v4692 = vpack.c.b16 %v4634, %v4633
        %v4693 = vpack.c.b16 %v4636, %v4635
        %v4694 = vpack.c.b16 %v4638, %v4637
        %v4695 = vpack.c.b16 %v4640, %v4639
        %v4696 = vpack.c.b16 %v4642, %v4641
        %v4697 = vpack.c.b16 %v4644, %v4643
        %v4698 = vpack.c.b16 %v4646, %v4645
        %v4699 = vpack.c.b16 %v4648, %v4647
        %v4700 = vpack.c.b16 %v4650, %v4649
        %v4701 = vpack.c.b16 %v4652, %v4651
        %v4702 = vpack.c.b16 %v4654, %v4653
        %v4703 = vpack.c.b16 %v4656, %v4655
        %v4704 = vpack.c.b16 %v4658, %v4657
        %v4705 = vpack.c.b16 %v4660, %v4659
        %v4706 = vpack.c.b16 %v4662, %v4661
        %v4707 = vpack.c.b16 %v4664, %v4663
        %v4708 = vpack.c.b16 %v4666, %v4665
        %v4709 = vpack.c.b16 %v4668, %v4667
        %v4710 = vpack.c.b16 %v4670, %v4669
        %v4711 = vpack.c.b16 %v4672, %v4671
        %v4712 = vpack.c.b16 %v4674, %v4673
        %v4713 = vpack.c.b16 %v4676, %v4675
        %v4714 = vpack.c.b16 %v4678, %v4677
        %v4715 = vpack.c.b16 %v4680, %v4679
        %v4716 = vpack.c.b16 %v4682, %v4681
        %v4717 = vpack.c.b16 %v4684, %v4683
        %v4718 = vpack.c.b16 %v4686, %v4685
        %4751 = vmatprep.subr.bf16.mxu0 0
        %4752 = vmatpush1.bf16.msra.mxu0 %v4687
        %4753 = vmatprep.subr.bf16.mxu0 0
        %4754 = vmatpush1.bf16.msra.mxu0 %v4688
        %4755 = vmatprep.subr.bf16.mxu0 0
        %4756 = vmatpush1.bf16.msra.mxu0 %v4689
        %4757 = vmatprep.subr.bf16.mxu0 0
        %4758 = vmatpush1.bf16.msra.mxu0 %v4690
        %4759 = vmatprep.subr.bf16.mxu0 0
        %4760 = vmatpush1.bf16.msra.mxu0 %v4691
        %4761 = vmatprep.subr.bf16.mxu0 0
        %4762 = vmatpush1.bf16.msra.mxu0 %v4692
        %4763 = vmatprep.subr.bf16.mxu0 0
        %4764 = vmatpush1.bf16.msra.mxu0 %v4693
        %4765 = vmatprep.subr.bf16.mxu0 0
        %4766 = vmatpush1.bf16.msra.mxu0 %v4694
        %4767 = vmatprep.subr.bf16.mxu0 0
        %4768 = vmatpush1.bf16.msra.mxu0 %v4695
        %4769 = vmatprep.subr.bf16.mxu0 0
        %4770 = vmatpush1.bf16.msra.mxu0 %v4696
        %4771 = vmatprep.subr.bf16.mxu0 0
        %4772 = vmatpush1.bf16.msra.mxu0 %v4697
        %4773 = vmatprep.subr.bf16.mxu0 0
        %4774 = vmatpush1.bf16.msra.mxu0 %v4698
        %4775 = vmatprep.subr.bf16.mxu0 0
        %4776 = vmatpush1.bf16.msra.mxu0 %v4699
        %4777 = vmatprep.subr.bf16.mxu0 0
        %4778 = vmatpush1.bf16.msra.mxu0 %v4700
        %4779 = vmatprep.subr.bf16.mxu0 0
        %4780 = vmatpush1.bf16.msra.mxu0 %v4701
        %4781 = vmatprep.subr.bf16.mxu0 0
        %4782 = vmatpush1.bf16.msra.mxu0 %v4702
        %4783 = vmatprep.mubr.bf16.mxu0 %v4360
        %4784 = vmatmul.mubr.bf16.gmra.mrb[0].mxu0 %v4343
        %v4785 = vpop.f32.mrb[0].mxu0
        %v4786 = vadd.f32 0.0, %v4785
        %v4787 = vpop.f32.mrb[0].mxu0
        %v4788 = vpop.f32.mrb[0].mxu0
        %v4789 = vadd.f32 0.0, %v4788
        %v4790 = vpop.f32.mrb[0].mxu0
        %4791 = vmatprep.mubr.bf16.mxu0 %v4412
        %4792 = vmatmul.mubr.bf16.gmra.mrb[0].mxu0 %v4403
        %v4793 = vpop.f32.mrb[0].mxu0
        %v4794 = vadd.f32 0.0, %v4793
        %v4795 = vpop.f32.mrb[0].mxu0
        %v4796 = vpop.f32.mrb[0].mxu0
        %v4797 = vadd.f32 0.0, %v4796
        %v4798 = vpop.f32.mrb[0].mxu0
        %4799 = vmatprep.mubr.bf16.mxu0 %v4448
        %4800 = vmatmul.mubr.bf16.gmra.mrb[0].mxu0 %v4439
        %v4801 = vpop.f32.mrb[0].mxu0
        %v4802 = vadd.f32 0.0, %v4801
        %v4803 = vpop.f32.mrb[0].mxu0
        %v4804 = vpop.f32.mrb[0].mxu0
        %v4805 = vadd.f32 0.0, %v4804
        %v4806 = vpop.f32.mrb[0].mxu0
        %4807 = vmatprep.mubr.bf16.mxu0 %v4484
        %4808 = vmatmul.mubr.bf16.gmra.mrb[0].mxu0 %v4475
        %v4809 = vpop.f32.mrb[0].mxu0
        %v4810 = vadd.f32 0.0, %v4809
        %v4811 = vpop.f32.mrb[0].mxu0
        %v4812 = vpop.f32.mrb[0].mxu0
        %v4813 = vadd.f32 0.0, %v4812
        %v4814 = vpop.f32.mrb[0].mxu0
        %4815 = vmatprep.mubr.bf16.mxu0 %v4520
        %4816 = vmatmul.mubr.bf16.gmra.mrb[0].mxu0 %v4511
        %v4817 = vpop.f32.mrb[0].mxu0
        %v4818 = vadd.f32 0.0, %v4817
        %v4819 = vpop.f32.mrb[0].mxu0
        %v4820 = vpop.f32.mrb[0].mxu0
        %v4821 = vadd.f32 0.0, %v4820
        %v4822 = vpop.f32.mrb[0].mxu0
        %4823 = vdwg.mxu0
        %4824 = vmatprep.subr.bf16.mxu0 0
        %4825 = vmatpush1.bf16.msra.mxu0 %v4703
        %4826 = vmatprep.subr.bf16.mxu0 0
        %4827 = vmatpush1.bf16.msra.mxu0 %v4704
        %4828 = vmatprep.subr.bf16.mxu0 0
        %4829 = vmatpush1.bf16.msra.mxu0 %v4705
        %4830 = vmatprep.subr.bf16.mxu0 0
        %4831 = vmatpush1.bf16.msra.mxu0 %v4706
        %4832 = vmatprep.subr.bf16.mxu0 0
        %4833 = vmatpush1.bf16.msra.mxu0 %v4707
        %4834 = vmatprep.subr.bf16.mxu0 0
        %4835 = vmatpush1.bf16.msra.mxu0 %v4708
        %4836 = vmatprep.subr.bf16.mxu0 0
        %4837 = vmatpush1.bf16.msra.mxu0 %v4709
        %4838 = vmatprep.subr.bf16.mxu0 0
        %4839 = vmatpush1.bf16.msra.mxu0 %v4710
        %4840 = vmatprep.subr.bf16.mxu0 0
        %4841 = vmatpush1.bf16.msra.mxu0 %v4711
        %4842 = vmatprep.subr.bf16.mxu0 0
        %4843 = vmatpush1.bf16.msra.mxu0 %v4712
        %4844 = vmatprep.subr.bf16.mxu0 0
        %4845 = vmatpush1.bf16.msra.mxu0 %v4713
        %4846 = vmatprep.subr.bf16.mxu0 0
        %4847 = vmatpush1.bf16.msra.mxu0 %v4714
        %4848 = vmatprep.subr.bf16.mxu0 0
        %4849 = vmatpush1.bf16.msra.mxu0 %v4715
        %4850 = vmatprep.subr.bf16.mxu0 0
        %4851 = vmatpush1.bf16.msra.mxu0 %v4716
        %4852 = vmatprep.subr.bf16.mxu0 0
        %4853 = vmatpush1.bf16.msra.mxu0 %v4717
        %4854 = vmatprep.subr.bf16.mxu0 0
        %4855 = vmatpush1.bf16.msra.mxu0 %v4718
        %4856 = vmatprep.mubr.bf16.mxu0 %v4394
        %4857 = vmatmul.mubr.bf16.gmra.mrb[0].mxu0 %v4377
        %v4858 = vpop.f32.mrb[0].mxu0
        %v4859 = vadd.f32 %v4786, %v4858
        %v4860 = vpop.f32.mrb[0].mxu0
        %v4861 = vpop.f32.mrb[0].mxu0
        %v4862 = vadd.f32 %v4789, %v4861
        %v4863 = vpop.f32.mrb[0].mxu0
        %4864 = vmatprep.mubr.bf16.mxu0 %v4430
        %4865 = vmatmul.mubr.bf16.gmra.mrb[0].mxu0 %v4421
        %v4866 = vpop.f32.mrb[0].mxu0
        %v4867 = vadd.f32 %v4794, %v4866
        %v4868 = vpop.f32.mrb[0].mxu0
        %v4869 = vpop.f32.mrb[0].mxu0
        %v4870 = vadd.f32 %v4797, %v4869
        %v4871 = vpop.f32.mrb[0].mxu0
        %4872 = vmatprep.mubr.bf16.mxu0 %v4466
        %4873 = vmatmul.mubr.bf16.gmra.mrb[0].mxu0 %v4457
        %v4874 = vpop.f32.mrb[0].mxu0
        %v4875 = vadd.f32 %v4802, %v4874
        %v4876 = vpop.f32.mrb[0].mxu0
        %v4877 = vpop.f32.mrb[0].mxu0
        %v4878 = vadd.f32 %v4805, %v4877
        %v4879 = vpop.f32.mrb[0].mxu0
        %4880 = vmatprep.mubr.bf16.mxu0 %v4502
        %4881 = vmatmul.mubr.bf16.gmra.mrb[0].mxu0 %v4493
        %v4882 = vpop.f32.mrb[0].mxu0
        %v4883 = vadd.f32 %v4810, %v4882
        %v4884 = vpop.f32.mrb[0].mxu0
        %v4885 = vpop.f32.mrb[0].mxu0
        %v4886 = vadd.f32 %v4813, %v4885
        %v4887 = vpop.f32.mrb[0].mxu0
        %4888 = vmatprep.mubr.bf16.mxu0 %v4538
        %4889 = vmatmul.mubr.bf16.gmra.mrb[0].mxu0 %v4529
        %v4890 = vpop.f32.mrb[0].mxu0
        %v4891 = vadd.f32 %v4818, %v4890
        %v4892 = vpop.f32.mrb[0].mxu0
        %v4893 = vpop.f32.mrb[0].mxu0
        %v4894 = vadd.f32 %v4821, %v4893
        %v4895 = vpop.f32.mrb[0].mxu0
        %4896 = vdwg.mxu0
        %v4897 = vadd.f32 %v4239, %v4859
        %v4898 = vadd.f32 %v4240, %v4862
        %v4899 = vadd.f32 %v4241, %v4867
        %v4900 = vadd.f32 %v4242, %v4870
        %v4901 = vadd.f32 %v4243, %v4875
        %v4902 = vadd.f32 %v4244, %v4878
        %v4903 = vadd.f32 %v4245, %v4883
        %v4904 = vadd.f32 %v4246, %v4886
        %v4905 = vadd.f32 %v4247, %v4891
        %v4906 = vadd.f32 %v4248, %v4894
        %v4907 = vld [vmem:[%s241 + $0x20] sm:$0x88]
        %v4908 = vld [vmem:[%s241 + $0x28] sm:$0x88]
        %s4909 = scalar_lea.vmem %s250, 2048 [#allocation6]
        %v4910 = vld [vmem:[%s4909] sm:$0xf]
        %v4911 = vld [vmem:[%s4909 + $0x4] sm:$0xf]
        %v4912 = vld [vmem:[%s4909 + $0x8] sm:$0xf]
        %v4913 = vld [vmem:[%s4909 + $0xc] sm:$0xf]
        %v4914 = vld [vmem:[%s4909 + $0x10] sm:$0xf]
        %v4915 = vld [vmem:[%s4909 + $0x14] sm:$0xf]
        %v4916 = vld [vmem:[%s4909 + $0x18] sm:$0xf]
        %v4917 = vld [vmem:[%s4909 + $0x1c] sm:$0xf]
        %v4918 = vld [vmem:[%s4909 + $0x20] sm:$0xf]
        %v4919 = vld [vmem:[%s4909 + $0x24] sm:$0xf]
        %v4920 = vld [vmem:[%s4909 + $0x28] sm:$0xf]
        %v4921 = vld [vmem:[%s4909 + $0x2c] sm:$0xf]
        %v4922 = vld [vmem:[%s4909 + $0x30] sm:$0xf]
        %v4923 = vld [vmem:[%s4909 + $0x34] sm:$0xf]
        %v4924 = vld [vmem:[%s4909 + $0x38] sm:$0xf]
        %v4925 = vld [vmem:[%s4909 + $0x3c] sm:$0xf]
        %v4926 = vld [vmem:[%s4909 + $0x40] sm:$0xf]
        %v4927 = vld [vmem:[%s4909 + $0x44] sm:$0xf]
        %v4928 = vld [vmem:[%s4909 + $0x48] sm:$0xf]
        %v4929 = vld [vmem:[%s4909 + $0x4c] sm:$0xf]
        %v4930 = vld [vmem:[%s4909 + $0x50] sm:$0xf]
        %v4931 = vld [vmem:[%s4909 + $0x54] sm:$0xf]
        %v4932 = vld [vmem:[%s4909 + $0x58] sm:$0xf]
        %v4933 = vld [vmem:[%s4909 + $0x5c] sm:$0xf]
        %v4934 = vld [vmem:[%s4909 + $0x60] sm:$0xf]
        %v4935 = vld [vmem:[%s4909 + $0x64] sm:$0xf]
        %v4936 = vld [vmem:[%s4909 + $0x68] sm:$0xf]
        %v4937 = vld [vmem:[%s4909 + $0x6c] sm:$0xf]
        %v4938 = vld [vmem:[%s4909 + $0x70] sm:$0xf]
        %v4939 = vld [vmem:[%s4909 + $0x74] sm:$0xf]
        %v4940 = vld [vmem:[%s4909 + $0x78] sm:$0xf]
        %v4941 = vld [vmem:[%s4909 + $0x7c] sm:$0xf]
        %v4942 = vld [vmem:[%s4909 + $0x80] sm:$0xf]
        %v4943 = vld [vmem:[%s4909 + $0x84] sm:$0xf]
        %v4944 = vld [vmem:[%s4909 + $0x88] sm:$0xf]
        %v4945 = vld [vmem:[%s4909 + $0x8c] sm:$0xf]
        %v4946 = vld [vmem:[%s4909 + $0x90] sm:$0xf]
        %v4947 = vld [vmem:[%s4909 + $0x94] sm:$0xf]
        %v4948 = vld [vmem:[%s4909 + $0x98] sm:$0xf]
        %v4949 = vld [vmem:[%s4909 + $0x9c] sm:$0xf]
        %v4950 = vld [vmem:[%s4909 + $0xa0] sm:$0xf]
        %v4951 = vld [vmem:[%s4909 + $0xa4] sm:$0xf]
        %v4952 = vld [vmem:[%s4909 + $0xa8] sm:$0xf]
        %v4953 = vld [vmem:[%s4909 + $0xac] sm:$0xf]
        %v4954 = vld [vmem:[%s4909 + $0xb0] sm:$0xf]
        %v4955 = vld [vmem:[%s4909 + $0xb4] sm:$0xf]
        %v4956 = vld [vmem:[%s4909 + $0xb8] sm:$0xf]
        %v4957 = vld [vmem:[%s4909 + $0xbc] sm:$0xf]
        %v4958 = vld [vmem:[%s4909 + $0xc0] sm:$0xf]
        %v4959 = vld [vmem:[%s4909 + $0xc4] sm:$0xf]
        %v4960 = vld [vmem:[%s4909 + $0xc8] sm:$0xf]
        %v4961 = vld [vmem:[%s4909 + $0xcc] sm:$0xf]
        %v4962 = vld [vmem:[%s4909 + $0xd0] sm:$0xf]
        %v4963 = vld [vmem:[%s4909 + $0xd4] sm:$0xf]
        %v4964 = vld [vmem:[%s4909 + $0xd8] sm:$0xf]
        %v4965 = vld [vmem:[%s4909 + $0xdc] sm:$0xf]
        %v4966 = vld [vmem:[%s4909 + $0xe0] sm:$0xf]
        %v4967 = vld [vmem:[%s4909 + $0xe4] sm:$0xf]
        %v4968 = vld [vmem:[%s4909 + $0xe8] sm:$0xf]
        %v4969 = vld [vmem:[%s4909 + $0xec] sm:$0xf]
        %v4970 = vld [vmem:[%s4909 + $0xf0] sm:$0xf]
        %v4971 = vld [vmem:[%s4909 + $0xf4] sm:$0xf]
        %v4972 = vld [vmem:[%s4909 + $0xf8] sm:$0xf]
        %v4973 = vld [vmem:[%s4909 + $0xfc] sm:$0xf]
        %v4976 = vunpack.c.l.b16 %v4907
        %v4977 = vunpack.c.h.b16 %v4907
        %v4978 = vunpack.c.l.b16 %v4908
        %v4979 = vunpack.c.h.b16 %v4908
        %v4980 = vpack.c.b16 %v3773, %v4976
        %v4981 = vpack.c.b16 %v3774, %v4977
        %v4982 = vpack.c.b16 %v3775, %v4978
        %v4983 = vpack.c.b16 %v3776, %v4979
        %vm4984 = vcmask 1044480
        %v4985 = vrot.slane %v4980, 3
        %v4986 = vrot.slane %v3817, 3
        %v4987 = vsel %vm4984, %v4985, %v4986
        %v4988 = vrot.slane %v4981, 3
        %v4989 = vrot.slane %v3818, 3
        %v4990 = vsel %vm4984, %v4988, %v4989
        %v4991 = vrot.slane %v4982, 3
        %v4992 = vrot.slane %v3819, 3
        %v4993 = vsel %vm4984, %v4991, %v4992
        %v4994 = vrot.slane %v4983, 3
        %v4995 = vrot.slane %v3820, 3
        %v4996 = vsel %vm4984, %v4994, %v4995
        %v4997 = vrot.slane %v3821, 3
        %v4998 = vsel %vm4984, %v4986, %v4997
        %v4999 = vrot.slane %v3822, 3
        %v5000 = vsel %vm4984, %v4989, %v4999
        %v5001 = vrot.slane %v3823, 3
        %v5002 = vsel %vm4984, %v4992, %v5001
        %v5003 = vrot.slane %v3824, 3
        %v5004 = vsel %vm4984, %v4995, %v5003
        %v5005 = vrot.slane %v3825, 3
        %v5006 = vsel %vm4984, %v4997, %v5005
        %v5007 = vrot.slane %v3826, 3
        %v5008 = vsel %vm4984, %v4999, %v5007
        %v5009 = vrot.slane %v3827, 3
        %v5010 = vsel %vm4984, %v5001, %v5009
        %v5011 = vrot.slane %v3828, 3
        %v5012 = vsel %vm4984, %v5003, %v5011
        %v5013 = vrot.slane %v3829, 3
        %v5014 = vsel %vm4984, %v5005, %v5013
        %v5015 = vrot.slane %v3830, 3
        %v5016 = vsel %vm4984, %v5007, %v5015
        %v5017 = vrot.slane %v3831, 3
        %v5018 = vsel %vm4984, %v5009, %v5017
        %v5019 = vrot.slane %v3832, 3
        %v5020 = vsel %vm4984, %v5011, %v5019
        %v5021 = vrot.slane %v4322, 3
        %v5022 = vsel %vm4984, %v5013, %v5021
        %v5023 = vrot.slane %v4323, 3
        %v5024 = vsel %vm4984, %v5015, %v5023
        %v5025 = vrot.slane %v4324, 3
        %v5026 = vsel %vm4984, %v5017, %v5025
        %v5027 = vrot.slane %v4325, 3
        %v5028 = vsel %vm4984, %v5019, %v5027
        %v5113 = vunpack.c.l.b16 %v4910
        %v5114 = vunpack.c.l.b16 %v4911
        %v5115 = vunpack.c.l.b16 %v4912
        %v5116 = vunpack.c.l.b16 %v4913
        %v5117 = vunpack.c.l.b16 %v4914
        %v5118 = vunpack.c.l.b16 %v4915
        %v5119 = vunpack.c.l.b16 %v4916
        %v5120 = vunpack.c.l.b16 %v4917
        %v5121 = vunpack.c.l.b16 %v4918
        %v5122 = vunpack.c.l.b16 %v4919
        %v5123 = vunpack.c.l.b16 %v4920
        %v5124 = vunpack.c.l.b16 %v4921
        %v5125 = vunpack.c.l.b16 %v4922
        %v5126 = vunpack.c.l.b16 %v4923
        %v5127 = vunpack.c.l.b16 %v4924
        %v5128 = vunpack.c.l.b16 %v4925
        %v5129 = vunpack.c.l.b16 %v4926
        %v5130 = vunpack.c.l.b16 %v4927
        %v5131 = vunpack.c.l.b16 %v4928
        %v5132 = vunpack.c.l.b16 %v4929
        %v5133 = vunpack.c.l.b16 %v4930
        %v5134 = vunpack.c.l.b16 %v4931
        %v5135 = vunpack.c.l.b16 %v4932
        %v5136 = vunpack.c.l.b16 %v4933
        %v5137 = vunpack.c.l.b16 %v4934
        %v5138 = vunpack.c.l.b16 %v4935
        %v5139 = vunpack.c.l.b16 %v4936
        %v5140 = vunpack.c.l.b16 %v4937
        %v5141 = vunpack.c.l.b16 %v4938
        %v5142 = vunpack.c.l.b16 %v4939
        %v5143 = vunpack.c.l.b16 %v4940
        %v5144 = vunpack.c.l.b16 %v4941
        %v5145 = vunpack.c.l.b16 %v4942
        %v5146 = vunpack.c.l.b16 %v4943
        %v5147 = vunpack.c.l.b16 %v4944
        %v5148 = vunpack.c.l.b16 %v4945
        %v5149 = vunpack.c.l.b16 %v4946
        %v5150 = vunpack.c.l.b16 %v4947
        %v5151 = vunpack.c.l.b16 %v4948
        %v5152 = vunpack.c.l.b16 %v4949
        %v5153 = vunpack.c.l.b16 %v4950
        %v5154 = vunpack.c.l.b16 %v4951
        %v5155 = vunpack.c.l.b16 %v4952
        %v5156 = vunpack.c.l.b16 %v4953
        %v5157 = vunpack.c.l.b16 %v4954
        %v5158 = vunpack.c.l.b16 %v4955
        %v5159 = vunpack.c.l.b16 %v4956
        %v5160 = vunpack.c.l.b16 %v4957
        %v5161 = vunpack.c.l.b16 %v4958
        %v5162 = vunpack.c.l.b16 %v4959
        %v5163 = vunpack.c.l.b16 %v4960
        %v5164 = vunpack.c.l.b16 %v4961
        %v5165 = vunpack.c.l.b16 %v4962
        %v5166 = vunpack.c.l.b16 %v4963
        %v5167 = vunpack.c.l.b16 %v4964
        %v5168 = vunpack.c.l.b16 %v4965
        %v5169 = vunpack.c.l.b16 %v4966
        %v5170 = vunpack.c.l.b16 %v4967
        %v5171 = vunpack.c.l.b16 %v4968
        %v5172 = vunpack.c.l.b16 %v4969
        %v5173 = vunpack.c.l.b16 %v4970
        %v5174 = vunpack.c.l.b16 %v4971
        %v5175 = vunpack.c.l.b16 %v4972
        %v5176 = vunpack.c.l.b16 %v4973
        %v5177 = vpack.c.b16 %v5114, %v5113
        %v5178 = vpack.c.b16 %v5116, %v5115
        %v5179 = vpack.c.b16 %v5118, %v5117
        %v5180 = vpack.c.b16 %v5120, %v5119
        %v5181 = vpack.c.b16 %v5122, %v5121
        %v5182 = vpack.c.b16 %v5124, %v5123
        %v5183 = vpack.c.b16 %v5126, %v5125
        %v5184 = vpack.c.b16 %v5128, %v5127
        %v5185 = vpack.c.b16 %v5130, %v5129
        %v5186 = vpack.c.b16 %v5132, %v5131
        %v5187 = vpack.c.b16 %v5134, %v5133
        %v5188 = vpack.c.b16 %v5136, %v5135
        %v5189 = vpack.c.b16 %v5138, %v5137
        %v5190 = vpack.c.b16 %v5140, %v5139
        %v5191 = vpack.c.b16 %v5142, %v5141
        %v5192 = vpack.c.b16 %v5144, %v5143
        %v5193 = vpack.c.b16 %v5146, %v5145
        %v5194 = vpack.c.b16 %v5148, %v5147
        %v5195 = vpack.c.b16 %v5150, %v5149
        %v5196 = vpack.c.b16 %v5152, %v5151
        %v5197 = vpack.c.b16 %v5154, %v5153
        %v5198 = vpack.c.b16 %v5156, %v5155
        %v5199 = vpack.c.b16 %v5158, %v5157
        %v5200 = vpack.c.b16 %v5160, %v5159
        %v5201 = vpack.c.b16 %v5162, %v5161
        %v5202 = vpack.c.b16 %v5164, %v5163
        %v5203 = vpack.c.b16 %v5166, %v5165
        %v5204 = vpack.c.b16 %v5168, %v5167
        %v5205 = vpack.c.b16 %v5170, %v5169
        %v5206 = vpack.c.b16 %v5172, %v5171
        %v5207 = vpack.c.b16 %v5174, %v5173
        %v5208 = vpack.c.b16 %v5176, %v5175
        %5241 = vmatprep.subr.bf16.mxu0 0
        %5242 = vmatpush1.bf16.msra.mxu0 %v5177
        %5243 = vmatprep.subr.bf16.mxu0 0
        %5244 = vmatpush1.bf16.msra.mxu0 %v5178
        %5245 = vmatprep.subr.bf16.mxu0 0
        %5246 = vmatpush1.bf16.msra.mxu0 %v5179
        %5247 = vmatprep.subr.bf16.mxu0 0
        %5248 = vmatpush1.bf16.msra.mxu0 %v5180
        %5249 = vmatprep.subr.bf16.mxu0 0
        %5250 = vmatpush1.bf16.msra.mxu0 %v5181
        %5251 = vmatprep.subr.bf16.mxu0 0
        %5252 = vmatpush1.bf16.msra.mxu0 %v5182
        %5253 = vmatprep.subr.bf16.mxu0 0
        %5254 = vmatpush1.bf16.msra.mxu0 %v5183
        %5255 = vmatprep.subr.bf16.mxu0 0
        %5256 = vmatpush1.bf16.msra.mxu0 %v5184
        %5257 = vmatprep.subr.bf16.mxu0 0
        %5258 = vmatpush1.bf16.msra.mxu0 %v5185
        %5259 = vmatprep.subr.bf16.mxu0 0
        %5260 = vmatpush1.bf16.msra.mxu0 %v5186
        %5261 = vmatprep.subr.bf16.mxu0 0
        %5262 = vmatpush1.bf16.msra.mxu0 %v5187
        %5263 = vmatprep.subr.bf16.mxu0 0
        %5264 = vmatpush1.bf16.msra.mxu0 %v5188
        %5265 = vmatprep.subr.bf16.mxu0 0
        %5266 = vmatpush1.bf16.msra.mxu0 %v5189
        %5267 = vmatprep.subr.bf16.mxu0 0
        %5268 = vmatpush1.bf16.msra.mxu0 %v5190
        %5269 = vmatprep.subr.bf16.mxu0 0
        %5270 = vmatpush1.bf16.msra.mxu0 %v5191
        %5271 = vmatprep.subr.bf16.mxu0 0
        %5272 = vmatpush1.bf16.msra.mxu0 %v5192
        %5273 = vmatprep.mubr.bf16.mxu0 %v4990
        %5274 = vmatmul.mubr.bf16.gmra.mrb[0].mxu0 %v4987
        %v5275 = vpop.f32.mrb[0].mxu0
        %v5276 = vadd.f32 0.0, %v5275
        %v5277 = vpop.f32.mrb[0].mxu0
        %v5278 = vpop.f32.mrb[0].mxu0
        %v5279 = vadd.f32 0.0, %v5278
        %v5280 = vpop.f32.mrb[0].mxu0
        %5281 = vmatprep.mubr.bf16.mxu0 %v5000
        %5282 = vmatmul.mubr.bf16.gmra.mrb[0].mxu0 %v4998
        %v5283 = vpop.f32.mrb[0].mxu0
        %v5284 = vadd.f32 0.0, %v5283
        %v5285 = vpop.f32.mrb[0].mxu0
        %v5286 = vpop.f32.mrb[0].mxu0
        %v5287 = vadd.f32 0.0, %v5286
        %v5288 = vpop.f32.mrb[0].mxu0
        %5289 = vmatprep.mubr.bf16.mxu0 %v5008
        %5290 = vmatmul.mubr.bf16.gmra.mrb[0].mxu0 %v5006
        %v5291 = vpop.f32.mrb[0].mxu0
        %v5292 = vadd.f32 0.0, %v5291
        %v5293 = vpop.f32.mrb[0].mxu0
        %v5294 = vpop.f32.mrb[0].mxu0
        %v5295 = vadd.f32 0.0, %v5294
        %v5296 = vpop.f32.mrb[0].mxu0
        %5297 = vmatprep.mubr.bf16.mxu0 %v5016
        %5298 = vmatmul.mubr.bf16.gmra.mrb[0].mxu0 %v5014
        %v5299 = vpop.f32.mrb[0].mxu0
        %v5300 = vadd.f32 0.0, %v5299
        %v5301 = vpop.f32.mrb[0].mxu0
        %v5302 = vpop.f32.mrb[0].mxu0
        %v5303 = vadd.f32 0.0, %v5302
        %v5304 = vpop.f32.mrb[0].mxu0
        %5305 = vmatprep.mubr.bf16.mxu0 %v5024
        %5306 = vmatmul.mubr.bf16.gmra.mrb[0].mxu0 %v5022
        %v5307 = vpop.f32.mrb[0].mxu0
        %v5308 = vadd.f32 0.0, %v5307
        %v5309 = vpop.f32.mrb[0].mxu0
        %v5310 = vpop.f32.mrb[0].mxu0
        %v5311 = vadd.f32 0.0, %v5310
        %v5312 = vpop.f32.mrb[0].mxu0
        %5313 = vdwg.mxu0
        %5314 = vmatprep.subr.bf16.mxu0 0
        %5315 = vmatpush1.bf16.msra.mxu0 %v5193
        %5316 = vmatprep.subr.bf16.mxu0 0
        %5317 = vmatpush1.bf16.msra.mxu0 %v5194
        %5318 = vmatprep.subr.bf16.mxu0 0
        %5319 = vmatpush1.bf16.msra.mxu0 %v5195
        %5320 = vmatprep.subr.bf16.mxu0 0
        %5321 = vmatpush1.bf16.msra.mxu0 %v5196
        %5322 = vmatprep.subr.bf16.mxu0 0
        %5323 = vmatpush1.bf16.msra.mxu0 %v5197
        %5324 = vmatprep.subr.bf16.mxu0 0
        %5325 = vmatpush1.bf16.msra.mxu0 %v5198
        %5326 = vmatprep.subr.bf16.mxu0 0
        %5327 = vmatpush1.bf16.msra.mxu0 %v5199
        %5328 = vmatprep.subr.bf16.mxu0 0
        %5329 = vmatpush1.bf16.msra.mxu0 %v5200
        %5330 = vmatprep.subr.bf16.mxu0 0
        %5331 = vmatpush1.bf16.msra.mxu0 %v5201
        %5332 = vmatprep.subr.bf16.mxu0 0
        %5333 = vmatpush1.bf16.msra.mxu0 %v5202
        %5334 = vmatprep.subr.bf16.mxu0 0
        %5335 = vmatpush1.bf16.msra.mxu0 %v5203
        %5336 = vmatprep.subr.bf16.mxu0 0
        %5337 = vmatpush1.bf16.msra.mxu0 %v5204
        %5338 = vmatprep.subr.bf16.mxu0 0
        %5339 = vmatpush1.bf16.msra.mxu0 %v5205
        %5340 = vmatprep.subr.bf16.mxu0 0
        %5341 = vmatpush1.bf16.msra.mxu0 %v5206
        %5342 = vmatprep.subr.bf16.mxu0 0
        %5343 = vmatpush1.bf16.msra.mxu0 %v5207
        %5344 = vmatprep.subr.bf16.mxu0 0
        %5345 = vmatpush1.bf16.msra.mxu0 %v5208
        %5346 = vmatprep.mubr.bf16.mxu0 %v4996
        %5347 = vmatmul.mubr.bf16.gmra.mrb[0].mxu0 %v4993
        %v5348 = vpop.f32.mrb[0].mxu0
        %v5349 = vadd.f32 %v5276, %v5348
        %v5350 = vpop.f32.mrb[0].mxu0
        %v5351 = vpop.f32.mrb[0].mxu0
        %v5352 = vadd.f32 %v5279, %v5351
        %v5353 = vpop.f32.mrb[0].mxu0
        %5354 = vmatprep.mubr.bf16.mxu0 %v5004
        %5355 = vmatmul.mubr.bf16.gmra.mrb[0].mxu0 %v5002
        %v5356 = vpop.f32.mrb[0].mxu0
        %v5357 = vadd.f32 %v5284, %v5356
        %v5358 = vpop.f32.mrb[0].mxu0
        %v5359 = vpop.f32.mrb[0].mxu0
        %v5360 = vadd.f32 %v5287, %v5359
        %v5361 = vpop.f32.mrb[0].mxu0
        %5362 = vmatprep.mubr.bf16.mxu0 %v5012
        %5363 = vmatmul.mubr.bf16.gmra.mrb[0].mxu0 %v5010
        %v5364 = vpop.f32.mrb[0].mxu0
        %v5365 = vadd.f32 %v5292, %v5364
        %v5366 = vpop.f32.mrb[0].mxu0
        %v5367 = vpop.f32.mrb[0].mxu0
        %v5368 = vadd.f32 %v5295, %v5367
        %v5369 = vpop.f32.mrb[0].mxu0
        %5370 = vmatprep.mubr.bf16.mxu0 %v5020
        %5371 = vmatmul.mubr.bf16.gmra.mrb[0].mxu0 %v5018
        %v5372 = vpop.f32.mrb[0].mxu0
        %v5373 = vadd.f32 %v5300, %v5372
        %v5374 = vpop.f32.mrb[0].mxu0
        %v5375 = vpop.f32.mrb[0].mxu0
        %v5376 = vadd.f32 %v5303, %v5375
        %v5377 = vpop.f32.mrb[0].mxu0
        %5378 = vmatprep.mubr.bf16.mxu0 %v5028
        %5379 = vmatmul.mubr.bf16.gmra.mrb[0].mxu0 %v5026
        %v5380 = vpop.f32.mrb[0].mxu0
        %v5381 = vadd.f32 %v5308, %v5380
        %v5382 = vpop.f32.mrb[0].mxu0
        %v5383 = vpop.f32.mrb[0].mxu0
        %v5384 = vadd.f32 %v5311, %v5383
        %v5385 = vpop.f32.mrb[0].mxu0
        %5386 = vdwg.mxu0
        %v5387 = vadd.f32 %v4897, %v5349
        %v5388 = vadd.f32 %v4898, %v5352
        %v5389 = vadd.f32 %v4899, %v5357
        %v5390 = vadd.f32 %v4900, %v5360
        %v5391 = vadd.f32 %v4901, %v5365
        %v5392 = vadd.f32 %v4902, %v5368
        %v5393 = vadd.f32 %v4903, %v5373
        %v5394 = vadd.f32 %v4904, %v5376
        %v5395 = vadd.f32 %v4905, %v5381
        %v5396 = vadd.f32 %v4906, %v5384
        %v5397 = vld [vmem:[#allocation2] sm:$0xff]
        %v5398 = vld [vmem:[#allocation2 + $0x8] sm:$0xff]
        %v5399 = vld [vmem:[#allocation2 + $0x10] sm:$0xff]
        %v5400 = vld [vmem:[#allocation2 + $0x18] sm:$0xff]
        %v5401 = vld [vmem:[#allocation2 + $0x20] sm:$0xff]
        %v5402 = vld [vmem:[#allocation2 + $0x28] sm:$0xff]
        %v5403 = vld [vmem:[#allocation2 + $0x30] sm:$0xff]
        %v5404 = vld [vmem:[#allocation2 + $0x38] sm:$0xff]
        %v5405 = vld [vmem:[#allocation2 + $0x40] sm:$0xff]
        %v5406 = vld [vmem:[#allocation2 + $0x48] sm:$0xff]
        %v5407 = vadd.f32 %v5397, %v5387
        %v5408 = vadd.f32 %v5398, %v5388
        %v5409 = vadd.f32 %v5399, %v5389
        %v5410 = vadd.f32 %v5400, %v5390
        %v5411 = vadd.f32 %v5401, %v5391
        %v5412 = vadd.f32 %v5402, %v5392
        %v5413 = vadd.f32 %v5403, %v5393
        %v5414 = vadd.f32 %v5404, %v5394
        %v5415 = vadd.f32 %v5405, %v5395
        %v5416 = vadd.f32 %v5406, %v5396
        %5417 = vst [vmem:[#allocation2] sm:$0xff] %v5407
        %5418 = vst [vmem:[#allocation2 + $0x8] sm:$0xff] %v5408
        %5419 = vst [vmem:[#allocation2 + $0x10] sm:$0xff] %v5409
        %5420 = vst [vmem:[#allocation2 + $0x18] sm:$0xff] %v5410
        %5421 = vst [vmem:[#allocation2 + $0x20] sm:$0xff] %v5411
        %5422 = vst [vmem:[#allocation2 + $0x28] sm:$0xff] %v5412
        %5423 = vst [vmem:[#allocation2 + $0x30] sm:$0xff] %v5413
        %5424 = vst [vmem:[#allocation2 + $0x38] sm:$0xff] %v5414
        %5425 = vst [vmem:[#allocation2 + $0x40] sm:$0xff] %v5415
        %5426 = vst [vmem:[#allocation2 + $0x48] sm:$0xff] %v5416
        %p5427 = scmp.eq.s32.totalorder %s28, 1
        // Predicated region
        $region49: #{_lambda_.3} parent=31 // pred_check
          %p5428 = pneg %p5427
        $region50: #{_lambda_.3} parent=31 // pred_check_branch
          %5430 = sbr.rel (%p5428) target = $region52
        $region51: #{_lambda_.3} parent=31 // pred_region
          %v5431 = vld [vmem:[#allocation2] sm:$0xff]
          %v5432 = vld [vmem:[#allocation2 + $0x8] sm:$0xff]
          %v5433 = vld [vmem:[#allocation2 + $0x10] sm:$0xff]
          %v5434 = vld [vmem:[#allocation2 + $0x18] sm:$0xff]
          %v5435 = vld [vmem:[#allocation2 + $0x20] sm:$0xff]
          %v5436 = vld [vmem:[#allocation2 + $0x28] sm:$0xff]
          %v5437 = vld [vmem:[#allocation2 + $0x30] sm:$0xff]
          %v5438 = vld [vmem:[#allocation2 + $0x38] sm:$0xff]
          %v5439 = vld [vmem:[#allocation2 + $0x40] sm:$0xff]
          %v5440 = vld [vmem:[#allocation2 + $0x48] sm:$0xff]
          %v5441 = vld [vmem:[#allocation8] sm:$0x1]
          %v5443 = vlaneseq
          %v5444 = vshrl.u32 %v5443, 7
          %v5445 = vsub.s32 0, %v5444
          %v5446 = vrot.slane %v5441, %v5445
          %v5448 = vadd.f32 %v5431, %v5446
          %v5449 = vadd.f32 %v5432, %v5446
          %v5450 = vadd.f32 %v5433, %v5446
          %v5451 = vadd.f32 %v5434, %v5446
          %v5452 = vadd.f32 %v5435, %v5446
          %v5453 = vadd.f32 %v5436, %v5446
          %v5454 = vadd.f32 %v5437, %v5446
          %v5455 = vadd.f32 %v5438, %v5446
          %v5456 = vadd.f32 %v5439, %v5446
          %v5457 = vadd.f32 %v5440, %v5446
          %v5458 = vmax.f32 %v5448, 0.0
          %v5459 = vmax.f32 %v5449, 0.0
          %v5460 = vmax.f32 %v5450, 0.0
          %v5461 = vmax.f32 %v5451, 0.0
          %v5462 = vmax.f32 %v5452, 0.0
          %v5463 = vmax.f32 %v5453, 0.0
          %v5464 = vmax.f32 %v5454, 0.0
          %v5465 = vmax.f32 %v5455, 0.0
          %v5466 = vmax.f32 %v5456, 0.0
          %v5467 = vmax.f32 %v5457, 0.0
          %5468 = vst [vmem:[%s281] sm:$0xff] %v5458
          %5469 = vst [vmem:[%s281 + $0x8] sm:$0xff] %v5459
          %5470 = vst [vmem:[%s281 + $0x10] sm:$0xff] %v5460
          %5471 = vst [vmem:[%s281 + $0x18] sm:$0xff] %v5461
          %5472 = vst [vmem:[%s281 + $0x20] sm:$0xff] %v5462
          %5473 = vst [vmem:[%s281 + $0x28] sm:$0xff] %v5463
          %5474 = vst [vmem:[%s281 + $0x30] sm:$0xff] %v5464
          %5475 = vst [vmem:[%s281 + $0x38] sm:$0xff] %v5465
          %5476 = vst [vmem:[%s281 + $0x40] sm:$0xff] %v5466
          %5477 = vst [vmem:[%s281 + $0x48] sm:$0xff] %v5467
        $region52: #{_lambda_.3} parent=31 // pred_fallthru
          _
        %s5478 = sand.u32 %s118, 1
        %s5479 = scalar_lea.sflag [#allocation5], %s5478
        %s5480 = sand.u32 %s118, 1
        %s5481 = smul.addr %s5480, 80
        %s5482 = scalar_lea.vmem [#allocation9], %s5481
        // Predicated region
        $region53: #{_lambda_.3} parent=31 // pred_check
          %p5483 = pneg %p128
        $region54: #{_lambda_.3} parent=31 // pred_check_branch
          %5485 = sbr.rel (%p5483) target = $region56
        $region55: #{_lambda_.3} parent=31 // pred_region
          %s5487 = ssub.s32 1280, 1280
          %5488 = vsyncadd %s5479, %s5487
          %s5489 = smul.addr %s27, 10
          %s5490 = smul.addr %s5489, 128
          %s5491 = scalar_lea.hbm %s3, %s5490
          %s5492 = sshll.u32 %s5482, 4
          %s5493 = int_to_ptr.vmem [resolvable:$true] %s5492
          %5498 = dma.vmem_to_hbm [thread:$0]  %s5493, 1280, %s5491, %s5479, 128, 128, 8
        $region56: #{_lambda_.3} parent=31 // pred_fallthru
          _
      $region32: #{_lambda_.3} parent=5 // pred_fallthru
        _
      %p5499 = scmp.le.s32.totalorder 2, %s18
      // Predicated region
      $region57: #{_lambda_.3} parent=5 // pred_check
        %p5500 = pneg %p5499
      $region58: #{_lambda_.3} parent=5 // pred_check_branch
        %5502 = sbr.rel (%p5500) target = $region60
      $region59: #{_lambda_.3} parent=5 // pred_region
        %s5503 = ssub.s32 %s18, 2
        // Predicated region
        $region61: #{_lambda_.3} parent=59 // pred_check
          %p5504 = pneg %p134
        $region62: #{_lambda_.3} parent=59 // pred_check_branch
          %5506 = sbr.rel (%p5504) target = $region64
        $region63: #{_lambda_.3} parent=59 // pred_region
          %s5507 = sand.u32 %s119, 1
          %s5508 = scalar_lea.sflag [#allocation5], %s5507
          %s5509 = sand.u32 %s119, 1
          %s5510 = smul.addr %s5509, 80
          %s5511 = scalar_lea.vmem [#allocation9], %s5510
          %5512 = dma.done %s5508, 1280
        $region64: #{_lambda_.3} parent=59 // pred_fallthru
          _
      $region60: #{_lambda_.3} parent=5 // pred_fallthru
        _
    $region6: #{_lambda_.3} parent=1 // loop_footer
      %s22 = sadd.s32 1, %s18
    $region7: #{_lambda_.3} parent=1 // loop_footer_branch
      %17 = sbr.rel target = $region3
    $region8: #{_lambda_.3} parent=1 // loop_exit
      _
    %5513 = vsyncpa [#allocation4], 1
    %s5514 = scalar_lea.sflag [#allocation4], 1
    %5515 = vsyncpa %s5514, 1
    %5516 = vsyncpa [#allocation7], 1
    %s5517 = scalar_lea.sflag [#allocation7], 1
    %5518 = vsyncpa %s5517, 1
    %5519 = vsyncpa [#allocation5], 1
    %s5520 = scalar_lea.sflag [#allocation5], 1
    %5521 = vsyncpa %s5520, 1

</llo_original>
